<compile_context>
chip_gen: v5e
topology: v5e:2x2
jax: 0.10.0
libtpu: 0.0.40
codegen_flags: <defaults>
</compile_context>

<pallas_src>
import functools

import jax
import jax.numpy as jnp
from jax.experimental import pallas as pl
from jax.experimental.pallas import tpu as pltpu

_NEG = -1e30  # mask sentinel for the max-aggregation


def _elu(x):
    return jnp.where(x > 0, x, jnp.exp(x) - 1.0)


def _edge_layer(x, mask_chunks, chunk_starts, wt, bt, wq, bq, agg_dtype):
    """One fused EdgeConv (+ folded BN) + ELU on VMEM-resident values.

    x:  (N, Fin) f32
    mask_chunks[k]: (N_dst, sz_k) bool, precomputed once, reused by all layers
    wt: (Fin, Fout) = a*Wt          bt: (1, Fout) = a*bt + c   (theta branch)
    wq: (Fin, Fout) = a*(Wp - Wt)   bq: (1, Fout) = a*bp       (phi-theta branch)
    """
    # Two small dots instead of one concatenated dot -> no mid-vreg lane slice.
    t = jnp.dot(x, wt, preferred_element_type=jnp.float32) + bt   # (N_dst, Fout)
    p = jnp.dot(x, wq, preferred_element_type=jnp.float32) + bq   # (N_src, Fout)

    # Lane-dense layout for the aggregation: source nodes on lanes.
    # One XLU transpose per layer; the chunked masked max then reduces along
    # the lane axis (XLU) with full 128-lane utilization.
    p_t = p.T.astype(agg_dtype)                                    # (Fout, N_src)
    neg = jnp.asarray(_NEG, dtype=agg_dtype)

    m = None
    for mk, c in zip(mask_chunks, chunk_starts):
        sz = mk.shape[1]
        pc = p_t[:, c:c + sz]                                      # (Fout, sz)
        # (N_dst, 1, sz) mask vs (1, Fout, sz) values -> (N_dst, Fout, sz)
        sel = jnp.where(mk[:, None, :], pc[None, :, :], neg)
        cm = jnp.max(sel, axis=-1)                                 # (N_dst, Fout)
        m = cm if m is None else jnp.maximum(m, cm)

    return _elu(t + m.astype(jnp.float32))


def gnn_kernel(adj_ref, x_ref,
               wt1_ref, bt1_ref, wq1_ref, bq1_ref,
               wt2_ref, bt2_ref, wq2_ref, bq2_ref,
               wt3_ref, bt3_ref, wq3_ref, bq3_ref,
               fw1_ref, fb1_ref, fw2_ref, fb2_ref, fw3_ref, fb3_ref,
               out_ref, *, src_chunk, agg_dtype):
    n_src = adj_ref.shape[1]

    # Integer compare on the int8 adjacency slice (no f32 cast, no full N^2
    # f32 intermediate); mask chunks are built once and shared by all 3 convs.
    mask_chunks = []
    chunk_starts = []
    for c in range(0, n_src, src_chunk):
        sz = min(src_chunk, n_src - c)
        mask_chunks.append(adj_ref[:, c:c + sz] != 0)
        chunk_starts.append(c)

    x = x_ref[...]
    x = _edge_layer(x, mask_chunks, chunk_starts, wt1_ref[...], bt1_ref[...],
                    wq1_ref[...], bq1_ref[...], agg_dtype)   # conv1 (+BN) + elu
    x = _edge_layer(x, mask_chunks, chunk_starts, wt2_ref[...], bt2_ref[...],
                    wq2_ref[...], bq2_ref[...], agg_dtype)   # conv2 + elu
    x = _edge_layer(x, mask_chunks, chunk_starts, wt3_ref[...], bt3_ref[...],
                    wq3_ref[...], bq3_ref[...], agg_dtype)   # conv3 + elu

    # MaxPooling over nodes -> (1, 64), then MLP head, all in-VMEM.
    pooled = jnp.max(x, axis=0, keepdims=True)
    h = _elu(jnp.dot(pooled, fw1_ref[...],
                     preferred_element_type=jnp.float32) + fb1_ref[...])
    # dropout(p=0.5) is identity in eval mode
    h = _elu(jnp.dot(h, fw2_ref[...],
                     preferred_element_type=jnp.float32) + fb2_ref[...])
    logits = jnp.dot(h, fw3_ref[...],
                     preferred_element_type=jnp.float32) + fb3_ref[...]  # (1, C)

    z = logits - jnp.max(logits, axis=1, keepdims=True)
    out_ref[...] = z - jnp.log(jnp.sum(jnp.exp(z), axis=1, keepdims=True))


def _fold_edgeconv(wt, bt, wp, bp, bn=None):
    """Host-side fold to the (theta, phi-theta) decomposition with BN folded in.

    message  m_ij = theta(x_i - x_j) + phi(x_j) = T_i + Q_j
    BN(eval) m   -> a*m + c  with a = gamma/sqrt(var+eps) > 0, c = beta - a*mean
    a > 0 commutes with the max aggregation, so:
        T'_i = x_i @ (a*Wt)        + (a*bt + c)
        Q'_j = x_j @ (a*(Wp - Wt)) + (a*bp)
        out_i = elu(T'_i + max_j Q'_j)
    """
    if bn is None:
        a = jnp.float32(1.0)
        c = jnp.float32(0.0)
    else:
        gamma, beta, mean, var, eps = bn
        a = gamma / jnp.sqrt(var + eps)
        c = beta - a * mean
    return wt * a, bt * a + c, (wp - wt) * a, bp * a


def gnn_cls_forward(adj, atom_feats, params, *, src_chunk=512,
                    agg_dtype=jnp.bfloat16):
    n = atom_feats.shape[0]

    wt1, bt1, wq1, bq1 = _fold_edgeconv(*params["conv1"], bn=params["bn1"])
    wt2, bt2, wq2, bq2 = _fold_edgeconv(*params["conv2"])
    wt3, bt3, wq3, bq3 = _fold_edgeconv(*params["conv3"])
    fw1, fb1, fw2, fb2, fw3, fb3 = params["head"]
    num_classes = fw3.shape[1]

    adj_i8 = (adj != 0).astype(jnp.int8)
    sc = int(min(src_chunk, n))

    # VMEM budget: adj(int8) + bool mask chunks + f32 activations + the
    # (N_dst, Fout, src_chunk) aggregation intermediate + weights; 2x headroom,
    # clamped to ~90% of physical VMEM (64 MiB on v7x, 128 MiB on v5e/v6e).
    itemsize = jnp.dtype(agg_dtype).itemsize
    est = (adj_i8.size                       # adjacency (int8)
           + n * n                           # bool mask chunks
           + 4 * n * 64 * 4                  # f32 activations (<= 64 wide)
           + n * 64 * sc * itemsize          # per-chunk select/max intermediate
           + 2 * 1024 * 1024)                # weights + misc
    try:
        vmem_cap = int(getattr(pltpu.get_tpu_info(), "vmem_capacity_bytes",
                               64 * 1024 * 1024))
    except Exception:
        vmem_cap = 64 * 1024 * 1024
    vmem_limit = int(min(max(2 * est, 32 * 1024 * 1024), int(0.9 * vmem_cap)))

    kernel = functools.partial(gnn_kernel, src_chunk=sc, agg_dtype=agg_dtype)

    return pl.pallas_call(
        kernel,
        out_shape=jax.ShapeDtypeStruct((1, num_classes), jnp.float32),
        in_specs=[pl.BlockSpec(memory_space=pltpu.MemorySpace.VMEM)] * 20,
        out_specs=pl.BlockSpec(memory_space=pltpu.MemorySpace.VMEM),
        compiler_params=pltpu.CompilerParams(vmem_limit_bytes=vmem_limit),
    )(adj_i8, atom_feats,
      wt1, bt1, wq1, bq1, wt2, bt2, wq2, bq2, wt3, bt3, wq3, bq3,
      fw1, fb1, fw2, fb2, fw3, fb3)


# ------------------------------ parameter init -------------------------------
def _linear(key, fin, fout):
    kw, kb = jax.random.split(key)
    bound = 1.0 / (fin ** 0.5)
    w = jax.random.uniform(kw, (fin, fout), jnp.float32, -bound, bound)
    b = jax.random.uniform(kb, (1, fout), jnp.float32, -bound, bound)
    return w, b


def init_params(key, num_features, num_classes):
    ks = jax.random.split(key, 9)
    wt1, bt1 = _linear(ks[0], num_features, 32)
    wp1, bp1 = _linear(ks[1], num_features, 32)
    wt2, bt2 = _linear(ks[2], 32, 64)
    wp2, bp2 = _linear(ks[3], 32, 64)
    wt3, bt3 = _linear(ks[4], 64, 64)
    wp3, bp3 = _linear(ks[5], 64, 64)
    w1, b1 = _linear(ks[6], 64, 64)
    w2, b2 = _linear(ks[7], 64, 32)
    w3, b3 = _linear(ks[8], 32, num_classes)
    # BatchNorm1d(32) eval-mode stats (untrained defaults here, but the fold
    # handles arbitrary trained gamma/beta/mean/var).
    bn1 = (jnp.ones((1, 32), jnp.float32),    # gamma
           jnp.zeros((1, 32), jnp.float32),   # beta
           jnp.zeros((1, 32), jnp.float32),   # running_mean
           jnp.ones((1, 32), jnp.float32),    # running_var
           1e-5)                              # eps
    return {
        "conv1": (wt1, bt1, wp1, bp1),
        "bn1": bn1,
        "conv2": (wt2, bt2, wp2, bp2),
        "conv3": (wt3, bt3, wp3, bp3),
        "head": (w1, b1, w2, b2, w3, b3),
    }


if __name__ == "__main__":
    num_nodes = 16
    num_features = 4
    num_classes = 3

    key = jax.random.PRNGKey(0)
    k_feat, k_adj, k_param = jax.random.split(key, 3)

    atom_feats = jax.random.normal(k_feat, (num_nodes, num_features),
                                   dtype=jnp.float32)
    # random directed graph + self-loops so every node has in-degree >= 1
    adj = (jax.random.uniform(k_adj, (num_nodes, num_nodes)) < 0.3)
    adj = jnp.maximum(adj.astype(jnp.float32),
                      jnp.eye(num_nodes, dtype=jnp.float32))

    params = init_params(k_param, num_features, num_classes)

    out = gnn_cls_forward(adj, atom_feats, params)
    jax.block_until_ready(out)
    assert out.shape == (1, num_classes)
    # log_softmax sanity: probabilities sum to ~1
    assert abs(float(jnp.sum(jnp.exp(out))) - 1.0) < 1e-3
    print("KERNEL_OK")
</pallas_src>

<mosaic_0001>
module attributes {stable_mosaic.version = 11 : i64} {
  func.func @gnn_kernel(%arg0: memref<16x16xi8, #tpu.memory_space<vmem>>, %arg1: memref<16x4xf32, #tpu.memory_space<vmem>>, %arg2: memref<4x32xf32, #tpu.memory_space<vmem>>, %arg3: memref<1x32xf32, #tpu.memory_space<vmem>>, %arg4: memref<4x32xf32, #tpu.memory_space<vmem>>, %arg5: memref<1x32xf32, #tpu.memory_space<vmem>>, %arg6: memref<32x64xf32, #tpu.memory_space<vmem>>, %arg7: memref<1x64xf32, #tpu.memory_space<vmem>>, %arg8: memref<32x64xf32, #tpu.memory_space<vmem>>, %arg9: memref<1x64xf32, #tpu.memory_space<vmem>>, %arg10: memref<64x64xf32, #tpu.memory_space<vmem>>, %arg11: memref<1x64xf32, #tpu.memory_space<vmem>>, %arg12: memref<64x64xf32, #tpu.memory_space<vmem>>, %arg13: memref<1x64xf32, #tpu.memory_space<vmem>>, %arg14: memref<64x64xf32, #tpu.memory_space<vmem>>, %arg15: memref<1x64xf32, #tpu.memory_space<vmem>>, %arg16: memref<64x32xf32, #tpu.memory_space<vmem>>, %arg17: memref<1x32xf32, #tpu.memory_space<vmem>>, %arg18: memref<32x3xf32, #tpu.memory_space<vmem>>, %arg19: memref<1x3xf32, #tpu.memory_space<vmem>>, %arg20: memref<1x3xf32, #tpu.memory_space<vmem>>) attributes {dimension_semantics = [], scalar_prefetch = 0 : i64, scratch_operands = 0 : i64, tpu.core_type = #tpu.core_type<tc>} {
    %c0 = arith.constant 0 : index
    %c0_0 = arith.constant 0 : index
    %0 = vector.load %arg0[%c0, %c0_0] : memref<16x16xi8, #tpu.memory_space<vmem>>, vector<16x16xi8>
    %c0_i8 = arith.constant 0 : i8
    %1 = vector.broadcast %c0_i8 : i8 to vector<16x16xi8>
    %2 = arith.cmpi ne, %0, %1 : vector<16x16xi8>
    %c0_1 = arith.constant 0 : index
    %c0_2 = arith.constant 0 : index
    %3 = vector.load %arg1[%c0_1, %c0_2] : memref<16x4xf32, #tpu.memory_space<vmem>>, vector<16x4xf32>
    %c0_3 = arith.constant 0 : index
    %c0_4 = arith.constant 0 : index
    %4 = vector.load %arg2[%c0_3, %c0_4] : memref<4x32xf32, #tpu.memory_space<vmem>>, vector<4x32xf32>
    %c0_5 = arith.constant 0 : index
    %c0_6 = arith.constant 0 : index
    %5 = vector.load %arg3[%c0_5, %c0_6] : memref<1x32xf32, #tpu.memory_space<vmem>>, vector<1x32xf32>
    %c0_7 = arith.constant 0 : index
    %c0_8 = arith.constant 0 : index
    %6 = vector.load %arg4[%c0_7, %c0_8] : memref<4x32xf32, #tpu.memory_space<vmem>>, vector<4x32xf32>
    %c0_9 = arith.constant 0 : index
    %c0_10 = arith.constant 0 : index
    %7 = vector.load %arg5[%c0_9, %c0_10] : memref<1x32xf32, #tpu.memory_space<vmem>>, vector<1x32xf32>
    %cst = arith.constant dense<0.000000e+00> : vector<16x32xf32>
    %8 = tpu.matmul %3, %4, %cst {dimension_numbers = #tpu.dot_dimension_numbers<[1], [0], [0], [1], [0, 0, 1, 1], [], []>} : vector<16x4xf32>, vector<4x32xf32>, vector<16x32xf32> -> vector<16x32xf32>
    %9 = vector.broadcast %5 : vector<1x32xf32> to vector<16x32xf32>
    %10 = arith.addf %8, %9 : vector<16x32xf32>
    %cst_11 = arith.constant dense<0.000000e+00> : vector<16x32xf32>
    %11 = tpu.matmul %3, %6, %cst_11 {dimension_numbers = #tpu.dot_dimension_numbers<[1], [0], [0], [1], [0, 0, 1, 1], [], []>} : vector<16x4xf32>, vector<4x32xf32>, vector<16x32xf32> -> vector<16x32xf32>
    %12 = vector.broadcast %7 : vector<1x32xf32> to vector<16x32xf32>
    %13 = arith.addf %11, %12 : vector<16x32xf32>
    %14 = tpu.transpose %13, [1, 0] : vector<16x32xf32> -> vector<32x16xf32>
    %15 = arith.truncf %14 : vector<32x16xf32> to vector<32x16xbf16>
    %16 = vector.shape_cast %2 : vector<16x16xi1> to vector<16x1x16xi1>
    %17 = vector.shape_cast %15 : vector<32x16xbf16> to vector<1x32x16xbf16>
    %cst_12 = arith.constant -1.000260e+30 : bf16
    %18 = vector.shape_cast %16 : vector<16x1x16xi1> to vector<16x1x16xi1>
    %19 = vector.broadcast %18 : vector<16x1x16xi1> to vector<16x32x16xi1>
    %20 = vector.shape_cast %17 : vector<1x32x16xbf16> to vector<1x32x16xbf16>
    %21 = vector.broadcast %20 : vector<1x32x16xbf16> to vector<16x32x16xbf16>
    %22 = vector.broadcast %cst_12 : bf16 to vector<16x32x16xbf16>
    %23 = arith.select %19, %21, %22 : vector<16x32x16xi1>, vector<16x32x16xbf16>
    %cst_13 = arith.constant dense<0xFF80> : vector<16x32xbf16>
    %24 = vector.multi_reduction <maximumf>, %23, %cst_13 [2] : vector<16x32x16xbf16> to vector<16x32xbf16>
    %25 = arith.extf %24 : vector<16x32xbf16> to vector<16x32xf32>
    %26 = arith.addf %10, %25 : vector<16x32xf32>
    %cst_14 = arith.constant 0.000000e+00 : f32
    %27 = vector.broadcast %cst_14 : f32 to vector<16x32xf32>
    %28 = arith.cmpf ogt, %26, %27 : vector<16x32xf32>
    %29 = math.exp %26 : vector<16x32xf32>
    %cst_15 = arith.constant 1.000000e+00 : f32
    %30 = vector.broadcast %cst_15 : f32 to vector<16x32xf32>
    %31 = arith.subf %29, %30 : vector<16x32xf32>
    %32 = arith.select %28, %26, %31 : vector<16x32xi1>, vector<16x32xf32>
    %c0_16 = arith.constant 0 : index
    %c0_17 = arith.constant 0 : index
    %33 = vector.load %arg6[%c0_16, %c0_17] : memref<32x64xf32, #tpu.memory_space<vmem>>, vector<32x64xf32>
    %c0_18 = arith.constant 0 : index
    %c0_19 = arith.constant 0 : index
    %34 = vector.load %arg7[%c0_18, %c0_19] : memref<1x64xf32, #tpu.memory_space<vmem>>, vector<1x64xf32>
    %c0_20 = arith.constant 0 : index
    %c0_21 = arith.constant 0 : index
    %35 = vector.load %arg8[%c0_20, %c0_21] : memref<32x64xf32, #tpu.memory_space<vmem>>, vector<32x64xf32>
    %c0_22 = arith.constant 0 : index
    %c0_23 = arith.constant 0 : index
    %36 = vector.load %arg9[%c0_22, %c0_23] : memref<1x64xf32, #tpu.memory_space<vmem>>, vector<1x64xf32>
    %cst_24 = arith.constant dense<0.000000e+00> : vector<16x64xf32>
    %37 = tpu.matmul %32, %33, %cst_24 {dimension_numbers = #tpu.dot_dimension_numbers<[1], [0], [0], [1], [0, 0, 1, 1], [], []>} : vector<16x32xf32>, vector<32x64xf32>, vector<16x64xf32> -> vector<16x64xf32>
    %38 = vector.broadcast %34 : vector<1x64xf32> to vector<16x64xf32>
    %39 = arith.addf %37, %38 : vector<16x64xf32>
    %cst_25 = arith.constant dense<0.000000e+00> : vector<16x64xf32>
    %40 = tpu.matmul %32, %35, %cst_25 {dimension_numbers = #tpu.dot_dimension_numbers<[1], [0], [0], [1], [0, 0, 1, 1], [], []>} : vector<16x32xf32>, vector<32x64xf32>, vector<16x64xf32> -> vector<16x64xf32>
    %41 = vector.broadcast %36 : vector<1x64xf32> to vector<16x64xf32>
    %42 = arith.addf %40, %41 : vector<16x64xf32>
    %43 = tpu.transpose %42, [1, 0] : vector<16x64xf32> -> vector<64x16xf32>
    %44 = arith.truncf %43 : vector<64x16xf32> to vector<64x16xbf16>
    %45 = vector.shape_cast %2 : vector<16x16xi1> to vector<16x1x16xi1>
    %46 = vector.shape_cast %44 : vector<64x16xbf16> to vector<1x64x16xbf16>
    %cst_26 = arith.constant -1.000260e+30 : bf16
    %47 = vector.shape_cast %45 : vector<16x1x16xi1> to vector<16x1x16xi1>
    %48 = vector.broadcast %47 : vector<16x1x16xi1> to vector<16x64x16xi1>
    %49 = vector.shape_cast %46 : vector<1x64x16xbf16> to vector<1x64x16xbf16>
    %50 = vector.broadcast %49 : vector<1x64x16xbf16> to vector<16x64x16xbf16>
    %51 = vector.broadcast %cst_26 : bf16 to vector<16x64x16xbf16>
    %52 = arith.select %48, %50, %51 : vector<16x64x16xi1>, vector<16x64x16xbf16>
    %cst_27 = arith.constant dense<0xFF80> : vector<16x64xbf16>
    %53 = vector.multi_reduction <maximumf>, %52, %cst_27 [2] : vector<16x64x16xbf16> to vector<16x64xbf16>
    %54 = arith.extf %53 : vector<16x64xbf16> to vector<16x64xf32>
    %55 = arith.addf %39, %54 : vector<16x64xf32>
    %cst_28 = arith.constant 0.000000e+00 : f32
    %56 = vector.broadcast %cst_28 : f32 to vector<16x64xf32>
    %57 = arith.cmpf ogt, %55, %56 : vector<16x64xf32>
    %58 = math.exp %55 : vector<16x64xf32>
    %cst_29 = arith.constant 1.000000e+00 : f32
    %59 = vector.broadcast %cst_29 : f32 to vector<16x64xf32>
    %60 = arith.subf %58, %59 : vector<16x64xf32>
    %61 = arith.select %57, %55, %60 : vector<16x64xi1>, vector<16x64xf32>
    %c0_30 = arith.constant 0 : index
    %c0_31 = arith.constant 0 : index
    %62 = vector.load %arg10[%c0_30, %c0_31] : memref<64x64xf32, #tpu.memory_space<vmem>>, vector<64x64xf32>
    %c0_32 = arith.constant 0 : index
    %c0_33 = arith.constant 0 : index
    %63 = vector.load %arg11[%c0_32, %c0_33] : memref<1x64xf32, #tpu.memory_space<vmem>>, vector<1x64xf32>
    %c0_34 = arith.constant 0 : index
    %c0_35 = arith.constant 0 : index
    %64 = vector.load %arg12[%c0_34, %c0_35] : memref<64x64xf32, #tpu.memory_space<vmem>>, vector<64x64xf32>
    %c0_36 = arith.constant 0 : index
    %c0_37 = arith.constant 0 : index
    %65 = vector.load %arg13[%c0_36, %c0_37] : memref<1x64xf32, #tpu.memory_space<vmem>>, vector<1x64xf32>
    %cst_38 = arith.constant dense<0.000000e+00> : vector<16x64xf32>
    %66 = tpu.matmul %61, %62, %cst_38 {dimension_numbers = #tpu.dot_dimension_numbers<[1], [0], [0], [1], [0, 0, 1, 1], [], []>} : vector<16x64xf32>, vector<64x64xf32>, vector<16x64xf32> -> vector<16x64xf32>
    %67 = vector.broadcast %63 : vector<1x64xf32> to vector<16x64xf32>
    %68 = arith.addf %66, %67 : vector<16x64xf32>
    %cst_39 = arith.constant dense<0.000000e+00> : vector<16x64xf32>
    %69 = tpu.matmul %61, %64, %cst_39 {dimension_numbers = #tpu.dot_dimension_numbers<[1], [0], [0], [1], [0, 0, 1, 1], [], []>} : vector<16x64xf32>, vector<64x64xf32>, vector<16x64xf32> -> vector<16x64xf32>
    %70 = vector.broadcast %65 : vector<1x64xf32> to vector<16x64xf32>
    %71 = arith.addf %69, %70 : vector<16x64xf32>
    %72 = tpu.transpose %71, [1, 0] : vector<16x64xf32> -> vector<64x16xf32>
    %73 = arith.truncf %72 : vector<64x16xf32> to vector<64x16xbf16>
    %74 = vector.shape_cast %2 : vector<16x16xi1> to vector<16x1x16xi1>
    %75 = vector.shape_cast %73 : vector<64x16xbf16> to vector<1x64x16xbf16>
    %cst_40 = arith.constant -1.000260e+30 : bf16
    %76 = vector.shape_cast %74 : vector<16x1x16xi1> to vector<16x1x16xi1>
    %77 = vector.broadcast %76 : vector<16x1x16xi1> to vector<16x64x16xi1>
    %78 = vector.shape_cast %75 : vector<1x64x16xbf16> to vector<1x64x16xbf16>
    %79 = vector.broadcast %78 : vector<1x64x16xbf16> to vector<16x64x16xbf16>
    %80 = vector.broadcast %cst_40 : bf16 to vector<16x64x16xbf16>
    %81 = arith.select %77, %79, %80 : vector<16x64x16xi1>, vector<16x64x16xbf16>
    %cst_41 = arith.constant dense<0xFF80> : vector<16x64xbf16>
    %82 = vector.multi_reduction <maximumf>, %81, %cst_41 [2] : vector<16x64x16xbf16> to vector<16x64xbf16>
    %83 = arith.extf %82 : vector<16x64xbf16> to vector<16x64xf32>
    %84 = arith.addf %68, %83 : vector<16x64xf32>
    %cst_42 = arith.constant 0.000000e+00 : f32
    %85 = vector.broadcast %cst_42 : f32 to vector<16x64xf32>
    %86 = arith.cmpf ogt, %84, %85 : vector<16x64xf32>
    %87 = math.exp %84 : vector<16x64xf32>
    %cst_43 = arith.constant 1.000000e+00 : f32
    %88 = vector.broadcast %cst_43 : f32 to vector<16x64xf32>
    %89 = arith.subf %87, %88 : vector<16x64xf32>
    %90 = arith.select %86, %84, %89 : vector<16x64xi1>, vector<16x64xf32>
    %cst_44 = arith.constant dense<0xFF800000> : vector<64xf32>
    %91 = vector.multi_reduction <maximumf>, %90, %cst_44 [0] : vector<16x64xf32> to vector<64xf32>
    %92 = vector.shape_cast %91 : vector<64xf32> to vector<1x64xf32>
    %c0_45 = arith.constant 0 : index
    %c0_46 = arith.constant 0 : index
    %93 = vector.load %arg14[%c0_45, %c0_46] : memref<64x64xf32, #tpu.memory_space<vmem>>, vector<64x64xf32>
    %cst_47 = arith.constant dense<0.000000e+00> : vector<1x64xf32>
    %94 = tpu.matmul %92, %93, %cst_47 {dimension_numbers = #tpu.dot_dimension_numbers<[1], [0], [0], [1], [0, 0, 1, 1], [], []>} : vector<1x64xf32>, vector<64x64xf32>, vector<1x64xf32> -> vector<1x64xf32>
    %c0_48 = arith.constant 0 : index
    %c0_49 = arith.constant 0 : index
    %95 = vector.load %arg15[%c0_48, %c0_49] : memref<1x64xf32, #tpu.memory_space<vmem>>, vector<1x64xf32>
    %96 = arith.addf %94, %95 : vector<1x64xf32>
    %cst_50 = arith.constant 0.000000e+00 : f32
    %97 = vector.broadcast %cst_50 : f32 to vector<1x64xf32>
    %98 = arith.cmpf ogt, %96, %97 : vector<1x64xf32>
    %99 = math.exp %96 : vector<1x64xf32>
    %cst_51 = arith.constant 1.000000e+00 : f32
    %100 = vector.broadcast %cst_51 : f32 to vector<1x64xf32>
    %101 = arith.subf %99, %100 : vector<1x64xf32>
    %102 = arith.select %98, %96, %101 : vector<1x64xi1>, vector<1x64xf32>
    %c0_52 = arith.constant 0 : index
    %c0_53 = arith.constant 0 : index
    %103 = vector.load %arg16[%c0_52, %c0_53] : memref<64x32xf32, #tpu.memory_space<vmem>>, vector<64x32xf32>
    %cst_54 = arith.constant dense<0.000000e+00> : vector<1x32xf32>
    %104 = tpu.matmul %102, %103, %cst_54 {dimension_numbers = #tpu.dot_dimension_numbers<[1], [0], [0], [1], [0, 0, 1, 1], [], []>} : vector<1x64xf32>, vector<64x32xf32>, vector<1x32xf32> -> vector<1x32xf32>
    %c0_55 = arith.constant 0 : index
    %c0_56 = arith.constant 0 : index
    %105 = vector.load %arg17[%c0_55, %c0_56] : memref<1x32xf32, #tpu.memory_space<vmem>>, vector<1x32xf32>
    %106 = arith.addf %104, %105 : vector<1x32xf32>
    %cst_57 = arith.constant 0.000000e+00 : f32
    %107 = vector.broadcast %cst_57 : f32 to vector<1x32xf32>
    %108 = arith.cmpf ogt, %106, %107 : vector<1x32xf32>
    %109 = math.exp %106 : vector<1x32xf32>
    %cst_58 = arith.constant 1.000000e+00 : f32
    %110 = vector.broadcast %cst_58 : f32 to vector<1x32xf32>
    %111 = arith.subf %109, %110 : vector<1x32xf32>
    %112 = arith.select %108, %106, %111 : vector<1x32xi1>, vector<1x32xf32>
    %c0_59 = arith.constant 0 : index
    %c0_60 = arith.constant 0 : index
    %113 = vector.load %arg18[%c0_59, %c0_60] : memref<32x3xf32, #tpu.memory_space<vmem>>, vector<32x3xf32>
    %cst_61 = arith.constant dense<0.000000e+00> : vector<1x3xf32>
    %114 = tpu.matmul %112, %113, %cst_61 {dimension_numbers = #tpu.dot_dimension_numbers<[1], [0], [0], [1], [0, 0, 1, 1], [], []>} : vector<1x32xf32>, vector<32x3xf32>, vector<1x3xf32> -> vector<1x3xf32>
    %c0_62 = arith.constant 0 : index
    %c0_63 = arith.constant 0 : index
    %115 = vector.load %arg19[%c0_62, %c0_63] : memref<1x3xf32, #tpu.memory_space<vmem>>, vector<1x3xf32>
    %116 = arith.addf %114, %115 : vector<1x3xf32>
    %cst_64 = arith.constant dense<0xFF800000> : vector<1xf32>
    %117 = vector.multi_reduction <maximumf>, %116, %cst_64 [1] : vector<1x3xf32> to vector<1xf32>
    %118 = vector.shape_cast %117 : vector<1xf32> to vector<1x1xf32>
    %119 = vector.broadcast %118 : vector<1x1xf32> to vector<1x3xf32>
    %120 = arith.subf %116, %119 : vector<1x3xf32>
    %121 = math.exp %120 : vector<1x3xf32>
    %cst_65 = arith.constant dense<0.000000e+00> : vector<1xf32>
    %122 = vector.multi_reduction <add>, %121, %cst_65 [1] : vector<1x3xf32> to vector<1xf32>
    %123 = vector.shape_cast %122 : vector<1xf32> to vector<1x1xf32>
    %124 = math.log %123 : vector<1x1xf32>
    %125 = vector.broadcast %124 : vector<1x1xf32> to vector<1x3xf32>
    %126 = arith.subf %120, %125 : vector<1x3xf32>
    %c0_66 = arith.constant 0 : index
    %c0_67 = arith.constant 0 : index
    %127 = vector.load %arg20[%c0_66, %c0_67] : memref<1x3xf32, #tpu.memory_space<vmem>>, vector<1x3xf32>
    tpu.vector_store %arg20[%c0_66, %c0_67], %126 {strides = array<i32>} : memref<1x3xf32, #tpu.memory_space<vmem>>, vector<1x3xf32>,
    return
  }
}

</mosaic_0001>

<llo_original>
// kernel: tpu_custom_call.1
$region0: #{tpu_custom_call.1}
  #allocation0 [shape = 'u32[]', space=smem, size = 0x4, offset = 0x4, fixed_abs, tag = 'smem constant byte address 0x4 - core index']
  #allocation1 [shape = 'u32[72,128]{1,0:T(1,128)}', space=vmem, size = 0x9000, scoped, tag = 'internal scratch']
  %s0 = inlined_call_operand.vmem [shape: s8[16,16], index: 0, kind: input, shape index: {}]
  %s1 = inlined_call_operand.vmem [shape: f32[16,4], index: 1, kind: input, shape index: {}]
  %s2 = inlined_call_operand.vmem [shape: f32[4,32], index: 2, kind: input, shape index: {}]
  %s3 = inlined_call_operand.vmem [shape: f32[1,32], index: 3, kind: input, shape index: {}]
  %s4 = inlined_call_operand.vmem [shape: f32[4,32], index: 4, kind: input, shape index: {}]
  %s5 = inlined_call_operand.vmem [shape: f32[1,32], index: 5, kind: input, shape index: {}]
  %s6 = inlined_call_operand.vmem [shape: f32[32,64], index: 6, kind: input, shape index: {}]
  %s7 = inlined_call_operand.vmem [shape: f32[1,64], index: 7, kind: input, shape index: {}]
  %s8 = inlined_call_operand.hbm [shape: f32[32,64], index: 8, kind: input, shape index: {}]
  %s9 = inlined_call_operand.vmem [shape: f32[1,64], index: 9, kind: input, shape index: {}]
  %s10 = inlined_call_operand.vmem [shape: f32[64,64], index: 10, kind: input, shape index: {}]
  %s11 = inlined_call_operand.vmem [shape: f32[1,64], index: 11, kind: input, shape index: {}]
  %s12 = inlined_call_operand.hbm [shape: f32[64,64], index: 12, kind: input, shape index: {}]
  %s13 = inlined_call_operand.vmem [shape: f32[1,64], index: 13, kind: input, shape index: {}]
  %s14 = inlined_call_operand.hbm [shape: f32[64,64], index: 14, kind: input, shape index: {}]
  %s15 = inlined_call_operand.vmem [shape: f32[1,64], index: 15, kind: input, shape index: {}]
  %s16 = inlined_call_operand.vmem [shape: f32[64,32], index: 16, kind: input, shape index: {}]
  %s17 = inlined_call_operand.vmem [shape: f32[1,32], index: 17, kind: input, shape index: {}]
  %s18 = inlined_call_operand.vmem [shape: f32[32,3], index: 18, kind: input, shape index: {}]
  %s19 = inlined_call_operand.vmem [shape: f32[1,3], index: 19, kind: input, shape index: {}]
  %s20 = inlined_call_operand.hbm [shape: f32[1,3], index: 20, kind: output, shape index: {}]
  %s21 = sld [smem:[#allocation0]]
  $region102: #{tpu_custom_call.1} parent=0
    _
  %s23 = ssub.s32 1, %s21
  %s24 = scalar_select 0, %s23, %s21
  $region1: #{tpu_custom_call.1} parent=0
    #allocation2 [shape = 'u8[16384]{0}', space=vmem, size = 0x4000, scoped, tag = 'input window, operand 8, single buffered']
    #allocation3 [shape = 's32[1]{0}', space=sflag, size = 0x4, scoped, tag = 'scoped memory for tpu_custom_call.1']
    #allocation4 [shape = 's32[1]{0}', space=sflag, size = 0x4, scoped, tag = 'scoped memory for tpu_custom_call.1']
    #allocation5 [shape = 'u8[32768]{0}', space=vmem, size = 0x8000, scoped, tag = 'input window, operand 12, single buffered']
    #allocation6 [shape = 's32[1]{0}', space=sflag, size = 0x4, scoped, tag = 'scoped memory for tpu_custom_call.1']
    #allocation7 [shape = 'u8[32768]{0}', space=vmem, size = 0x8000, scoped, tag = 'input window, operand 14, single buffered']
    #allocation8 [shape = 'u8[512]{0}', space=vmem, size = 0x400, scoped, tag = 'output window, operand 0, single buffered']
    %25 = vsyncpa [#allocation3], 0
    %26 = vsyncpa [#allocation6], 0
    %27 = vsyncpa [#allocation4], 0
    // Predicated region
    $region2: #{tpu_custom_call.1} parent=1 // pred_check
      _
    $region3: #{tpu_custom_call.1} parent=1 // pred_check_branch
      %29 = sbr.rel (0) target = $region5
    $region4: #{tpu_custom_call.1} parent=1 // pred_region
      _
    $region5: #{tpu_custom_call.1} parent=1 // pred_fallthru
      _
    // Predicated region
    $region6: #{tpu_custom_call.1} parent=1 // pred_check
      _
    $region7: #{tpu_custom_call.1} parent=1 // pred_check_branch
      %31 = sbr.rel (0) target = $region9
    $region8: #{tpu_custom_call.1} parent=1 // pred_region
      _
    $region9: #{tpu_custom_call.1} parent=1 // pred_fallthru
      _
    // Predicated region
    $region10: #{tpu_custom_call.1} parent=1 // pred_check
      _
    $region11: #{tpu_custom_call.1} parent=1 // pred_check_branch
      %33 = sbr.rel (0) target = $region13
    $region12: #{tpu_custom_call.1} parent=1 // pred_region
      _
    $region13: #{tpu_custom_call.1} parent=1 // pred_fallthru
      _
    // Predicated region
    $region14: #{tpu_custom_call.1} parent=1 // pred_check
      _
    $region15: #{tpu_custom_call.1} parent=1 // pred_check_branch
      %35 = sbr.rel (0) target = $region17
    $region16: #{tpu_custom_call.1} parent=1 // pred_region
      _
    $region17: #{tpu_custom_call.1} parent=1 // pred_fallthru
      _
    // Predicated region
    $region18: #{tpu_custom_call.1} parent=1 // pred_check
      _
    $region19: #{tpu_custom_call.1} parent=1 // pred_check_branch
      %37 = sbr.rel (0) target = $region21
    $region20: #{tpu_custom_call.1} parent=1 // pred_region
      _
    $region21: #{tpu_custom_call.1} parent=1 // pred_fallthru
      _
    // Predicated region
    $region22: #{tpu_custom_call.1} parent=1 // pred_check
      _
    $region23: #{tpu_custom_call.1} parent=1 // pred_check_branch
      %39 = sbr.rel (0) target = $region25
    $region24: #{tpu_custom_call.1} parent=1 // pred_region
      _
    $region25: #{tpu_custom_call.1} parent=1 // pred_fallthru
      _
    // Predicated region
    $region26: #{tpu_custom_call.1} parent=1 // pred_check
      _
    $region27: #{tpu_custom_call.1} parent=1 // pred_check_branch
      %41 = sbr.rel (0) target = $region29
    $region28: #{tpu_custom_call.1} parent=1 // pred_region
      _
    $region29: #{tpu_custom_call.1} parent=1 // pred_fallthru
      _
    // Predicated region
    $region30: #{tpu_custom_call.1} parent=1 // pred_check
      _
    $region31: #{tpu_custom_call.1} parent=1 // pred_check_branch
      %43 = sbr.rel (0) target = $region33
    $region32: #{tpu_custom_call.1} parent=1 // pred_region
      _
    $region33: #{tpu_custom_call.1} parent=1 // pred_fallthru
      _
    // Predicated region
    $region34: #{tpu_custom_call.1} parent=1 // pred_check
      _
    $region35: #{tpu_custom_call.1} parent=1 // pred_check_branch
      %45 = sbr.rel (0) target = $region37
    $region36: #{tpu_custom_call.1} parent=1 // pred_region
      %47 = vsyncadd [#allocation3], 0
      %s48 = sshll.u32 %s8, 4
      %s49 = int_to_ptr.hbm [resolvable:$true] %s48
      %s50 = sshll.u32 [#allocation2], 4
      %s51 = int_to_ptr.vmem [resolvable:$true] %s50
      %56 = dma.hbm_to_vmem [thread:$0]  %s49, 512, %s51, [#allocation3], 128, 128, 8
    $region37: #{tpu_custom_call.1} parent=1 // pred_fallthru
      _
    // Predicated region
    $region38: #{tpu_custom_call.1} parent=1 // pred_check
      _
    $region39: #{tpu_custom_call.1} parent=1 // pred_check_branch
      %58 = sbr.rel (0) target = $region41
    $region40: #{tpu_custom_call.1} parent=1 // pred_region
      _
    $region41: #{tpu_custom_call.1} parent=1 // pred_fallthru
      _
    // Predicated region
    $region42: #{tpu_custom_call.1} parent=1 // pred_check
      _
    $region43: #{tpu_custom_call.1} parent=1 // pred_check_branch
      %60 = sbr.rel (0) target = $region45
    $region44: #{tpu_custom_call.1} parent=1 // pred_region
      _
    $region45: #{tpu_custom_call.1} parent=1 // pred_fallthru
      _
    // Predicated region
    $region46: #{tpu_custom_call.1} parent=1 // pred_check
      _
    $region47: #{tpu_custom_call.1} parent=1 // pred_check_branch
      %62 = sbr.rel (0) target = $region49
    $region48: #{tpu_custom_call.1} parent=1 // pred_region
      _
    $region49: #{tpu_custom_call.1} parent=1 // pred_fallthru
      _
    // Predicated region
    $region50: #{tpu_custom_call.1} parent=1 // pred_check
      _
    $region51: #{tpu_custom_call.1} parent=1 // pred_check_branch
      %64 = sbr.rel (0) target = $region53
    $region52: #{tpu_custom_call.1} parent=1 // pred_region
      %66 = vsyncadd [#allocation6], 0
      %s67 = sshll.u32 %s12, 4
      %s68 = int_to_ptr.hbm [resolvable:$true] %s67
      %s69 = sshll.u32 [#allocation5], 4
      %s70 = int_to_ptr.vmem [resolvable:$true] %s69
      %75 = dma.hbm_to_vmem [thread:$0]  %s68, 1024, %s70, [#allocation6], 128, 128, 8
    $region53: #{tpu_custom_call.1} parent=1 // pred_fallthru
      _
    // Predicated region
    $region54: #{tpu_custom_call.1} parent=1 // pred_check
      _
    $region55: #{tpu_custom_call.1} parent=1 // pred_check_branch
      %77 = sbr.rel (0) target = $region57
    $region56: #{tpu_custom_call.1} parent=1 // pred_region
      _
    $region57: #{tpu_custom_call.1} parent=1 // pred_fallthru
      _
    // Predicated region
    $region58: #{tpu_custom_call.1} parent=1 // pred_check
      _
    $region59: #{tpu_custom_call.1} parent=1 // pred_check_branch
      %79 = sbr.rel (0) target = $region61
    $region60: #{tpu_custom_call.1} parent=1 // pred_region
      %81 = vsyncadd [#allocation6], 0
      %s82 = sshll.u32 %s14, 4
      %s83 = int_to_ptr.hbm [resolvable:$true] %s82
      %s84 = sshll.u32 [#allocation7], 4
      %s85 = int_to_ptr.vmem [resolvable:$true] %s84
      %90 = dma.hbm_to_vmem [thread:$0]  %s83, 1024, %s85, [#allocation6], 128, 128, 8
    $region61: #{tpu_custom_call.1} parent=1 // pred_fallthru
      _
    // Predicated region
    $region62: #{tpu_custom_call.1} parent=1 // pred_check
      _
    $region63: #{tpu_custom_call.1} parent=1 // pred_check_branch
      %92 = sbr.rel (0) target = $region65
    $region64: #{tpu_custom_call.1} parent=1 // pred_region
      _
    $region65: #{tpu_custom_call.1} parent=1 // pred_fallthru
      _
    // Predicated region
    $region66: #{tpu_custom_call.1} parent=1 // pred_check
      _
    $region67: #{tpu_custom_call.1} parent=1 // pred_check_branch
      %94 = sbr.rel (0) target = $region69
    $region68: #{tpu_custom_call.1} parent=1 // pred_region
      _
    $region69: #{tpu_custom_call.1} parent=1 // pred_fallthru
      _
    // Predicated region
    $region70: #{tpu_custom_call.1} parent=1 // pred_check
      _
    $region71: #{tpu_custom_call.1} parent=1 // pred_check_branch
      %96 = sbr.rel (0) target = $region73
    $region72: #{tpu_custom_call.1} parent=1 // pred_region
      _
    $region73: #{tpu_custom_call.1} parent=1 // pred_fallthru
      _
    // Predicated region
    $region74: #{tpu_custom_call.1} parent=1 // pred_check
      _
    $region75: #{tpu_custom_call.1} parent=1 // pred_check_branch
      %98 = sbr.rel (0) target = $region77
    $region76: #{tpu_custom_call.1} parent=1 // pred_region
      _
    $region77: #{tpu_custom_call.1} parent=1 // pred_fallthru
      _
    // Predicated region
    $region78: #{tpu_custom_call.1} parent=1 // pred_check
      _
    $region79: #{tpu_custom_call.1} parent=1 // pred_check_branch
      %100 = sbr.rel (0) target = $region81
    $region80: #{tpu_custom_call.1} parent=1 // pred_region
      _
    $region81: #{tpu_custom_call.1} parent=1 // pred_fallthru
      _
    // Predicated region
    $region82: #{tpu_custom_call.1} parent=1 // pred_check
      _
    $region83: #{tpu_custom_call.1} parent=1 // pred_check_branch
      %102 = sbr.rel (0) target = $region85
    $region84: #{tpu_custom_call.1} parent=1 // pred_region
      %104 = dma.done [#allocation3], 512
    $region85: #{tpu_custom_call.1} parent=1 // pred_fallthru
      _
    // Predicated region
    $region86: #{tpu_custom_call.1} parent=1 // pred_check
      _
    $region87: #{tpu_custom_call.1} parent=1 // pred_check_branch
      %106 = sbr.rel (0) target = $region89
    $region88: #{tpu_custom_call.1} parent=1 // pred_region
      %108 = dma.done [#allocation6], 1024
    $region89: #{tpu_custom_call.1} parent=1 // pred_fallthru
      _
    // Predicated region
    $region90: #{tpu_custom_call.1} parent=1 // pred_check
      _
    $region91: #{tpu_custom_call.1} parent=1 // pred_check_branch
      %110 = sbr.rel (0) target = $region93
    $region92: #{tpu_custom_call.1} parent=1 // pred_region
      %112 = dma.done [#allocation6], 1024
    $region93: #{tpu_custom_call.1} parent=1 // pred_fallthru
      _
    %v116 = vld [vmem:[%s0] sm:$0x3]
    %v117 = vld [vmem:[%s0 + $0x2] sm:$0x3]
    %vm118 = vnez %v116
    %vm119 = vnez %v117
    %v120 = vld [vmem:[%s1] sm:$0xff]
    %v121 = vld [vmem:[%s1 + $0x8] sm:$0xff]
    %v122 = vld [vmem:[%s2] sm:$0xf]
    %v123 = vld [vmem:[%s3] sm:$0x1]
    %v124 = vld [vmem:[%s4] sm:$0xf]
    %v125 = vld [vmem:[%s5] sm:$0x1]
    %v127 = vperm.slane %v123, 0
    %vm129 = vcmask 31744
    %v131 = vsel %vm129, %v120, 0
    %v134 = vsel %vm129, %v121, 0
    %vm136 = vcmask 1043456
    %v138 = vsel %vm136, %v122, 0
    %140 = vmatpush.msra.mxu0 0.0
    %141 = vmatpush.msra.mxu0 0.0
    %142 = vmatpush.msra.mxu0 0.0
    %143 = vmatpush.msra.mxu0 0.0
    %144 = vmatpush.msra.mxu0 0.0
    %145 = vmatpush.msra.mxu0 0.0
    %146 = vmatpush.msra.mxu0 0.0
    %147 = vmatpush.msra.mxu0 0.0
    %148 = vmatpush.msra.mxu0 0.0
    %149 = vmatpush.msra.mxu0 0.0
    %150 = vmatpush.msra.mxu0 0.0
    %151 = vmatpush.msra.mxu0 0.0
    %152 = vmatpush.msra.mxu0 0.0
    %153 = vmatpush.msra.mxu0 0.0
    %154 = vmatpush.msra.mxu0 0.0
    %155 = vmatpush.msra.mxu0 %v138
    %156 = vmatmul.f32.gmra.mxu0 %v131
    %v157 = vpop.f32.mrf.mxu0
    %v158 = vadd.f32 %v127, %v157
    %159 = vmatmul.f32.gmra.mxu0 %v134
    %v160 = vpop.f32.mrf.mxu0
    %v161 = vadd.f32 %v127, %v160
    %162 = vdwg.mxu0
    %v164 = vperm.slane %v125, 0
    %v167 = vsel %vm136, %v124, 0
    %169 = vmatpush.msra.mxu0 0.0
    %170 = vmatpush.msra.mxu0 0.0
    %171 = vmatpush.msra.mxu0 0.0
    %172 = vmatpush.msra.mxu0 0.0
    %173 = vmatpush.msra.mxu0 0.0
    %174 = vmatpush.msra.mxu0 0.0
    %175 = vmatpush.msra.mxu0 0.0
    %176 = vmatpush.msra.mxu0 0.0
    %177 = vmatpush.msra.mxu0 0.0
    %178 = vmatpush.msra.mxu0 0.0
    %179 = vmatpush.msra.mxu0 0.0
    %180 = vmatpush.msra.mxu0 0.0
    %181 = vmatpush.msra.mxu0 0.0
    %182 = vmatpush.msra.mxu0 0.0
    %183 = vmatpush.msra.mxu0 0.0
    %184 = vmatpush.msra.mxu0 %v167
    %185 = vmatmul.f32.gmra.mxu0 %v131
    %v186 = vpop.f32.mrf.mxu0
    %v187 = vadd.f32 %v164, %v186
    %188 = vmatmul.f32.gmra.mxu0 %v134
    %v189 = vpop.f32.mrf.mxu0
    %v190 = vadd.f32 %v164, %v189
    %191 = vdwg.mxu0
    %192 = vxpose.xlu0.b32.start [1/16] %v187, 128
    %193 = vxpose.xlu0.b32.cont [2/16] %v190, 128
    %194 = vxpose.xlu0.b32.cont [3/16] 0.0, 128
    %195 = vxpose.xlu0.b32.cont [4/16] 0.0, 128
    %196 = vxpose.xlu0.b32.cont [5/16] 0.0, 128
    %197 = vxpose.xlu0.b32.cont [6/16] 0.0, 128
    %198 = vxpose.xlu0.b32.cont [7/16] 0.0, 128
    %199 = vxpose.xlu0.b32.cont [8/16] 0.0, 128
    %200 = vxpose.xlu0.b32.cont [9/16] 0.0, 128
    %201 = vxpose.xlu0.b32.cont [10/16] 0.0, 128
    %202 = vxpose.xlu0.b32.cont [11/16] 0.0, 128
    %203 = vxpose.xlu0.b32.cont [12/16] 0.0, 128
    %204 = vxpose.xlu0.b32.cont [13/16] 0.0, 128
    %205 = vxpose.xlu0.b32.cont [14/16] 0.0, 128
    %206 = vxpose.xlu0.b32.cont [15/16] 0.0, 128
    %207 = vxpose.xlu0.b32.end [16/16] 0.0, 128
    %v208 = vpop.trf.xlu0
    %v209 = vpop.trf.xlu0
    %v210 = vpop.trf.xlu0
    %v211 = vpop.trf.xlu0
    %v212 = vpop.trf.xlu0
    %v213 = vpop.trf.xlu0
    %v214 = vpop.trf.xlu0
    %v215 = vpop.trf.xlu0
    %v216 = vpop.trf.xlu0
    %v217 = vpop.trf.xlu0
    %v218 = vpop.trf.xlu0
    %v219 = vpop.trf.xlu0
    %v220 = vpop.trf.xlu0
    %v221 = vpop.trf.xlu0
    %v222 = vpop.trf.xlu0
    %v223 = vpop.trf.xlu0
    %v224 = vpack.c.bf16 %v208, %v208
    %v225 = vpack.c.bf16 %v209, %v209
    %v226 = vpack.c.bf16 %v210, %v210
    %v227 = vpack.c.bf16 %v211, %v211
    %v228 = vsel %vm118, 16843009, 0
    %v229 = vsel %vm119, 16843009, 0
    %v230 = vrot.slane %v228, 1
    %v231 = vrot.slane %v228, 2
    %v232 = vrot.slane %v228, 3
    %v233 = vrot.slane %v229, 1
    %v234 = vrot.slane %v229, 2
    %v235 = vrot.slane %v229, 3
    %vm236 = vcmask 1040384
    %v239 = vsel %vm236, %v228, %v230
    %vm240 = vcmask 1042434
    %v243 = vsel %vm240, %v231, %v232
    %vm244 = vcmask 1041408
    %v245 = vsel %vm244, %v239, %v243
    %vm247 = vcmask 1041409
    %v248 = vsel %vm247, %v228, %v230
    %vm249 = vcmask 1043459
    %v250 = vsel %vm249, %v231, %v232
    %vm251 = vcmask 1042433
    %v252 = vsel %vm251, %v248, %v250
    %v254 = vrot.slane %v252, 1
    %v257 = vsel %vm236, %v229, %v233
    %v260 = vsel %vm240, %v234, %v235
    %v261 = vsel %vm244, %v257, %v260
    %v263 = vsel %vm247, %v229, %v233
    %v264 = vsel %vm249, %v234, %v235
    %v265 = vsel %vm251, %v263, %v264
    %v267 = vrot.slane %v265, 1
    %v269 = vshrl.u32 %v245, 0
    %v271 = vshrl.u32 %v245, 8
    %v273 = vshrl.u32 %v245, 16
    %v275 = vshrl.u32 %v245, 24
    %v278 = vshrl.u32 %v254, 0
    %v280 = vshrl.u32 %v254, 8
    %v282 = vshrl.u32 %v254, 16
    %v284 = vshrl.u32 %v254, 24
    %v287 = vshrl.u32 %v261, 0
    %v289 = vshrl.u32 %v261, 8
    %v291 = vshrl.u32 %v261, 16
    %v293 = vshrl.u32 %v261, 24
    %v296 = vshrl.u32 %v267, 0
    %v298 = vshrl.u32 %v267, 8
    %v300 = vshrl.u32 %v267, 16
    %v302 = vshrl.u32 %v267, 24
    %v304 = vpack.c.b16 %v269, %v269
    %v305 = vpack.c.b8 %v304, %v304
    %v306 = vpack.c.b16 %v271, %v271
    %v307 = vpack.c.b8 %v306, %v306
    %v308 = vpack.c.b16 %v273, %v273
    %v309 = vpack.c.b8 %v308, %v308
    %v310 = vpack.c.b16 %v275, %v275
    %v311 = vpack.c.b8 %v310, %v310
    %v312 = vpack.c.b16 %v278, %v278
    %v313 = vpack.c.b8 %v312, %v312
    %v314 = vpack.c.b16 %v280, %v280
    %v315 = vpack.c.b8 %v314, %v314
    %v316 = vpack.c.b16 %v282, %v282
    %v317 = vpack.c.b8 %v316, %v316
    %v318 = vpack.c.b16 %v284, %v284
    %v319 = vpack.c.b8 %v318, %v318
    %v320 = vpack.c.b16 %v287, %v287
    %v321 = vpack.c.b8 %v320, %v320
    %v322 = vpack.c.b16 %v289, %v289
    %v323 = vpack.c.b8 %v322, %v322
    %v324 = vpack.c.b16 %v291, %v291
    %v325 = vpack.c.b8 %v324, %v324
    %v326 = vpack.c.b16 %v293, %v293
    %v327 = vpack.c.b8 %v326, %v326
    %v328 = vpack.c.b16 %v296, %v296
    %v329 = vpack.c.b8 %v328, %v328
    %v330 = vpack.c.b16 %v298, %v298
    %v331 = vpack.c.b8 %v330, %v330
    %v332 = vpack.c.b16 %v300, %v300
    %v333 = vpack.c.b8 %v332, %v332
    %v334 = vpack.c.b16 %v302, %v302
    %v335 = vpack.c.b8 %v334, %v334
    %vm336 = vnez %v305
    %vm337 = vnez %v307
    %vm338 = vnez %v309
    %vm339 = vnez %v311
    %vm340 = vnez %v313
    %vm341 = vnez %v315
    %vm342 = vnez %v317
    %vm343 = vnez %v319
    %vm344 = vnez %v321
    %vm345 = vnez %v323
    %vm346 = vnez %v325
    %vm347 = vnez %v327
    %vm348 = vnez %v329
    %vm349 = vnez %v331
    %vm350 = vnez %v333
    %vm351 = vnez %v335
    %v352 = vsel %vm336, 16843009, 0
    %v353 = vsel %vm337, 16843009, 0
    %v354 = vsel %vm338, 16843009, 0
    %v355 = vsel %vm339, 16843009, 0
    %v356 = vsel %vm340, 16843009, 0
    %v357 = vsel %vm341, 16843009, 0
    %v358 = vsel %vm342, 16843009, 0
    %v359 = vsel %vm343, 16843009, 0
    %v360 = vsel %vm344, 16843009, 0
    %v361 = vsel %vm345, 16843009, 0
    %v362 = vsel %vm346, 16843009, 0
    %v363 = vsel %vm347, 16843009, 0
    %v364 = vsel %vm348, 16843009, 0
    %v365 = vsel %vm349, 16843009, 0
    %v366 = vsel %vm350, 16843009, 0
    %v367 = vsel %vm351, 16843009, 0
    %v368 = vunpack.c.0.s8 %v352
    %v369 = vunpack.c.0.s8 %v353
    %v370 = vunpack.c.0.s8 %v354
    %v371 = vunpack.c.0.s8 %v355
    %v372 = vunpack.c.0.s8 %v356
    %v373 = vunpack.c.0.s8 %v357
    %v374 = vunpack.c.0.s8 %v358
    %v375 = vunpack.c.0.s8 %v359
    %v376 = vunpack.c.0.s8 %v360
    %v377 = vunpack.c.0.s8 %v361
    %v378 = vunpack.c.0.s8 %v362
    %v379 = vunpack.c.0.s8 %v363
    %v380 = vunpack.c.0.s8 %v364
    %v381 = vunpack.c.0.s8 %v365
    %v382 = vunpack.c.0.s8 %v366
    %v383 = vunpack.c.0.s8 %v367
    %v384 = vpack.i.b16 %v368, %v368
    %v385 = vpack.i.b8 %v384, %v384
    %v386 = vpack.i.b16 %v369, %v369
    %v387 = vpack.i.b8 %v386, %v386
    %v388 = vpack.i.b16 %v370, %v370
    %v389 = vpack.i.b8 %v388, %v388
    %v390 = vpack.i.b16 %v371, %v371
    %v391 = vpack.i.b8 %v390, %v390
    %v392 = vpack.i.b16 %v372, %v372
    %v393 = vpack.i.b8 %v392, %v392
    %v394 = vpack.i.b16 %v373, %v373
    %v395 = vpack.i.b8 %v394, %v394
    %v396 = vpack.i.b16 %v374, %v374
    %v397 = vpack.i.b8 %v396, %v396
    %v398 = vpack.i.b16 %v375, %v375
    %v399 = vpack.i.b8 %v398, %v398
    %v400 = vpack.i.b16 %v376, %v376
    %v401 = vpack.i.b8 %v400, %v400
    %v402 = vpack.i.b16 %v377, %v377
    %v403 = vpack.i.b8 %v402, %v402
    %v404 = vpack.i.b16 %v378, %v378
    %v405 = vpack.i.b8 %v404, %v404
    %v406 = vpack.i.b16 %v379, %v379
    %v407 = vpack.i.b8 %v406, %v406
    %v408 = vpack.i.b16 %v380, %v380
    %v409 = vpack.i.b8 %v408, %v408
    %v410 = vpack.i.b16 %v381, %v381
    %v411 = vpack.i.b8 %v410, %v410
    %v412 = vpack.i.b16 %v382, %v382
    %v413 = vpack.i.b8 %v412, %v412
    %v414 = vpack.i.b16 %v383, %v383
    %v415 = vpack.i.b8 %v414, %v414
    %vm416 = vnez %v385
    %vm417 = vnez %v387
    %vm418 = vnez %v389
    %vm419 = vnez %v391
    %vm420 = vnez %v393
    %vm421 = vnez %v395
    %vm422 = vnez %v397
    %vm423 = vnez %v399
    %vm424 = vnez %v401
    %vm425 = vnez %v403
    %vm426 = vnez %v405
    %vm427 = vnez %v407
    %vm428 = vnez %v409
    %vm429 = vnez %v411
    %vm430 = vnez %v413
    %vm431 = vnez %v415
    %v432 = vsel %vm416, 16843009, 0
    %v433 = vsel %vm417, 16843009, 0
    %v434 = vsel %vm418, 16843009, 0
    %v435 = vsel %vm419, 16843009, 0
    %v436 = vsel %vm420, 16843009, 0
    %v437 = vsel %vm421, 16843009, 0
    %v438 = vsel %vm422, 16843009, 0
    %v439 = vsel %vm423, 16843009, 0
    %v440 = vsel %vm424, 16843009, 0
    %v441 = vsel %vm425, 16843009, 0
    %v442 = vsel %vm426, 16843009, 0
    %v443 = vsel %vm427, 16843009, 0
    %v444 = vsel %vm428, 16843009, 0
    %v445 = vsel %vm429, 16843009, 0
    %v446 = vsel %vm430, 16843009, 0
    %v447 = vsel %vm431, 16843009, 0
    %v448 = vunpack.c.0.s8 %v432
    %v449 = vunpack.c.0.s8 %v433
    %v450 = vunpack.c.0.s8 %v434
    %v451 = vunpack.c.0.s8 %v435
    %v452 = vunpack.c.0.s8 %v436
    %v453 = vunpack.c.0.s8 %v437
    %v454 = vunpack.c.0.s8 %v438
    %v455 = vunpack.c.0.s8 %v439
    %v456 = vunpack.c.0.s8 %v440
    %v457 = vunpack.c.0.s8 %v441
    %v458 = vunpack.c.0.s8 %v442
    %v459 = vunpack.c.0.s8 %v443
    %v460 = vunpack.c.0.s8 %v444
    %v461 = vunpack.c.0.s8 %v445
    %v462 = vunpack.c.0.s8 %v446
    %v463 = vunpack.c.0.s8 %v447
    %vm464 = vcmp.ne.s32.totalorder %v448, 0
    %vm465 = vcmp.ne.s32.totalorder %v449, 0
    %vm466 = vcmp.ne.s32.totalorder %v450, 0
    %vm467 = vcmp.ne.s32.totalorder %v451, 0
    %vm468 = vcmp.ne.s32.totalorder %v452, 0
    %vm469 = vcmp.ne.s32.totalorder %v453, 0
    %vm470 = vcmp.ne.s32.totalorder %v454, 0
    %vm471 = vcmp.ne.s32.totalorder %v455, 0
    %vm472 = vcmp.ne.s32.totalorder %v456, 0
    %vm473 = vcmp.ne.s32.totalorder %v457, 0
    %vm474 = vcmp.ne.s32.totalorder %v458, 0
    %vm475 = vcmp.ne.s32.totalorder %v459, 0
    %vm476 = vcmp.ne.s32.totalorder %v460, 0
    %vm477 = vcmp.ne.s32.totalorder %v461, 0
    %vm478 = vcmp.ne.s32.totalorder %v462, 0
    %vm479 = vcmp.ne.s32.totalorder %v463, 0
    %v480 = vsel %vm464, 1, 0
    %v481 = vsel %vm465, 1, 0
    %v482 = vsel %vm466, 1, 0
    %v483 = vsel %vm467, 1, 0
    %v484 = vsel %vm468, 1, 0
    %v485 = vsel %vm469, 1, 0
    %v486 = vsel %vm470, 1, 0
    %v487 = vsel %vm471, 1, 0
    %v488 = vsel %vm472, 1, 0
    %v489 = vsel %vm473, 1, 0
    %v490 = vsel %vm474, 1, 0
    %v491 = vsel %vm475, 1, 0
    %v492 = vsel %vm476, 1, 0
    %v493 = vsel %vm477, 1, 0
    %v494 = vsel %vm478, 1, 0
    %v495 = vsel %vm479, 1, 0
    %v496 = vperm.slane %v480, 0
    %v497 = vperm.slane %v481, 0
    %v498 = vperm.slane %v482, 0
    %v499 = vperm.slane %v483, 0
    %v500 = vperm.slane %v484, 0
    %v501 = vperm.slane %v485, 0
    %v502 = vperm.slane %v486, 0
    %v503 = vperm.slane %v487, 0
    %v504 = vperm.slane %v488, 0
    %v505 = vperm.slane %v489, 0
    %v506 = vperm.slane %v490, 0
    %v507 = vperm.slane %v491, 0
    %v508 = vperm.slane %v492, 0
    %v509 = vperm.slane %v493, 0
    %v510 = vperm.slane %v494, 0
    %v511 = vperm.slane %v495, 0
    %vm512 = vcmp.eq.s32.totalorder %v496, 1
    %vm513 = vcmp.eq.s32.totalorder %v497, 1
    %vm514 = vcmp.eq.s32.totalorder %v498, 1
    %vm515 = vcmp.eq.s32.totalorder %v499, 1
    %vm516 = vcmp.eq.s32.totalorder %v500, 1
    %vm517 = vcmp.eq.s32.totalorder %v501, 1
    %vm518 = vcmp.eq.s32.totalorder %v502, 1
    %vm519 = vcmp.eq.s32.totalorder %v503, 1
    %vm520 = vcmp.eq.s32.totalorder %v504, 1
    %vm521 = vcmp.eq.s32.totalorder %v505, 1
    %vm522 = vcmp.eq.s32.totalorder %v506, 1
    %vm523 = vcmp.eq.s32.totalorder %v507, 1
    %vm524 = vcmp.eq.s32.totalorder %v508, 1
    %vm525 = vcmp.eq.s32.totalorder %v509, 1
    %vm526 = vcmp.eq.s32.totalorder %v510, 1
    %vm527 = vcmp.eq.s32.totalorder %v511, 1
    %vm528 = vmpackc.low %vm512, %vm512
    %vm529 = vmpackc.low %vm513, %vm513
    %vm530 = vmpackc.low %vm514, %vm514
    %vm531 = vmpackc.low %vm515, %vm515
    %vm532 = vmpackc.low %vm516, %vm516
    %vm533 = vmpackc.low %vm517, %vm517
    %vm534 = vmpackc.low %vm518, %vm518
    %vm535 = vmpackc.low %vm519, %vm519
    %vm536 = vmpackc.low %vm520, %vm520
    %vm537 = vmpackc.low %vm521, %vm521
    %vm538 = vmpackc.low %vm522, %vm522
    %vm539 = vmpackc.low %vm523, %vm523
    %vm540 = vmpackc.low %vm524, %vm524
    %vm541 = vmpackc.low %vm525, %vm525
    %vm542 = vmpackc.low %vm526, %vm526
    %vm543 = vmpackc.low %vm527, %vm527
    %v544 = vsel %vm528, %v224, 4048220490
    %v545 = vsel %vm528, %v225, 4048220490
    %v546 = vsel %vm528, %v226, 4048220490
    %v547 = vsel %vm528, %v227, 4048220490
    %v548 = vsel %vm529, %v224, 4048220490
    %v549 = vsel %vm529, %v225, 4048220490
    %v550 = vsel %vm529, %v226, 4048220490
    %v551 = vsel %vm529, %v227, 4048220490
    %v552 = vsel %vm530, %v224, 4048220490
    %v553 = vsel %vm530, %v225, 4048220490
    %v554 = vsel %vm530, %v226, 4048220490
    %v555 = vsel %vm530, %v227, 4048220490
    %v556 = vsel %vm531, %v224, 4048220490
    %v557 = vsel %vm531, %v225, 4048220490
    %v558 = vsel %vm531, %v226, 4048220490
    %v559 = vsel %vm531, %v227, 4048220490
    %v560 = vsel %vm532, %v224, 4048220490
    %v561 = vsel %vm532, %v225, 4048220490
    %v562 = vsel %vm532, %v226, 4048220490
    %v563 = vsel %vm532, %v227, 4048220490
    %v564 = vsel %vm533, %v224, 4048220490
    %v565 = vsel %vm533, %v225, 4048220490
    %v566 = vsel %vm533, %v226, 4048220490
    %v567 = vsel %vm533, %v227, 4048220490
    %v568 = vsel %vm534, %v224, 4048220490
    %v569 = vsel %vm534, %v225, 4048220490
    %v570 = vsel %vm534, %v226, 4048220490
    %v571 = vsel %vm534, %v227, 4048220490
    %v572 = vsel %vm535, %v224, 4048220490
    %v573 = vsel %vm535, %v225, 4048220490
    %v574 = vsel %vm535, %v226, 4048220490
    %v575 = vsel %vm535, %v227, 4048220490
    %v576 = vsel %vm536, %v224, 4048220490
    %v577 = vsel %vm536, %v225, 4048220490
    %v578 = vsel %vm536, %v226, 4048220490
    %v579 = vsel %vm536, %v227, 4048220490
    %v580 = vsel %vm537, %v224, 4048220490
    %v581 = vsel %vm537, %v225, 4048220490
    %v582 = vsel %vm537, %v226, 4048220490
    %v583 = vsel %vm537, %v227, 4048220490
    %v584 = vsel %vm538, %v224, 4048220490
    %v585 = vsel %vm538, %v225, 4048220490
    %v586 = vsel %vm538, %v226, 4048220490
    %v587 = vsel %vm538, %v227, 4048220490
    %v588 = vsel %vm539, %v224, 4048220490
    %v589 = vsel %vm539, %v225, 4048220490
    %v590 = vsel %vm539, %v226, 4048220490
    %v591 = vsel %vm539, %v227, 4048220490
    %v592 = vsel %vm540, %v224, 4048220490
    %v593 = vsel %vm540, %v225, 4048220490
    %v594 = vsel %vm540, %v226, 4048220490
    %v595 = vsel %vm540, %v227, 4048220490
    %v596 = vsel %vm541, %v224, 4048220490
    %v597 = vsel %vm541, %v225, 4048220490
    %v598 = vsel %vm541, %v226, 4048220490
    %v599 = vsel %vm541, %v227, 4048220490
    %v600 = vsel %vm542, %v224, 4048220490
    %v601 = vsel %vm542, %v225, 4048220490
    %v602 = vsel %vm542, %v226, 4048220490
    %v603 = vsel %vm542, %v227, 4048220490
    %v604 = vsel %vm543, %v224, 4048220490
    %v605 = vsel %vm543, %v225, 4048220490
    %v606 = vsel %vm543, %v226, 4048220490
    %v607 = vsel %vm543, %v227, 4048220490
    %v608 = vunpack.c.l.bf16 %v544
    %v609 = vunpack.c.l.bf16 %v545
    %v610 = vunpack.c.l.bf16 %v546
    %v611 = vunpack.c.l.bf16 %v547
    %v612 = vunpack.c.l.bf16 %v548
    %v613 = vunpack.c.l.bf16 %v549
    %v614 = vunpack.c.l.bf16 %v550
    %v615 = vunpack.c.l.bf16 %v551
    %v616 = vunpack.c.l.bf16 %v552
    %v617 = vunpack.c.l.bf16 %v553
    %v618 = vunpack.c.l.bf16 %v554
    %v619 = vunpack.c.l.bf16 %v555
    %v620 = vunpack.c.l.bf16 %v556
    %v621 = vunpack.c.l.bf16 %v557
    %v622 = vunpack.c.l.bf16 %v558
    %v623 = vunpack.c.l.bf16 %v559
    %v624 = vunpack.c.l.bf16 %v560
    %v625 = vunpack.c.l.bf16 %v561
    %v626 = vunpack.c.l.bf16 %v562
    %v627 = vunpack.c.l.bf16 %v563
    %v628 = vunpack.c.l.bf16 %v564
    %v629 = vunpack.c.l.bf16 %v565
    %v630 = vunpack.c.l.bf16 %v566
    %v631 = vunpack.c.l.bf16 %v567
    %v632 = vunpack.c.l.bf16 %v568
    %v633 = vunpack.c.l.bf16 %v569
    %v634 = vunpack.c.l.bf16 %v570
    %v635 = vunpack.c.l.bf16 %v571
    %v636 = vunpack.c.l.bf16 %v572
    %v637 = vunpack.c.l.bf16 %v573
    %v638 = vunpack.c.l.bf16 %v574
    %v639 = vunpack.c.l.bf16 %v575
    %v640 = vunpack.c.l.bf16 %v576
    %v641 = vunpack.c.l.bf16 %v577
    %v642 = vunpack.c.l.bf16 %v578
    %v643 = vunpack.c.l.bf16 %v579
    %v644 = vunpack.c.l.bf16 %v580
    %v645 = vunpack.c.l.bf16 %v581
    %v646 = vunpack.c.l.bf16 %v582
    %v647 = vunpack.c.l.bf16 %v583
    %v648 = vunpack.c.l.bf16 %v584
    %v649 = vunpack.c.l.bf16 %v585
    %v650 = vunpack.c.l.bf16 %v586
    %v651 = vunpack.c.l.bf16 %v587
    %v652 = vunpack.c.l.bf16 %v588
    %v653 = vunpack.c.l.bf16 %v589
    %v654 = vunpack.c.l.bf16 %v590
    %v655 = vunpack.c.l.bf16 %v591
    %v656 = vunpack.c.l.bf16 %v592
    %v657 = vunpack.c.l.bf16 %v593
    %v658 = vunpack.c.l.bf16 %v594
    %v659 = vunpack.c.l.bf16 %v595
    %v660 = vunpack.c.l.bf16 %v596
    %v661 = vunpack.c.l.bf16 %v597
    %v662 = vunpack.c.l.bf16 %v598
    %v663 = vunpack.c.l.bf16 %v599
    %v664 = vunpack.c.l.bf16 %v600
    %v665 = vunpack.c.l.bf16 %v601
    %v666 = vunpack.c.l.bf16 %v602
    %v667 = vunpack.c.l.bf16 %v603
    %v668 = vunpack.c.l.bf16 %v604
    %v669 = vunpack.c.l.bf16 %v605
    %v670 = vunpack.c.l.bf16 %v606
    %v671 = vunpack.c.l.bf16 %v607
    %vm672 = vcmask 130048
    %v673 = vsel %vm672, %v608, -inf
    %674 = vmax.xlane.f32.xlu0 %v673
    %v675 = vpop.xlane.xlu0 %674
    %v676 = vsel %vm672, %v609, -inf
    %677 = vmax.xlane.f32.xlu0 %v676
    %v678 = vpop.xlane.xlu0 %677
    %v679 = vsel %vm672, %v610, -inf
    %680 = vmax.xlane.f32.xlu0 %v679
    %v681 = vpop.xlane.xlu0 %680
    %v682 = vsel %vm672, %v611, -inf
    %683 = vmax.xlane.f32.xlu0 %v682
    %v684 = vpop.xlane.xlu0 %683
    %v685 = vsel %vm672, %v612, -inf
    %686 = vmax.xlane.f32.xlu0 %v685
    %v687 = vpop.xlane.xlu0 %686
    %v688 = vsel %vm672, %v613, -inf
    %689 = vmax.xlane.f32.xlu0 %v688
    %v690 = vpop.xlane.xlu0 %689
    %v691 = vsel %vm672, %v614, -inf
    %692 = vmax.xlane.f32.xlu0 %v691
    %v693 = vpop.xlane.xlu0 %692
    %v694 = vsel %vm672, %v615, -inf
    %695 = vmax.xlane.f32.xlu0 %v694
    %v696 = vpop.xlane.xlu0 %695
    %v697 = vsel %vm672, %v616, -inf
    %698 = vmax.xlane.f32.xlu0 %v697
    %v699 = vpop.xlane.xlu0 %698
    %v700 = vsel %vm672, %v617, -inf
    %701 = vmax.xlane.f32.xlu0 %v700
    %v702 = vpop.xlane.xlu0 %701
    %v703 = vsel %vm672, %v618, -inf
    %704 = vmax.xlane.f32.xlu0 %v703
    %v705 = vpop.xlane.xlu0 %704
    %v706 = vsel %vm672, %v619, -inf
    %707 = vmax.xlane.f32.xlu0 %v706
    %v708 = vpop.xlane.xlu0 %707
    %v709 = vsel %vm672, %v620, -inf
    %710 = vmax.xlane.f32.xlu0 %v709
    %v711 = vpop.xlane.xlu0 %710
    %v712 = vsel %vm672, %v621, -inf
    %713 = vmax.xlane.f32.xlu0 %v712
    %v714 = vpop.xlane.xlu0 %713
    %v715 = vsel %vm672, %v622, -inf
    %716 = vmax.xlane.f32.xlu0 %v715
    %v717 = vpop.xlane.xlu0 %716
    %v718 = vsel %vm672, %v623, -inf
    %719 = vmax.xlane.f32.xlu0 %v718
    %v720 = vpop.xlane.xlu0 %719
    %v721 = vsel %vm672, %v624, -inf
    %722 = vmax.xlane.f32.xlu0 %v721
    %v723 = vpop.xlane.xlu0 %722
    %v724 = vsel %vm672, %v625, -inf
    %725 = vmax.xlane.f32.xlu0 %v724
    %v726 = vpop.xlane.xlu0 %725
    %v727 = vsel %vm672, %v626, -inf
    %728 = vmax.xlane.f32.xlu0 %v727
    %v729 = vpop.xlane.xlu0 %728
    %v730 = vsel %vm672, %v627, -inf
    %731 = vmax.xlane.f32.xlu0 %v730
    %v732 = vpop.xlane.xlu0 %731
    %v733 = vsel %vm672, %v628, -inf
    %734 = vmax.xlane.f32.xlu0 %v733
    %v735 = vpop.xlane.xlu0 %734
    %v736 = vsel %vm672, %v629, -inf
    %737 = vmax.xlane.f32.xlu0 %v736
    %v738 = vpop.xlane.xlu0 %737
    %v739 = vsel %vm672, %v630, -inf
    %740 = vmax.xlane.f32.xlu0 %v739
    %v741 = vpop.xlane.xlu0 %740
    %v742 = vsel %vm672, %v631, -inf
    %743 = vmax.xlane.f32.xlu0 %v742
    %v744 = vpop.xlane.xlu0 %743
    %v745 = vsel %vm672, %v632, -inf
    %746 = vmax.xlane.f32.xlu0 %v745
    %v747 = vpop.xlane.xlu0 %746
    %v748 = vsel %vm672, %v633, -inf
    %749 = vmax.xlane.f32.xlu0 %v748
    %v750 = vpop.xlane.xlu0 %749
    %v751 = vsel %vm672, %v634, -inf
    %752 = vmax.xlane.f32.xlu0 %v751
    %v753 = vpop.xlane.xlu0 %752
    %v754 = vsel %vm672, %v635, -inf
    %755 = vmax.xlane.f32.xlu0 %v754
    %v756 = vpop.xlane.xlu0 %755
    %v757 = vsel %vm672, %v636, -inf
    %758 = vmax.xlane.f32.xlu0 %v757
    %v759 = vpop.xlane.xlu0 %758
    %v760 = vsel %vm672, %v637, -inf
    %761 = vmax.xlane.f32.xlu0 %v760
    %v762 = vpop.xlane.xlu0 %761
    %v763 = vsel %vm672, %v638, -inf
    %764 = vmax.xlane.f32.xlu0 %v763
    %v765 = vpop.xlane.xlu0 %764
    %v766 = vsel %vm672, %v639, -inf
    %767 = vmax.xlane.f32.xlu0 %v766
    %v768 = vpop.xlane.xlu0 %767
    %v769 = vsel %vm672, %v640, -inf
    %770 = vmax.xlane.f32.xlu0 %v769
    %v771 = vpop.xlane.xlu0 %770
    %v772 = vsel %vm672, %v641, -inf
    %773 = vmax.xlane.f32.xlu0 %v772
    %v774 = vpop.xlane.xlu0 %773
    %v775 = vsel %vm672, %v642, -inf
    %776 = vmax.xlane.f32.xlu0 %v775
    %v777 = vpop.xlane.xlu0 %776
    %v778 = vsel %vm672, %v643, -inf
    %779 = vmax.xlane.f32.xlu0 %v778
    %v780 = vpop.xlane.xlu0 %779
    %v781 = vsel %vm672, %v644, -inf
    %782 = vmax.xlane.f32.xlu0 %v781
    %v783 = vpop.xlane.xlu0 %782
    %v784 = vsel %vm672, %v645, -inf
    %785 = vmax.xlane.f32.xlu0 %v784
    %v786 = vpop.xlane.xlu0 %785
    %v787 = vsel %vm672, %v646, -inf
    %788 = vmax.xlane.f32.xlu0 %v787
    %v789 = vpop.xlane.xlu0 %788
    %v790 = vsel %vm672, %v647, -inf
    %791 = vmax.xlane.f32.xlu0 %v790
    %v792 = vpop.xlane.xlu0 %791
    %v793 = vsel %vm672, %v648, -inf
    %794 = vmax.xlane.f32.xlu0 %v793
    %v795 = vpop.xlane.xlu0 %794
    %v796 = vsel %vm672, %v649, -inf
    %797 = vmax.xlane.f32.xlu0 %v796
    %v798 = vpop.xlane.xlu0 %797
    %v799 = vsel %vm672, %v650, -inf
    %800 = vmax.xlane.f32.xlu0 %v799
    %v801 = vpop.xlane.xlu0 %800
    %v802 = vsel %vm672, %v651, -inf
    %803 = vmax.xlane.f32.xlu0 %v802
    %v804 = vpop.xlane.xlu0 %803
    %v805 = vsel %vm672, %v652, -inf
    %806 = vmax.xlane.f32.xlu0 %v805
    %v807 = vpop.xlane.xlu0 %806
    %v808 = vsel %vm672, %v653, -inf
    %809 = vmax.xlane.f32.xlu0 %v808
    %v810 = vpop.xlane.xlu0 %809
    %v811 = vsel %vm672, %v654, -inf
    %812 = vmax.xlane.f32.xlu0 %v811
    %v813 = vpop.xlane.xlu0 %812
    %v814 = vsel %vm672, %v655, -inf
    %815 = vmax.xlane.f32.xlu0 %v814
    %v816 = vpop.xlane.xlu0 %815
    %v817 = vsel %vm672, %v656, -inf
    %818 = vmax.xlane.f32.xlu0 %v817
    %v819 = vpop.xlane.xlu0 %818
    %v820 = vsel %vm672, %v657, -inf
    %821 = vmax.xlane.f32.xlu0 %v820
    %v822 = vpop.xlane.xlu0 %821
    %v823 = vsel %vm672, %v658, -inf
    %824 = vmax.xlane.f32.xlu0 %v823
    %v825 = vpop.xlane.xlu0 %824
    %v826 = vsel %vm672, %v659, -inf
    %827 = vmax.xlane.f32.xlu0 %v826
    %v828 = vpop.xlane.xlu0 %827
    %v829 = vsel %vm672, %v660, -inf
    %830 = vmax.xlane.f32.xlu0 %v829
    %v831 = vpop.xlane.xlu0 %830
    %v832 = vsel %vm672, %v661, -inf
    %833 = vmax.xlane.f32.xlu0 %v832
    %v834 = vpop.xlane.xlu0 %833
    %v835 = vsel %vm672, %v662, -inf
    %836 = vmax.xlane.f32.xlu0 %v835
    %v837 = vpop.xlane.xlu0 %836
    %v838 = vsel %vm672, %v663, -inf
    %839 = vmax.xlane.f32.xlu0 %v838
    %v840 = vpop.xlane.xlu0 %839
    %v841 = vsel %vm672, %v664, -inf
    %842 = vmax.xlane.f32.xlu0 %v841
    %v843 = vpop.xlane.xlu0 %842
    %v844 = vsel %vm672, %v665, -inf
    %845 = vmax.xlane.f32.xlu0 %v844
    %v846 = vpop.xlane.xlu0 %845
    %v847 = vsel %vm672, %v666, -inf
    %848 = vmax.xlane.f32.xlu0 %v847
    %v849 = vpop.xlane.xlu0 %848
    %v850 = vsel %vm672, %v667, -inf
    %851 = vmax.xlane.f32.xlu0 %v850
    %v852 = vpop.xlane.xlu0 %851
    %v853 = vsel %vm672, %v668, -inf
    %854 = vmax.xlane.f32.xlu0 %v853
    %v855 = vpop.xlane.xlu0 %854
    %v856 = vsel %vm672, %v669, -inf
    %857 = vmax.xlane.f32.xlu0 %v856
    %v858 = vpop.xlane.xlu0 %857
    %v859 = vsel %vm672, %v670, -inf
    %860 = vmax.xlane.f32.xlu0 %v859
    %v861 = vpop.xlane.xlu0 %860
    %v862 = vsel %vm672, %v671, -inf
    %863 = vmax.xlane.f32.xlu0 %v862
    %v864 = vpop.xlane.xlu0 %863
    %v865 = vpack.c.bf16 %v675, %v675
    %v866 = vpack.c.bf16 %v678, %v678
    %v867 = vpack.c.bf16 %v681, %v681
    %v868 = vpack.c.bf16 %v684, %v684
    %v869 = vpack.c.bf16 %v687, %v687
    %v870 = vpack.c.bf16 %v690, %v690
    %v871 = vpack.c.bf16 %v693, %v693
    %v872 = vpack.c.bf16 %v696, %v696
    %v873 = vpack.c.bf16 %v699, %v699
    %v874 = vpack.c.bf16 %v702, %v702
    %v875 = vpack.c.bf16 %v705, %v705
    %v876 = vpack.c.bf16 %v708, %v708
    %v877 = vpack.c.bf16 %v711, %v711
    %v878 = vpack.c.bf16 %v714, %v714
    %v879 = vpack.c.bf16 %v717, %v717
    %v880 = vpack.c.bf16 %v720, %v720
    %v881 = vpack.c.bf16 %v723, %v723
    %v882 = vpack.c.bf16 %v726, %v726
    %v883 = vpack.c.bf16 %v729, %v729
    %v884 = vpack.c.bf16 %v732, %v732
    %v885 = vpack.c.bf16 %v735, %v735
    %v886 = vpack.c.bf16 %v738, %v738
    %v887 = vpack.c.bf16 %v741, %v741
    %v888 = vpack.c.bf16 %v744, %v744
    %v889 = vpack.c.bf16 %v747, %v747
    %v890 = vpack.c.bf16 %v750, %v750
    %v891 = vpack.c.bf16 %v753, %v753
    %v892 = vpack.c.bf16 %v756, %v756
    %v893 = vpack.c.bf16 %v759, %v759
    %v894 = vpack.c.bf16 %v762, %v762
    %v895 = vpack.c.bf16 %v765, %v765
    %v896 = vpack.c.bf16 %v768, %v768
    %v897 = vpack.c.bf16 %v771, %v771
    %v898 = vpack.c.bf16 %v774, %v774
    %v899 = vpack.c.bf16 %v777, %v777
    %v900 = vpack.c.bf16 %v780, %v780
    %v901 = vpack.c.bf16 %v783, %v783
    %v902 = vpack.c.bf16 %v786, %v786
    %v903 = vpack.c.bf16 %v789, %v789
    %v904 = vpack.c.bf16 %v792, %v792
    %v905 = vpack.c.bf16 %v795, %v795
    %v906 = vpack.c.bf16 %v798, %v798
    %v907 = vpack.c.bf16 %v801, %v801
    %v908 = vpack.c.bf16 %v804, %v804
    %v909 = vpack.c.bf16 %v807, %v807
    %v910 = vpack.c.bf16 %v810, %v810
    %v911 = vpack.c.bf16 %v813, %v813
    %v912 = vpack.c.bf16 %v816, %v816
    %v913 = vpack.c.bf16 %v819, %v819
    %v914 = vpack.c.bf16 %v822, %v822
    %v915 = vpack.c.bf16 %v825, %v825
    %v916 = vpack.c.bf16 %v828, %v828
    %v917 = vpack.c.bf16 %v831, %v831
    %v918 = vpack.c.bf16 %v834, %v834
    %v919 = vpack.c.bf16 %v837, %v837
    %v920 = vpack.c.bf16 %v840, %v840
    %v921 = vpack.c.bf16 %v843, %v843
    %v922 = vpack.c.bf16 %v846, %v846
    %v923 = vpack.c.bf16 %v849, %v849
    %v924 = vpack.c.bf16 %v852, %v852
    %v925 = vpack.c.bf16 %v855, %v855
    %v926 = vpack.c.bf16 %v858, %v858
    %v927 = vpack.c.bf16 %v861, %v861
    %v928 = vpack.c.bf16 %v864, %v864
    %v929 = vunpack.c.l.bf16 %v865
    %v930 = vunpack.c.l.bf16 %v866
    %v931 = vunpack.c.l.bf16 %v867
    %v932 = vunpack.c.l.bf16 %v868
    %v933 = vunpack.c.l.bf16 %v869
    %v934 = vunpack.c.l.bf16 %v870
    %v935 = vunpack.c.l.bf16 %v871
    %v936 = vunpack.c.l.bf16 %v872
    %v937 = vunpack.c.l.bf16 %v873
    %v938 = vunpack.c.l.bf16 %v874
    %v939 = vunpack.c.l.bf16 %v875
    %v940 = vunpack.c.l.bf16 %v876
    %v941 = vunpack.c.l.bf16 %v877
    %v942 = vunpack.c.l.bf16 %v878
    %v943 = vunpack.c.l.bf16 %v879
    %v944 = vunpack.c.l.bf16 %v880
    %v945 = vunpack.c.l.bf16 %v881
    %v946 = vunpack.c.l.bf16 %v882
    %v947 = vunpack.c.l.bf16 %v883
    %v948 = vunpack.c.l.bf16 %v884
    %v949 = vunpack.c.l.bf16 %v885
    %v950 = vunpack.c.l.bf16 %v886
    %v951 = vunpack.c.l.bf16 %v887
    %v952 = vunpack.c.l.bf16 %v888
    %v953 = vunpack.c.l.bf16 %v889
    %v954 = vunpack.c.l.bf16 %v890
    %v955 = vunpack.c.l.bf16 %v891
    %v956 = vunpack.c.l.bf16 %v892
    %v957 = vunpack.c.l.bf16 %v893
    %v958 = vunpack.c.l.bf16 %v894
    %v959 = vunpack.c.l.bf16 %v895
    %v960 = vunpack.c.l.bf16 %v896
    %v961 = vunpack.c.l.bf16 %v897
    %v962 = vunpack.c.l.bf16 %v898
    %v963 = vunpack.c.l.bf16 %v899
    %v964 = vunpack.c.l.bf16 %v900
    %v965 = vunpack.c.l.bf16 %v901
    %v966 = vunpack.c.l.bf16 %v902
    %v967 = vunpack.c.l.bf16 %v903
    %v968 = vunpack.c.l.bf16 %v904
    %v969 = vunpack.c.l.bf16 %v905
    %v970 = vunpack.c.l.bf16 %v906
    %v971 = vunpack.c.l.bf16 %v907
    %v972 = vunpack.c.l.bf16 %v908
    %v973 = vunpack.c.l.bf16 %v909
    %v974 = vunpack.c.l.bf16 %v910
    %v975 = vunpack.c.l.bf16 %v911
    %v976 = vunpack.c.l.bf16 %v912
    %v977 = vunpack.c.l.bf16 %v913
    %v978 = vunpack.c.l.bf16 %v914
    %v979 = vunpack.c.l.bf16 %v915
    %v980 = vunpack.c.l.bf16 %v916
    %v981 = vunpack.c.l.bf16 %v917
    %v982 = vunpack.c.l.bf16 %v918
    %v983 = vunpack.c.l.bf16 %v919
    %v984 = vunpack.c.l.bf16 %v920
    %v985 = vunpack.c.l.bf16 %v921
    %v986 = vunpack.c.l.bf16 %v922
    %v987 = vunpack.c.l.bf16 %v923
    %v988 = vunpack.c.l.bf16 %v924
    %v989 = vunpack.c.l.bf16 %v925
    %v990 = vunpack.c.l.bf16 %v926
    %v991 = vunpack.c.l.bf16 %v927
    %v992 = vunpack.c.l.bf16 %v928
    %v1057 = vlaneseq
    %v1058 = vand.u32 %v1057, 127
    %v1059 = vperm.slane %v929, %v1058
    %v1060 = vadd.s32 %v1058, 4294967288
    %v1061 = vperm.slane %v930, %v1060
    %vm1062 = vcmask 130112
    %v1063 = vsel %vm1062, %v1061, %v1059
    %v1064 = vadd.s32 %v1058, 4294967280
    %v1065 = vperm.slane %v931, %v1064
    %vm1066 = vcmask 195712
    %v1067 = vsel %vm1066, %v1065, %v1063
    %v1068 = vadd.s32 %v1058, 4294967272
    %v1069 = vperm.slane %v932, %v1068
    %vm1070 = vcmask 261312
    %v1071 = vsel %vm1070, %v1069, %v1067
    %v1072 = vperm.slane %v933, %v1058
    %v1073 = vperm.slane %v934, %v1060
    %v1074 = vsel %vm1062, %v1073, %v1072
    %v1075 = vperm.slane %v935, %v1064
    %v1076 = vsel %vm1066, %v1075, %v1074
    %v1077 = vperm.slane %v936, %v1068
    %v1078 = vsel %vm1070, %v1077, %v1076
    %v1079 = vperm.slane %v937, %v1058
    %v1080 = vperm.slane %v938, %v1060
    %v1081 = vsel %vm1062, %v1080, %v1079
    %v1082 = vperm.slane %v939, %v1064
    %v1083 = vsel %vm1066, %v1082, %v1081
    %v1084 = vperm.slane %v940, %v1068
    %v1085 = vsel %vm1070, %v1084, %v1083
    %v1086 = vperm.slane %v941, %v1058
    %v1087 = vperm.slane %v942, %v1060
    %v1088 = vsel %vm1062, %v1087, %v1086
    %v1089 = vperm.slane %v943, %v1064
    %v1090 = vsel %vm1066, %v1089, %v1088
    %v1091 = vperm.slane %v944, %v1068
    %v1092 = vsel %vm1070, %v1091, %v1090
    %v1093 = vperm.slane %v945, %v1058
    %v1094 = vperm.slane %v946, %v1060
    %v1095 = vsel %vm1062, %v1094, %v1093
    %v1096 = vperm.slane %v947, %v1064
    %v1097 = vsel %vm1066, %v1096, %v1095
    %v1098 = vperm.slane %v948, %v1068
    %v1099 = vsel %vm1070, %v1098, %v1097
    %v1100 = vperm.slane %v949, %v1058
    %v1101 = vperm.slane %v950, %v1060
    %v1102 = vsel %vm1062, %v1101, %v1100
    %v1103 = vperm.slane %v951, %v1064
    %v1104 = vsel %vm1066, %v1103, %v1102
    %v1105 = vperm.slane %v952, %v1068
    %v1106 = vsel %vm1070, %v1105, %v1104
    %v1107 = vperm.slane %v953, %v1058
    %v1108 = vperm.slane %v954, %v1060
    %v1109 = vsel %vm1062, %v1108, %v1107
    %v1110 = vperm.slane %v955, %v1064
    %v1111 = vsel %vm1066, %v1110, %v1109
    %v1112 = vperm.slane %v956, %v1068
    %v1113 = vsel %vm1070, %v1112, %v1111
    %v1114 = vperm.slane %v957, %v1058
    %v1115 = vperm.slane %v958, %v1060
    %v1116 = vsel %vm1062, %v1115, %v1114
    %v1117 = vperm.slane %v959, %v1064
    %v1118 = vsel %vm1066, %v1117, %v1116
    %v1119 = vperm.slane %v960, %v1068
    %v1120 = vsel %vm1070, %v1119, %v1118
    %v1121 = vperm.slane %v961, %v1058
    %v1122 = vperm.slane %v962, %v1060
    %v1123 = vsel %vm1062, %v1122, %v1121
    %v1124 = vperm.slane %v963, %v1064
    %v1125 = vsel %vm1066, %v1124, %v1123
    %v1126 = vperm.slane %v964, %v1068
    %v1127 = vsel %vm1070, %v1126, %v1125
    %v1128 = vperm.slane %v965, %v1058
    %v1129 = vperm.slane %v966, %v1060
    %v1130 = vsel %vm1062, %v1129, %v1128
    %v1131 = vperm.slane %v967, %v1064
    %v1132 = vsel %vm1066, %v1131, %v1130
    %v1133 = vperm.slane %v968, %v1068
    %v1134 = vsel %vm1070, %v1133, %v1132
    %v1135 = vperm.slane %v969, %v1058
    %v1136 = vperm.slane %v970, %v1060
    %v1137 = vsel %vm1062, %v1136, %v1135
    %v1138 = vperm.slane %v971, %v1064
    %v1139 = vsel %vm1066, %v1138, %v1137
    %v1140 = vperm.slane %v972, %v1068
    %v1141 = vsel %vm1070, %v1140, %v1139
    %v1142 = vperm.slane %v973, %v1058
    %v1143 = vperm.slane %v974, %v1060
    %v1144 = vsel %vm1062, %v1143, %v1142
    %v1145 = vperm.slane %v975, %v1064
    %v1146 = vsel %vm1066, %v1145, %v1144
    %v1147 = vperm.slane %v976, %v1068
    %v1148 = vsel %vm1070, %v1147, %v1146
    %v1149 = vperm.slane %v977, %v1058
    %v1150 = vperm.slane %v978, %v1060
    %v1151 = vsel %vm1062, %v1150, %v1149
    %v1152 = vperm.slane %v979, %v1064
    %v1153 = vsel %vm1066, %v1152, %v1151
    %v1154 = vperm.slane %v980, %v1068
    %v1155 = vsel %vm1070, %v1154, %v1153
    %v1156 = vperm.slane %v981, %v1058
    %v1157 = vperm.slane %v982, %v1060
    %v1158 = vsel %vm1062, %v1157, %v1156
    %v1159 = vperm.slane %v983, %v1064
    %v1160 = vsel %vm1066, %v1159, %v1158
    %v1161 = vperm.slane %v984, %v1068
    %v1162 = vsel %vm1070, %v1161, %v1160
    %v1163 = vperm.slane %v985, %v1058
    %v1164 = vperm.slane %v986, %v1060
    %v1165 = vsel %vm1062, %v1164, %v1163
    %v1166 = vperm.slane %v987, %v1064
    %v1167 = vsel %vm1066, %v1166, %v1165
    %v1168 = vperm.slane %v988, %v1068
    %v1169 = vsel %vm1070, %v1168, %v1167
    %v1170 = vperm.slane %v989, %v1058
    %v1171 = vperm.slane %v990, %v1060
    %v1172 = vsel %vm1062, %v1171, %v1170
    %v1173 = vperm.slane %v991, %v1064
    %v1174 = vsel %vm1066, %v1173, %v1172
    %v1175 = vperm.slane %v992, %v1068
    %v1176 = vsel %vm1070, %v1175, %v1174
    %v1177 = vsel %vm247, %v1078, %v1071
    %v1178 = vsel %vm240, %v1085, %v1177
    %v1179 = vsel %vm249, %v1092, %v1178
    %vm1180 = vcmask 1044484
    %v1181 = vsel %vm1180, %v1099, %v1179
    %vm1182 = vcmask 1045509
    %v1183 = vsel %vm1182, %v1106, %v1181
    %vm1184 = vcmask 1046534
    %v1185 = vsel %vm1184, %v1113, %v1183
    %vm1186 = vcmask 1047559
    %v1187 = vsel %vm1186, %v1120, %v1185
    %v1188 = vsel %vm247, %v1134, %v1127
    %v1189 = vsel %vm240, %v1141, %v1188
    %v1190 = vsel %vm249, %v1148, %v1189
    %v1191 = vsel %vm1180, %v1155, %v1190
    %v1192 = vsel %vm1182, %v1162, %v1191
    %v1193 = vsel %vm1184, %v1169, %v1192
    %v1194 = vsel %vm1186, %v1176, %v1193
    %v1197 = vadd.f32 %v158, %v1187
    %v1198 = vadd.f32 %v161, %v1194
    %vm1199 = vcmp.gt.f32.partialorder %v1197, 0.0
    %vm1200 = vcmp.gt.f32.partialorder %v1198, 0.0
    %v1201 = vmul.f32 %v1197, 1.442695
    %v1202 = vpow.pop %v1201
    %v1203 = vmul.f32 %v1198, 1.442695
    %v1204 = vpow.pop %v1203
    %v1205 = vsub.f32 %v1202, 1.0
    %v1206 = vsub.f32 %v1204, 1.0
    %v1207 = vsel %vm1199, %v1197, %v1205
    %v1208 = vsel %vm1200, %v1198, %v1206
    %v1209 = vld [vmem:[%s6] sm:$0xff]
    %v1210 = vld [vmem:[%s6 + $0x8] sm:$0xff]
    %v1211 = vld [vmem:[%s6 + $0x10] sm:$0xff]
    %v1212 = vld [vmem:[%s6 + $0x18] sm:$0xff]
    %v1213 = vld [vmem:[%s7] sm:$0x1]
    %v1214 = vld [vmem:[#allocation2] sm:$0xff]
    %v1215 = vld [vmem:[#allocation2 + $0x8] sm:$0xff]
    %v1216 = vld [vmem:[#allocation2 + $0x10] sm:$0xff]
    %v1217 = vld [vmem:[#allocation2 + $0x18] sm:$0xff]
    %v1218 = vld [vmem:[%s9] sm:$0x1]
    %v1220 = vperm.slane %v1213, 0
    %vm1222 = vcmask 261120
    %v1224 = vsel %vm1222, %v1207, 0
    %v1227 = vsel %vm1222, %v1208, 0
    %1229 = vmatpush.msra.mxu0 0.0
    %1230 = vmatpush.msra.mxu0 0.0
    %1231 = vmatpush.msra.mxu0 0.0
    %1232 = vmatpush.msra.mxu0 0.0
    %1233 = vmatpush.msra.mxu0 0.0
    %1234 = vmatpush.msra.mxu0 0.0
    %1235 = vmatpush.msra.mxu0 0.0
    %1236 = vmatpush.msra.mxu0 0.0
    %1237 = vmatpush.msra.mxu0 0.0
    %1238 = vmatpush.msra.mxu0 0.0
    %1239 = vmatpush.msra.mxu0 0.0
    %1240 = vmatpush.msra.mxu0 0.0
    %1241 = vmatpush.msra.mxu0 %v1212
    %1242 = vmatpush.msra.mxu0 %v1211
    %1243 = vmatpush.msra.mxu0 %v1210
    %1244 = vmatpush.msra.mxu0 %v1209
    %1245 = vmatmul.f32.gmra.mxu0 %v1224
    %v1246 = vpop.f32.mrf.mxu0
    %v1247 = vadd.f32 %v1220, %v1246
    %1248 = vmatmul.f32.gmra.mxu0 %v1227
    %v1249 = vpop.f32.mrf.mxu0
    %v1250 = vadd.f32 %v1220, %v1249
    %1251 = vdwg.mxu0
    %v1253 = vperm.slane %v1218, 0
    %1255 = vmatpush.msra.mxu0 0.0
    %1256 = vmatpush.msra.mxu0 0.0
    %1257 = vmatpush.msra.mxu0 0.0
    %1258 = vmatpush.msra.mxu0 0.0
    %1259 = vmatpush.msra.mxu0 0.0
    %1260 = vmatpush.msra.mxu0 0.0
    %1261 = vmatpush.msra.mxu0 0.0
    %1262 = vmatpush.msra.mxu0 0.0
    %1263 = vmatpush.msra.mxu0 0.0
    %1264 = vmatpush.msra.mxu0 0.0
    %1265 = vmatpush.msra.mxu0 0.0
    %1266 = vmatpush.msra.mxu0 0.0
    %1267 = vmatpush.msra.mxu0 %v1217
    %1268 = vmatpush.msra.mxu0 %v1216
    %1269 = vmatpush.msra.mxu0 %v1215
    %1270 = vmatpush.msra.mxu0 %v1214
    %1271 = vmatmul.f32.gmra.mxu0 %v1224
    %v1272 = vpop.f32.mrf.mxu0
    %v1273 = vadd.f32 %v1253, %v1272
    %1274 = vmatmul.f32.gmra.mxu0 %v1227
    %v1275 = vpop.f32.mrf.mxu0
    %v1276 = vadd.f32 %v1253, %v1275
    %1277 = vdwg.mxu0
    %1278 = vxpose.xlu0.b32.start [1/16] %v1273, 128
    %1279 = vxpose.xlu0.b32.cont [2/16] %v1276, 128
    %1280 = vxpose.xlu0.b32.cont [3/16] 0.0, 128
    %1281 = vxpose.xlu0.b32.cont [4/16] 0.0, 128
    %1282 = vxpose.xlu0.b32.cont [5/16] 0.0, 128
    %1283 = vxpose.xlu0.b32.cont [6/16] 0.0, 128
    %1284 = vxpose.xlu0.b32.cont [7/16] 0.0, 128
    %1285 = vxpose.xlu0.b32.cont [8/16] 0.0, 128
    %1286 = vxpose.xlu0.b32.cont [9/16] 0.0, 128
    %1287 = vxpose.xlu0.b32.cont [10/16] 0.0, 128
    %1288 = vxpose.xlu0.b32.cont [11/16] 0.0, 128
    %1289 = vxpose.xlu0.b32.cont [12/16] 0.0, 128
    %1290 = vxpose.xlu0.b32.cont [13/16] 0.0, 128
    %1291 = vxpose.xlu0.b32.cont [14/16] 0.0, 128
    %1292 = vxpose.xlu0.b32.cont [15/16] 0.0, 128
    %1293 = vxpose.xlu0.b32.end [16/16] 0.0, 128
    %v1294 = vpop.trf.xlu0
    %v1295 = vpop.trf.xlu0
    %v1296 = vpop.trf.xlu0
    %v1297 = vpop.trf.xlu0
    %v1298 = vpop.trf.xlu0
    %v1299 = vpop.trf.xlu0
    %v1300 = vpop.trf.xlu0
    %v1301 = vpop.trf.xlu0
    %v1302 = vpop.trf.xlu0
    %v1303 = vpop.trf.xlu0
    %v1304 = vpop.trf.xlu0
    %v1305 = vpop.trf.xlu0
    %v1306 = vpop.trf.xlu0
    %v1307 = vpop.trf.xlu0
    %v1308 = vpop.trf.xlu0
    %v1309 = vpop.trf.xlu0
    %v1310 = vpack.c.bf16 %v1294, %v1294
    %v1311 = vpack.c.bf16 %v1295, %v1295
    %v1312 = vpack.c.bf16 %v1296, %v1296
    %v1313 = vpack.c.bf16 %v1297, %v1297
    %v1314 = vpack.c.bf16 %v1298, %v1298
    %v1315 = vpack.c.bf16 %v1299, %v1299
    %v1316 = vpack.c.bf16 %v1300, %v1300
    %v1317 = vpack.c.bf16 %v1301, %v1301
    %v1318 = vsel %vm528, %v1310, 4048220490
    %v1319 = vsel %vm528, %v1311, 4048220490
    %v1320 = vsel %vm528, %v1312, 4048220490
    %v1321 = vsel %vm528, %v1313, 4048220490
    %v1322 = vsel %vm528, %v1314, 4048220490
    %v1323 = vsel %vm528, %v1315, 4048220490
    %v1324 = vsel %vm528, %v1316, 4048220490
    %v1325 = vsel %vm528, %v1317, 4048220490
    %v1326 = vsel %vm529, %v1310, 4048220490
    %v1327 = vsel %vm529, %v1311, 4048220490
    %v1328 = vsel %vm529, %v1312, 4048220490
    %v1329 = vsel %vm529, %v1313, 4048220490
    %v1330 = vsel %vm529, %v1314, 4048220490
    %v1331 = vsel %vm529, %v1315, 4048220490
    %v1332 = vsel %vm529, %v1316, 4048220490
    %v1333 = vsel %vm529, %v1317, 4048220490
    %v1334 = vsel %vm530, %v1310, 4048220490
    %v1335 = vsel %vm530, %v1311, 4048220490
    %v1336 = vsel %vm530, %v1312, 4048220490
    %v1337 = vsel %vm530, %v1313, 4048220490
    %v1338 = vsel %vm530, %v1314, 4048220490
    %v1339 = vsel %vm530, %v1315, 4048220490
    %v1340 = vsel %vm530, %v1316, 4048220490
    %v1341 = vsel %vm530, %v1317, 4048220490
    %v1342 = vsel %vm531, %v1310, 4048220490
    %v1343 = vsel %vm531, %v1311, 4048220490
    %v1344 = vsel %vm531, %v1312, 4048220490
    %v1345 = vsel %vm531, %v1313, 4048220490
    %v1346 = vsel %vm531, %v1314, 4048220490
    %v1347 = vsel %vm531, %v1315, 4048220490
    %v1348 = vsel %vm531, %v1316, 4048220490
    %v1349 = vsel %vm531, %v1317, 4048220490
    %v1350 = vsel %vm532, %v1310, 4048220490
    %v1351 = vsel %vm532, %v1311, 4048220490
    %v1352 = vsel %vm532, %v1312, 4048220490
    %v1353 = vsel %vm532, %v1313, 4048220490
    %v1354 = vsel %vm532, %v1314, 4048220490
    %v1355 = vsel %vm532, %v1315, 4048220490
    %v1356 = vsel %vm532, %v1316, 4048220490
    %v1357 = vsel %vm532, %v1317, 4048220490
    %v1358 = vsel %vm533, %v1310, 4048220490
    %v1359 = vsel %vm533, %v1311, 4048220490
    %v1360 = vsel %vm533, %v1312, 4048220490
    %v1361 = vsel %vm533, %v1313, 4048220490
    %v1362 = vsel %vm533, %v1314, 4048220490
    %v1363 = vsel %vm533, %v1315, 4048220490
    %v1364 = vsel %vm533, %v1316, 4048220490
    %v1365 = vsel %vm533, %v1317, 4048220490
    %v1366 = vsel %vm534, %v1310, 4048220490
    %v1367 = vsel %vm534, %v1311, 4048220490
    %v1368 = vsel %vm534, %v1312, 4048220490
    %v1369 = vsel %vm534, %v1313, 4048220490
    %v1370 = vsel %vm534, %v1314, 4048220490
    %v1371 = vsel %vm534, %v1315, 4048220490
    %v1372 = vsel %vm534, %v1316, 4048220490
    %v1373 = vsel %vm534, %v1317, 4048220490
    %v1374 = vsel %vm535, %v1310, 4048220490
    %v1375 = vsel %vm535, %v1311, 4048220490
    %v1376 = vsel %vm535, %v1312, 4048220490
    %v1377 = vsel %vm535, %v1313, 4048220490
    %v1378 = vsel %vm535, %v1314, 4048220490
    %v1379 = vsel %vm535, %v1315, 4048220490
    %v1380 = vsel %vm535, %v1316, 4048220490
    %v1381 = vsel %vm535, %v1317, 4048220490
    %v1382 = vsel %vm536, %v1310, 4048220490
    %v1383 = vsel %vm536, %v1311, 4048220490
    %v1384 = vsel %vm536, %v1312, 4048220490
    %v1385 = vsel %vm536, %v1313, 4048220490
    %v1386 = vsel %vm536, %v1314, 4048220490
    %v1387 = vsel %vm536, %v1315, 4048220490
    %v1388 = vsel %vm536, %v1316, 4048220490
    %v1389 = vsel %vm536, %v1317, 4048220490
    %v1390 = vsel %vm537, %v1310, 4048220490
    %v1391 = vsel %vm537, %v1311, 4048220490
    %v1392 = vsel %vm537, %v1312, 4048220490
    %v1393 = vsel %vm537, %v1313, 4048220490
    %v1394 = vsel %vm537, %v1314, 4048220490
    %v1395 = vsel %vm537, %v1315, 4048220490
    %v1396 = vsel %vm537, %v1316, 4048220490
    %v1397 = vsel %vm537, %v1317, 4048220490
    %v1398 = vsel %vm538, %v1310, 4048220490
    %v1399 = vsel %vm538, %v1311, 4048220490
    %v1400 = vsel %vm538, %v1312, 4048220490
    %v1401 = vsel %vm538, %v1313, 4048220490
    %v1402 = vsel %vm538, %v1314, 4048220490
    %v1403 = vsel %vm538, %v1315, 4048220490
    %v1404 = vsel %vm538, %v1316, 4048220490
    %v1405 = vsel %vm538, %v1317, 4048220490
    %v1406 = vsel %vm539, %v1310, 4048220490
    %v1407 = vsel %vm539, %v1311, 4048220490
    %v1408 = vsel %vm539, %v1312, 4048220490
    %v1409 = vsel %vm539, %v1313, 4048220490
    %v1410 = vsel %vm539, %v1314, 4048220490
    %v1411 = vsel %vm539, %v1315, 4048220490
    %v1412 = vsel %vm539, %v1316, 4048220490
    %v1413 = vsel %vm539, %v1317, 4048220490
    %v1414 = vsel %vm540, %v1310, 4048220490
    %v1415 = vsel %vm540, %v1311, 4048220490
    %v1416 = vsel %vm540, %v1312, 4048220490
    %v1417 = vsel %vm540, %v1313, 4048220490
    %v1418 = vsel %vm540, %v1314, 4048220490
    %v1419 = vsel %vm540, %v1315, 4048220490
    %v1420 = vsel %vm540, %v1316, 4048220490
    %v1421 = vsel %vm540, %v1317, 4048220490
    %v1422 = vsel %vm541, %v1310, 4048220490
    %v1423 = vsel %vm541, %v1311, 4048220490
    %v1424 = vsel %vm541, %v1312, 4048220490
    %v1425 = vsel %vm541, %v1313, 4048220490
    %v1426 = vsel %vm541, %v1314, 4048220490
    %v1427 = vsel %vm541, %v1315, 4048220490
    %v1428 = vsel %vm541, %v1316, 4048220490
    %v1429 = vsel %vm541, %v1317, 4048220490
    %v1430 = vsel %vm542, %v1310, 4048220490
    %v1431 = vsel %vm542, %v1311, 4048220490
    %v1432 = vsel %vm542, %v1312, 4048220490
    %v1433 = vsel %vm542, %v1313, 4048220490
    %v1434 = vsel %vm542, %v1314, 4048220490
    %v1435 = vsel %vm542, %v1315, 4048220490
    %v1436 = vsel %vm542, %v1316, 4048220490
    %v1437 = vsel %vm542, %v1317, 4048220490
    %v1438 = vsel %vm543, %v1310, 4048220490
    %v1439 = vsel %vm543, %v1311, 4048220490
    %v1440 = vsel %vm543, %v1312, 4048220490
    %v1441 = vsel %vm543, %v1313, 4048220490
    %v1442 = vsel %vm543, %v1314, 4048220490
    %v1443 = vsel %vm543, %v1315, 4048220490
    %v1444 = vsel %vm543, %v1316, 4048220490
    %v1445 = vsel %vm543, %v1317, 4048220490
    %v1446 = vunpack.c.l.bf16 %v1318
    %v1447 = vunpack.c.l.bf16 %v1319
    %v1448 = vunpack.c.l.bf16 %v1320
    %v1449 = vunpack.c.l.bf16 %v1321
    %v1450 = vunpack.c.l.bf16 %v1322
    %v1451 = vunpack.c.l.bf16 %v1323
    %v1452 = vunpack.c.l.bf16 %v1324
    %v1453 = vunpack.c.l.bf16 %v1325
    %v1454 = vunpack.c.l.bf16 %v1326
    %v1455 = vunpack.c.l.bf16 %v1327
    %v1456 = vunpack.c.l.bf16 %v1328
    %v1457 = vunpack.c.l.bf16 %v1329
    %v1458 = vunpack.c.l.bf16 %v1330
    %v1459 = vunpack.c.l.bf16 %v1331
    %v1460 = vunpack.c.l.bf16 %v1332
    %v1461 = vunpack.c.l.bf16 %v1333
    %v1462 = vunpack.c.l.bf16 %v1334
    %v1463 = vunpack.c.l.bf16 %v1335
    %v1464 = vunpack.c.l.bf16 %v1336
    %v1465 = vunpack.c.l.bf16 %v1337
    %v1466 = vunpack.c.l.bf16 %v1338
    %v1467 = vunpack.c.l.bf16 %v1339
    %v1468 = vunpack.c.l.bf16 %v1340
    %v1469 = vunpack.c.l.bf16 %v1341
    %v1470 = vunpack.c.l.bf16 %v1342
    %v1471 = vunpack.c.l.bf16 %v1343
    %v1472 = vunpack.c.l.bf16 %v1344
    %v1473 = vunpack.c.l.bf16 %v1345
    %v1474 = vunpack.c.l.bf16 %v1346
    %v1475 = vunpack.c.l.bf16 %v1347
    %v1476 = vunpack.c.l.bf16 %v1348
    %v1477 = vunpack.c.l.bf16 %v1349
    %v1478 = vunpack.c.l.bf16 %v1350
    %v1479 = vunpack.c.l.bf16 %v1351
    %v1480 = vunpack.c.l.bf16 %v1352
    %v1481 = vunpack.c.l.bf16 %v1353
    %v1482 = vunpack.c.l.bf16 %v1354
    %v1483 = vunpack.c.l.bf16 %v1355
    %v1484 = vunpack.c.l.bf16 %v1356
    %v1485 = vunpack.c.l.bf16 %v1357
    %v1486 = vunpack.c.l.bf16 %v1358
    %v1487 = vunpack.c.l.bf16 %v1359
    %v1488 = vunpack.c.l.bf16 %v1360
    %v1489 = vunpack.c.l.bf16 %v1361
    %v1490 = vunpack.c.l.bf16 %v1362
    %v1491 = vunpack.c.l.bf16 %v1363
    %v1492 = vunpack.c.l.bf16 %v1364
    %v1493 = vunpack.c.l.bf16 %v1365
    %v1494 = vunpack.c.l.bf16 %v1366
    %v1495 = vunpack.c.l.bf16 %v1367
    %v1496 = vunpack.c.l.bf16 %v1368
    %v1497 = vunpack.c.l.bf16 %v1369
    %v1498 = vunpack.c.l.bf16 %v1370
    %v1499 = vunpack.c.l.bf16 %v1371
    %v1500 = vunpack.c.l.bf16 %v1372
    %v1501 = vunpack.c.l.bf16 %v1373
    %v1502 = vunpack.c.l.bf16 %v1374
    %v1503 = vunpack.c.l.bf16 %v1375
    %v1504 = vunpack.c.l.bf16 %v1376
    %v1505 = vunpack.c.l.bf16 %v1377
    %v1506 = vunpack.c.l.bf16 %v1378
    %v1507 = vunpack.c.l.bf16 %v1379
    %v1508 = vunpack.c.l.bf16 %v1380
    %v1509 = vunpack.c.l.bf16 %v1381
    %v1510 = vunpack.c.l.bf16 %v1382
    %v1511 = vunpack.c.l.bf16 %v1383
    %v1512 = vunpack.c.l.bf16 %v1384
    %v1513 = vunpack.c.l.bf16 %v1385
    %v1514 = vunpack.c.l.bf16 %v1386
    %v1515 = vunpack.c.l.bf16 %v1387
    %v1516 = vunpack.c.l.bf16 %v1388
    %v1517 = vunpack.c.l.bf16 %v1389
    %v1518 = vunpack.c.l.bf16 %v1390
    %v1519 = vunpack.c.l.bf16 %v1391
    %v1520 = vunpack.c.l.bf16 %v1392
    %v1521 = vunpack.c.l.bf16 %v1393
    %v1522 = vunpack.c.l.bf16 %v1394
    %v1523 = vunpack.c.l.bf16 %v1395
    %v1524 = vunpack.c.l.bf16 %v1396
    %v1525 = vunpack.c.l.bf16 %v1397
    %v1526 = vunpack.c.l.bf16 %v1398
    %v1527 = vunpack.c.l.bf16 %v1399
    %v1528 = vunpack.c.l.bf16 %v1400
    %v1529 = vunpack.c.l.bf16 %v1401
    %v1530 = vunpack.c.l.bf16 %v1402
    %v1531 = vunpack.c.l.bf16 %v1403
    %v1532 = vunpack.c.l.bf16 %v1404
    %v1533 = vunpack.c.l.bf16 %v1405
    %v1534 = vunpack.c.l.bf16 %v1406
    %v1535 = vunpack.c.l.bf16 %v1407
    %v1536 = vunpack.c.l.bf16 %v1408
    %v1537 = vunpack.c.l.bf16 %v1409
    %v1538 = vunpack.c.l.bf16 %v1410
    %v1539 = vunpack.c.l.bf16 %v1411
    %v1540 = vunpack.c.l.bf16 %v1412
    %v1541 = vunpack.c.l.bf16 %v1413
    %v1542 = vunpack.c.l.bf16 %v1414
    %v1543 = vunpack.c.l.bf16 %v1415
    %v1544 = vunpack.c.l.bf16 %v1416
    %v1545 = vunpack.c.l.bf16 %v1417
    %v1546 = vunpack.c.l.bf16 %v1418
    %v1547 = vunpack.c.l.bf16 %v1419
    %v1548 = vunpack.c.l.bf16 %v1420
    %v1549 = vunpack.c.l.bf16 %v1421
    %v1550 = vunpack.c.l.bf16 %v1422
    %v1551 = vunpack.c.l.bf16 %v1423
    %v1552 = vunpack.c.l.bf16 %v1424
    %v1553 = vunpack.c.l.bf16 %v1425
    %v1554 = vunpack.c.l.bf16 %v1426
    %v1555 = vunpack.c.l.bf16 %v1427
    %v1556 = vunpack.c.l.bf16 %v1428
    %v1557 = vunpack.c.l.bf16 %v1429
    %v1558 = vunpack.c.l.bf16 %v1430
    %v1559 = vunpack.c.l.bf16 %v1431
    %v1560 = vunpack.c.l.bf16 %v1432
    %v1561 = vunpack.c.l.bf16 %v1433
    %v1562 = vunpack.c.l.bf16 %v1434
    %v1563 = vunpack.c.l.bf16 %v1435
    %v1564 = vunpack.c.l.bf16 %v1436
    %v1565 = vunpack.c.l.bf16 %v1437
    %v1566 = vunpack.c.l.bf16 %v1438
    %v1567 = vunpack.c.l.bf16 %v1439
    %v1568 = vunpack.c.l.bf16 %v1440
    %v1569 = vunpack.c.l.bf16 %v1441
    %v1570 = vunpack.c.l.bf16 %v1442
    %v1571 = vunpack.c.l.bf16 %v1443
    %v1572 = vunpack.c.l.bf16 %v1444
    %v1573 = vunpack.c.l.bf16 %v1445
    %v1574 = vsel %vm672, %v1446, -inf
    %1575 = vmax.xlane.f32.xlu0 %v1574
    %v1576 = vpop.xlane.xlu0 %1575
    %v1577 = vsel %vm672, %v1447, -inf
    %1578 = vmax.xlane.f32.xlu0 %v1577
    %v1579 = vpop.xlane.xlu0 %1578
    %v1580 = vsel %vm672, %v1448, -inf
    %1581 = vmax.xlane.f32.xlu0 %v1580
    %v1582 = vpop.xlane.xlu0 %1581
    %v1583 = vsel %vm672, %v1449, -inf
    %1584 = vmax.xlane.f32.xlu0 %v1583
    %v1585 = vpop.xlane.xlu0 %1584
    %v1586 = vsel %vm672, %v1450, -inf
    %1587 = vmax.xlane.f32.xlu0 %v1586
    %v1588 = vpop.xlane.xlu0 %1587
    %v1589 = vsel %vm672, %v1451, -inf
    %1590 = vmax.xlane.f32.xlu0 %v1589
    %v1591 = vpop.xlane.xlu0 %1590
    %v1592 = vsel %vm672, %v1452, -inf
    %1593 = vmax.xlane.f32.xlu0 %v1592
    %v1594 = vpop.xlane.xlu0 %1593
    %v1595 = vsel %vm672, %v1453, -inf
    %1596 = vmax.xlane.f32.xlu0 %v1595
    %v1597 = vpop.xlane.xlu0 %1596
    %v1598 = vsel %vm672, %v1454, -inf
    %1599 = vmax.xlane.f32.xlu0 %v1598
    %v1600 = vpop.xlane.xlu0 %1599
    %v1601 = vsel %vm672, %v1455, -inf
    %1602 = vmax.xlane.f32.xlu0 %v1601
    %v1603 = vpop.xlane.xlu0 %1602
    %v1604 = vsel %vm672, %v1456, -inf
    %1605 = vmax.xlane.f32.xlu0 %v1604
    %v1606 = vpop.xlane.xlu0 %1605
    %v1607 = vsel %vm672, %v1457, -inf
    %1608 = vmax.xlane.f32.xlu0 %v1607
    %v1609 = vpop.xlane.xlu0 %1608
    %v1610 = vsel %vm672, %v1458, -inf
    %1611 = vmax.xlane.f32.xlu0 %v1610
    %v1612 = vpop.xlane.xlu0 %1611
    %v1613 = vsel %vm672, %v1459, -inf
    %1614 = vmax.xlane.f32.xlu0 %v1613
    %v1615 = vpop.xlane.xlu0 %1614
    %v1616 = vsel %vm672, %v1460, -inf
    %1617 = vmax.xlane.f32.xlu0 %v1616
    %v1618 = vpop.xlane.xlu0 %1617
    %v1619 = vsel %vm672, %v1461, -inf
    %1620 = vmax.xlane.f32.xlu0 %v1619
    %v1621 = vpop.xlane.xlu0 %1620
    %v1622 = vsel %vm672, %v1462, -inf
    %1623 = vmax.xlane.f32.xlu0 %v1622
    %v1624 = vpop.xlane.xlu0 %1623
    %v1625 = vsel %vm672, %v1463, -inf
    %1626 = vmax.xlane.f32.xlu0 %v1625
    %v1627 = vpop.xlane.xlu0 %1626
    %v1628 = vsel %vm672, %v1464, -inf
    %1629 = vmax.xlane.f32.xlu0 %v1628
    %v1630 = vpop.xlane.xlu0 %1629
    %v1631 = vsel %vm672, %v1465, -inf
    %1632 = vmax.xlane.f32.xlu0 %v1631
    %v1633 = vpop.xlane.xlu0 %1632
    %v1634 = vsel %vm672, %v1466, -inf
    %1635 = vmax.xlane.f32.xlu0 %v1634
    %v1636 = vpop.xlane.xlu0 %1635
    %v1637 = vsel %vm672, %v1467, -inf
    %1638 = vmax.xlane.f32.xlu0 %v1637
    %v1639 = vpop.xlane.xlu0 %1638
    %v1640 = vsel %vm672, %v1468, -inf
    %1641 = vmax.xlane.f32.xlu0 %v1640
    %v1642 = vpop.xlane.xlu0 %1641
    %v1643 = vsel %vm672, %v1469, -inf
    %1644 = vmax.xlane.f32.xlu0 %v1643
    %v1645 = vpop.xlane.xlu0 %1644
    %v1646 = vsel %vm672, %v1470, -inf
    %1647 = vmax.xlane.f32.xlu0 %v1646
    %v1648 = vpop.xlane.xlu0 %1647
    %v1649 = vsel %vm672, %v1471, -inf
    %1650 = vmax.xlane.f32.xlu0 %v1649
    %v1651 = vpop.xlane.xlu0 %1650
    %v1652 = vsel %vm672, %v1472, -inf
    %1653 = vmax.xlane.f32.xlu0 %v1652
    %v1654 = vpop.xlane.xlu0 %1653
    %v1655 = vsel %vm672, %v1473, -inf
    %1656 = vmax.xlane.f32.xlu0 %v1655
    %v1657 = vpop.xlane.xlu0 %1656
    %v1658 = vsel %vm672, %v1474, -inf
    %1659 = vmax.xlane.f32.xlu0 %v1658
    %v1660 = vpop.xlane.xlu0 %1659
    %v1661 = vsel %vm672, %v1475, -inf
    %1662 = vmax.xlane.f32.xlu0 %v1661
    %v1663 = vpop.xlane.xlu0 %1662
    %v1664 = vsel %vm672, %v1476, -inf
    %1665 = vmax.xlane.f32.xlu0 %v1664
    %v1666 = vpop.xlane.xlu0 %1665
    %v1667 = vsel %vm672, %v1477, -inf
    %1668 = vmax.xlane.f32.xlu0 %v1667
    %v1669 = vpop.xlane.xlu0 %1668
    %v1670 = vsel %vm672, %v1478, -inf
    %1671 = vmax.xlane.f32.xlu0 %v1670
    %v1672 = vpop.xlane.xlu0 %1671
    %v1673 = vsel %vm672, %v1479, -inf
    %1674 = vmax.xlane.f32.xlu0 %v1673
    %v1675 = vpop.xlane.xlu0 %1674
    %v1676 = vsel %vm672, %v1480, -inf
    %1677 = vmax.xlane.f32.xlu0 %v1676
    %v1678 = vpop.xlane.xlu0 %1677
    %v1679 = vsel %vm672, %v1481, -inf
    %1680 = vmax.xlane.f32.xlu0 %v1679
    %v1681 = vpop.xlane.xlu0 %1680
    %v1682 = vsel %vm672, %v1482, -inf
    %1683 = vmax.xlane.f32.xlu0 %v1682
    %v1684 = vpop.xlane.xlu0 %1683
    %v1685 = vsel %vm672, %v1483, -inf
    %1686 = vmax.xlane.f32.xlu0 %v1685
    %v1687 = vpop.xlane.xlu0 %1686
    %v1688 = vsel %vm672, %v1484, -inf
    %1689 = vmax.xlane.f32.xlu0 %v1688
    %v1690 = vpop.xlane.xlu0 %1689
    %v1691 = vsel %vm672, %v1485, -inf
    %1692 = vmax.xlane.f32.xlu0 %v1691
    %v1693 = vpop.xlane.xlu0 %1692
    %v1694 = vsel %vm672, %v1486, -inf
    %1695 = vmax.xlane.f32.xlu0 %v1694
    %v1696 = vpop.xlane.xlu0 %1695
    %v1697 = vsel %vm672, %v1487, -inf
    %1698 = vmax.xlane.f32.xlu0 %v1697
    %v1699 = vpop.xlane.xlu0 %1698
    %v1700 = vsel %vm672, %v1488, -inf
    %1701 = vmax.xlane.f32.xlu0 %v1700
    %v1702 = vpop.xlane.xlu0 %1701
    %v1703 = vsel %vm672, %v1489, -inf
    %1704 = vmax.xlane.f32.xlu0 %v1703
    %v1705 = vpop.xlane.xlu0 %1704
    %v1706 = vsel %vm672, %v1490, -inf
    %1707 = vmax.xlane.f32.xlu0 %v1706
    %v1708 = vpop.xlane.xlu0 %1707
    %v1709 = vsel %vm672, %v1491, -inf
    %1710 = vmax.xlane.f32.xlu0 %v1709
    %v1711 = vpop.xlane.xlu0 %1710
    %v1712 = vsel %vm672, %v1492, -inf
    %1713 = vmax.xlane.f32.xlu0 %v1712
    %v1714 = vpop.xlane.xlu0 %1713
    %v1715 = vsel %vm672, %v1493, -inf
    %1716 = vmax.xlane.f32.xlu0 %v1715
    %v1717 = vpop.xlane.xlu0 %1716
    %v1718 = vsel %vm672, %v1494, -inf
    %1719 = vmax.xlane.f32.xlu0 %v1718
    %v1720 = vpop.xlane.xlu0 %1719
    %v1721 = vsel %vm672, %v1495, -inf
    %1722 = vmax.xlane.f32.xlu0 %v1721
    %v1723 = vpop.xlane.xlu0 %1722
    %v1724 = vsel %vm672, %v1496, -inf
    %1725 = vmax.xlane.f32.xlu0 %v1724
    %v1726 = vpop.xlane.xlu0 %1725
    %v1727 = vsel %vm672, %v1497, -inf
    %1728 = vmax.xlane.f32.xlu0 %v1727
    %v1729 = vpop.xlane.xlu0 %1728
    %v1730 = vsel %vm672, %v1498, -inf
    %1731 = vmax.xlane.f32.xlu0 %v1730
    %v1732 = vpop.xlane.xlu0 %1731
    %v1733 = vsel %vm672, %v1499, -inf
    %1734 = vmax.xlane.f32.xlu0 %v1733
    %v1735 = vpop.xlane.xlu0 %1734
    %v1736 = vsel %vm672, %v1500, -inf
    %1737 = vmax.xlane.f32.xlu0 %v1736
    %v1738 = vpop.xlane.xlu0 %1737
    %v1739 = vsel %vm672, %v1501, -inf
    %1740 = vmax.xlane.f32.xlu0 %v1739
    %v1741 = vpop.xlane.xlu0 %1740
    %v1742 = vsel %vm672, %v1502, -inf
    %1743 = vmax.xlane.f32.xlu0 %v1742
    %v1744 = vpop.xlane.xlu0 %1743
    %v1745 = vsel %vm672, %v1503, -inf
    %1746 = vmax.xlane.f32.xlu0 %v1745
    %v1747 = vpop.xlane.xlu0 %1746
    %v1748 = vsel %vm672, %v1504, -inf
    %1749 = vmax.xlane.f32.xlu0 %v1748
    %v1750 = vpop.xlane.xlu0 %1749
    %v1751 = vsel %vm672, %v1505, -inf
    %1752 = vmax.xlane.f32.xlu0 %v1751
    %v1753 = vpop.xlane.xlu0 %1752
    %v1754 = vsel %vm672, %v1506, -inf
    %1755 = vmax.xlane.f32.xlu0 %v1754
    %v1756 = vpop.xlane.xlu0 %1755
    %v1757 = vsel %vm672, %v1507, -inf
    %1758 = vmax.xlane.f32.xlu0 %v1757
    %v1759 = vpop.xlane.xlu0 %1758
    %v1760 = vsel %vm672, %v1508, -inf
    %1761 = vmax.xlane.f32.xlu0 %v1760
    %v1762 = vpop.xlane.xlu0 %1761
    %v1763 = vsel %vm672, %v1509, -inf
    %1764 = vmax.xlane.f32.xlu0 %v1763
    %v1765 = vpop.xlane.xlu0 %1764
    %v1766 = vsel %vm672, %v1510, -inf
    %1767 = vmax.xlane.f32.xlu0 %v1766
    %v1768 = vpop.xlane.xlu0 %1767
    %v1769 = vsel %vm672, %v1511, -inf
    %1770 = vmax.xlane.f32.xlu0 %v1769
    %v1771 = vpop.xlane.xlu0 %1770
    %v1772 = vsel %vm672, %v1512, -inf
    %1773 = vmax.xlane.f32.xlu0 %v1772
    %v1774 = vpop.xlane.xlu0 %1773
    %v1775 = vsel %vm672, %v1513, -inf
    %1776 = vmax.xlane.f32.xlu0 %v1775
    %v1777 = vpop.xlane.xlu0 %1776
    %v1778 = vsel %vm672, %v1514, -inf
    %1779 = vmax.xlane.f32.xlu0 %v1778
    %v1780 = vpop.xlane.xlu0 %1779
    %v1781 = vsel %vm672, %v1515, -inf
    %1782 = vmax.xlane.f32.xlu0 %v1781
    %v1783 = vpop.xlane.xlu0 %1782
    %v1784 = vsel %vm672, %v1516, -inf
    %1785 = vmax.xlane.f32.xlu0 %v1784
    %v1786 = vpop.xlane.xlu0 %1785
    %v1787 = vsel %vm672, %v1517, -inf
    %1788 = vmax.xlane.f32.xlu0 %v1787
    %v1789 = vpop.xlane.xlu0 %1788
    %v1790 = vsel %vm672, %v1518, -inf
    %1791 = vmax.xlane.f32.xlu0 %v1790
    %v1792 = vpop.xlane.xlu0 %1791
    %v1793 = vsel %vm672, %v1519, -inf
    %1794 = vmax.xlane.f32.xlu0 %v1793
    %v1795 = vpop.xlane.xlu0 %1794
    %v1796 = vsel %vm672, %v1520, -inf
    %1797 = vmax.xlane.f32.xlu0 %v1796
    %v1798 = vpop.xlane.xlu0 %1797
    %v1799 = vsel %vm672, %v1521, -inf
    %1800 = vmax.xlane.f32.xlu0 %v1799
    %v1801 = vpop.xlane.xlu0 %1800
    %v1802 = vsel %vm672, %v1522, -inf
    %1803 = vmax.xlane.f32.xlu0 %v1802
    %v1804 = vpop.xlane.xlu0 %1803
    %v1805 = vsel %vm672, %v1523, -inf
    %1806 = vmax.xlane.f32.xlu0 %v1805
    %v1807 = vpop.xlane.xlu0 %1806
    %v1808 = vsel %vm672, %v1524, -inf
    %1809 = vmax.xlane.f32.xlu0 %v1808
    %v1810 = vpop.xlane.xlu0 %1809
    %v1811 = vsel %vm672, %v1525, -inf
    %1812 = vmax.xlane.f32.xlu0 %v1811
    %v1813 = vpop.xlane.xlu0 %1812
    %v1814 = vsel %vm672, %v1526, -inf
    %1815 = vmax.xlane.f32.xlu0 %v1814
    %v1816 = vpop.xlane.xlu0 %1815
    %v1817 = vsel %vm672, %v1527, -inf
    %1818 = vmax.xlane.f32.xlu0 %v1817
    %v1819 = vpop.xlane.xlu0 %1818
    %v1820 = vsel %vm672, %v1528, -inf
    %1821 = vmax.xlane.f32.xlu0 %v1820
    %v1822 = vpop.xlane.xlu0 %1821
    %v1823 = vsel %vm672, %v1529, -inf
    %1824 = vmax.xlane.f32.xlu0 %v1823
    %v1825 = vpop.xlane.xlu0 %1824
    %v1826 = vsel %vm672, %v1530, -inf
    %1827 = vmax.xlane.f32.xlu0 %v1826
    %v1828 = vpop.xlane.xlu0 %1827
    %v1829 = vsel %vm672, %v1531, -inf
    %1830 = vmax.xlane.f32.xlu0 %v1829
    %v1831 = vpop.xlane.xlu0 %1830
    %v1832 = vsel %vm672, %v1532, -inf
    %1833 = vmax.xlane.f32.xlu0 %v1832
    %v1834 = vpop.xlane.xlu0 %1833
    %v1835 = vsel %vm672, %v1533, -inf
    %1836 = vmax.xlane.f32.xlu0 %v1835
    %v1837 = vpop.xlane.xlu0 %1836
    %v1838 = vsel %vm672, %v1534, -inf
    %1839 = vmax.xlane.f32.xlu0 %v1838
    %v1840 = vpop.xlane.xlu0 %1839
    %v1841 = vsel %vm672, %v1535, -inf
    %1842 = vmax.xlane.f32.xlu0 %v1841
    %v1843 = vpop.xlane.xlu0 %1842
    %v1844 = vsel %vm672, %v1536, -inf
    %1845 = vmax.xlane.f32.xlu0 %v1844
    %v1846 = vpop.xlane.xlu0 %1845
    %v1847 = vsel %vm672, %v1537, -inf
    %1848 = vmax.xlane.f32.xlu0 %v1847
    %v1849 = vpop.xlane.xlu0 %1848
    %v1850 = vsel %vm672, %v1538, -inf
    %1851 = vmax.xlane.f32.xlu0 %v1850
    %v1852 = vpop.xlane.xlu0 %1851
    %v1853 = vsel %vm672, %v1539, -inf
    %1854 = vmax.xlane.f32.xlu0 %v1853
    %v1855 = vpop.xlane.xlu0 %1854
    %v1856 = vsel %vm672, %v1540, -inf
    %1857 = vmax.xlane.f32.xlu0 %v1856
    %v1858 = vpop.xlane.xlu0 %1857
    %v1859 = vsel %vm672, %v1541, -inf
    %1860 = vmax.xlane.f32.xlu0 %v1859
    %v1861 = vpop.xlane.xlu0 %1860
    %v1862 = vsel %vm672, %v1542, -inf
    %1863 = vmax.xlane.f32.xlu0 %v1862
    %v1864 = vpop.xlane.xlu0 %1863
    %v1865 = vsel %vm672, %v1543, -inf
    %1866 = vmax.xlane.f32.xlu0 %v1865
    %v1867 = vpop.xlane.xlu0 %1866
    %v1868 = vsel %vm672, %v1544, -inf
    %1869 = vmax.xlane.f32.xlu0 %v1868
    %v1870 = vpop.xlane.xlu0 %1869
    %v1871 = vsel %vm672, %v1545, -inf
    %1872 = vmax.xlane.f32.xlu0 %v1871
    %v1873 = vpop.xlane.xlu0 %1872
    %v1874 = vsel %vm672, %v1546, -inf
    %1875 = vmax.xlane.f32.xlu0 %v1874
    %v1876 = vpop.xlane.xlu0 %1875
    %v1877 = vsel %vm672, %v1547, -inf
    %1878 = vmax.xlane.f32.xlu0 %v1877
    %v1879 = vpop.xlane.xlu0 %1878
    %v1880 = vsel %vm672, %v1548, -inf
    %1881 = vmax.xlane.f32.xlu0 %v1880
    %v1882 = vpop.xlane.xlu0 %1881
    %v1883 = vsel %vm672, %v1549, -inf
    %1884 = vmax.xlane.f32.xlu0 %v1883
    %v1885 = vpop.xlane.xlu0 %1884
    %v1886 = vsel %vm672, %v1550, -inf
    %1887 = vmax.xlane.f32.xlu0 %v1886
    %v1888 = vpop.xlane.xlu0 %1887
    %v1889 = vsel %vm672, %v1551, -inf
    %1890 = vmax.xlane.f32.xlu0 %v1889
    %v1891 = vpop.xlane.xlu0 %1890
    %v1892 = vsel %vm672, %v1552, -inf
    %1893 = vmax.xlane.f32.xlu0 %v1892
    %v1894 = vpop.xlane.xlu0 %1893
    %v1895 = vsel %vm672, %v1553, -inf
    %1896 = vmax.xlane.f32.xlu0 %v1895
    %v1897 = vpop.xlane.xlu0 %1896
    %v1898 = vsel %vm672, %v1554, -inf
    %1899 = vmax.xlane.f32.xlu0 %v1898
    %v1900 = vpop.xlane.xlu0 %1899
    %v1901 = vsel %vm672, %v1555, -inf
    %1902 = vmax.xlane.f32.xlu0 %v1901
    %v1903 = vpop.xlane.xlu0 %1902
    %v1904 = vsel %vm672, %v1556, -inf
    %1905 = vmax.xlane.f32.xlu0 %v1904
    %v1906 = vpop.xlane.xlu0 %1905
    %v1907 = vsel %vm672, %v1557, -inf
    %1908 = vmax.xlane.f32.xlu0 %v1907
    %v1909 = vpop.xlane.xlu0 %1908
    %v1910 = vsel %vm672, %v1558, -inf
    %1911 = vmax.xlane.f32.xlu0 %v1910
    %v1912 = vpop.xlane.xlu0 %1911
    %v1913 = vsel %vm672, %v1559, -inf
    %1914 = vmax.xlane.f32.xlu0 %v1913
    %v1915 = vpop.xlane.xlu0 %1914
    %v1916 = vsel %vm672, %v1560, -inf
    %1917 = vmax.xlane.f32.xlu0 %v1916
    %v1918 = vpop.xlane.xlu0 %1917
    %v1919 = vsel %vm672, %v1561, -inf
    %1920 = vmax.xlane.f32.xlu0 %v1919
    %v1921 = vpop.xlane.xlu0 %1920
    %v1922 = vsel %vm672, %v1562, -inf
    %1923 = vmax.xlane.f32.xlu0 %v1922
    %v1924 = vpop.xlane.xlu0 %1923
    %v1925 = vsel %vm672, %v1563, -inf
    %1926 = vmax.xlane.f32.xlu0 %v1925
    %v1927 = vpop.xlane.xlu0 %1926
    %v1928 = vsel %vm672, %v1564, -inf
    %1929 = vmax.xlane.f32.xlu0 %v1928
    %v1930 = vpop.xlane.xlu0 %1929
    %v1931 = vsel %vm672, %v1565, -inf
    %1932 = vmax.xlane.f32.xlu0 %v1931
    %v1933 = vpop.xlane.xlu0 %1932
    %v1934 = vsel %vm672, %v1566, -inf
    %1935 = vmax.xlane.f32.xlu0 %v1934
    %v1936 = vpop.xlane.xlu0 %1935
    %v1937 = vsel %vm672, %v1567, -inf
    %1938 = vmax.xlane.f32.xlu0 %v1937
    %v1939 = vpop.xlane.xlu0 %1938
    %v1940 = vsel %vm672, %v1568, -inf
    %1941 = vmax.xlane.f32.xlu0 %v1940
    %v1942 = vpop.xlane.xlu0 %1941
    %v1943 = vsel %vm672, %v1569, -inf
    %1944 = vmax.xlane.f32.xlu0 %v1943
    %v1945 = vpop.xlane.xlu0 %1944
    %v1946 = vsel %vm672, %v1570, -inf
    %1947 = vmax.xlane.f32.xlu0 %v1946
    %v1948 = vpop.xlane.xlu0 %1947
    %v1949 = vsel %vm672, %v1571, -inf
    %1950 = vmax.xlane.f32.xlu0 %v1949
    %v1951 = vpop.xlane.xlu0 %1950
    %v1952 = vsel %vm672, %v1572, -inf
    %1953 = vmax.xlane.f32.xlu0 %v1952
    %v1954 = vpop.xlane.xlu0 %1953
    %v1955 = vsel %vm672, %v1573, -inf
    %1956 = vmax.xlane.f32.xlu0 %v1955
    %v1957 = vpop.xlane.xlu0 %1956
    %v1958 = vpack.c.bf16 %v1576, %v1576
    %v1959 = vpack.c.bf16 %v1579, %v1579
    %v1960 = vpack.c.bf16 %v1582, %v1582
    %v1961 = vpack.c.bf16 %v1585, %v1585
    %v1962 = vpack.c.bf16 %v1588, %v1588
    %v1963 = vpack.c.bf16 %v1591, %v1591
    %v1964 = vpack.c.bf16 %v1594, %v1594
    %v1965 = vpack.c.bf16 %v1597, %v1597
    %v1966 = vpack.c.bf16 %v1600, %v1600
    %v1967 = vpack.c.bf16 %v1603, %v1603
    %v1968 = vpack.c.bf16 %v1606, %v1606
    %v1969 = vpack.c.bf16 %v1609, %v1609
    %v1970 = vpack.c.bf16 %v1612, %v1612
    %v1971 = vpack.c.bf16 %v1615, %v1615
    %v1972 = vpack.c.bf16 %v1618, %v1618
    %v1973 = vpack.c.bf16 %v1621, %v1621
    %v1974 = vpack.c.bf16 %v1624, %v1624
    %v1975 = vpack.c.bf16 %v1627, %v1627
    %v1976 = vpack.c.bf16 %v1630, %v1630
    %v1977 = vpack.c.bf16 %v1633, %v1633
    %v1978 = vpack.c.bf16 %v1636, %v1636
    %v1979 = vpack.c.bf16 %v1639, %v1639
    %v1980 = vpack.c.bf16 %v1642, %v1642
    %v1981 = vpack.c.bf16 %v1645, %v1645
    %v1982 = vpack.c.bf16 %v1648, %v1648
    %v1983 = vpack.c.bf16 %v1651, %v1651
    %v1984 = vpack.c.bf16 %v1654, %v1654
    %v1985 = vpack.c.bf16 %v1657, %v1657
    %v1986 = vpack.c.bf16 %v1660, %v1660
    %v1987 = vpack.c.bf16 %v1663, %v1663
    %v1988 = vpack.c.bf16 %v1666, %v1666
    %v1989 = vpack.c.bf16 %v1669, %v1669
    %v1990 = vpack.c.bf16 %v1672, %v1672
    %v1991 = vpack.c.bf16 %v1675, %v1675
    %v1992 = vpack.c.bf16 %v1678, %v1678
    %v1993 = vpack.c.bf16 %v1681, %v1681
    %v1994 = vpack.c.bf16 %v1684, %v1684
    %v1995 = vpack.c.bf16 %v1687, %v1687
    %v1996 = vpack.c.bf16 %v1690, %v1690
    %v1997 = vpack.c.bf16 %v1693, %v1693
    %v1998 = vpack.c.bf16 %v1696, %v1696
    %v1999 = vpack.c.bf16 %v1699, %v1699
    %v2000 = vpack.c.bf16 %v1702, %v1702
    %v2001 = vpack.c.bf16 %v1705, %v1705
    %v2002 = vpack.c.bf16 %v1708, %v1708
    %v2003 = vpack.c.bf16 %v1711, %v1711
    %v2004 = vpack.c.bf16 %v1714, %v1714
    %v2005 = vpack.c.bf16 %v1717, %v1717
    %v2006 = vpack.c.bf16 %v1720, %v1720
    %v2007 = vpack.c.bf16 %v1723, %v1723
    %v2008 = vpack.c.bf16 %v1726, %v1726
    %v2009 = vpack.c.bf16 %v1729, %v1729
    %v2010 = vpack.c.bf16 %v1732, %v1732
    %v2011 = vpack.c.bf16 %v1735, %v1735
    %v2012 = vpack.c.bf16 %v1738, %v1738
    %v2013 = vpack.c.bf16 %v1741, %v1741
    %v2014 = vpack.c.bf16 %v1744, %v1744
    %v2015 = vpack.c.bf16 %v1747, %v1747
    %v2016 = vpack.c.bf16 %v1750, %v1750
    %v2017 = vpack.c.bf16 %v1753, %v1753
    %v2018 = vpack.c.bf16 %v1756, %v1756
    %v2019 = vpack.c.bf16 %v1759, %v1759
    %v2020 = vpack.c.bf16 %v1762, %v1762
    %v2021 = vpack.c.bf16 %v1765, %v1765
    %v2022 = vpack.c.bf16 %v1768, %v1768
    %v2023 = vpack.c.bf16 %v1771, %v1771
    %v2024 = vpack.c.bf16 %v1774, %v1774
    %v2025 = vpack.c.bf16 %v1777, %v1777
    %v2026 = vpack.c.bf16 %v1780, %v1780
    %v2027 = vpack.c.bf16 %v1783, %v1783
    %v2028 = vpack.c.bf16 %v1786, %v1786
    %v2029 = vpack.c.bf16 %v1789, %v1789
    %v2030 = vpack.c.bf16 %v1792, %v1792
    %v2031 = vpack.c.bf16 %v1795, %v1795
    %v2032 = vpack.c.bf16 %v1798, %v1798
    %v2033 = vpack.c.bf16 %v1801, %v1801
    %v2034 = vpack.c.bf16 %v1804, %v1804
    %v2035 = vpack.c.bf16 %v1807, %v1807
    %v2036 = vpack.c.bf16 %v1810, %v1810
    %v2037 = vpack.c.bf16 %v1813, %v1813
    %v2038 = vpack.c.bf16 %v1816, %v1816
    %v2039 = vpack.c.bf16 %v1819, %v1819
    %v2040 = vpack.c.bf16 %v1822, %v1822
    %v2041 = vpack.c.bf16 %v1825, %v1825
    %v2042 = vpack.c.bf16 %v1828, %v1828
    %v2043 = vpack.c.bf16 %v1831, %v1831
    %v2044 = vpack.c.bf16 %v1834, %v1834
    %v2045 = vpack.c.bf16 %v1837, %v1837
    %v2046 = vpack.c.bf16 %v1840, %v1840
    %v2047 = vpack.c.bf16 %v1843, %v1843
    %v2048 = vpack.c.bf16 %v1846, %v1846
    %v2049 = vpack.c.bf16 %v1849, %v1849
    %v2050 = vpack.c.bf16 %v1852, %v1852
    %v2051 = vpack.c.bf16 %v1855, %v1855
    %v2052 = vpack.c.bf16 %v1858, %v1858
    %v2053 = vpack.c.bf16 %v1861, %v1861
    %v2054 = vpack.c.bf16 %v1864, %v1864
    %v2055 = vpack.c.bf16 %v1867, %v1867
    %v2056 = vpack.c.bf16 %v1870, %v1870
    %v2057 = vpack.c.bf16 %v1873, %v1873
    %v2058 = vpack.c.bf16 %v1876, %v1876
    %v2059 = vpack.c.bf16 %v1879, %v1879
    %v2060 = vpack.c.bf16 %v1882, %v1882
    %v2061 = vpack.c.bf16 %v1885, %v1885
    %v2062 = vpack.c.bf16 %v1888, %v1888
    %v2063 = vpack.c.bf16 %v1891, %v1891
    %v2064 = vpack.c.bf16 %v1894, %v1894
    %v2065 = vpack.c.bf16 %v1897, %v1897
    %v2066 = vpack.c.bf16 %v1900, %v1900
    %v2067 = vpack.c.bf16 %v1903, %v1903
    %v2068 = vpack.c.bf16 %v1906, %v1906
    %v2069 = vpack.c.bf16 %v1909, %v1909
    %v2070 = vpack.c.bf16 %v1912, %v1912
    %v2071 = vpack.c.bf16 %v1915, %v1915
    %v2072 = vpack.c.bf16 %v1918, %v1918
    %v2073 = vpack.c.bf16 %v1921, %v1921
    %v2074 = vpack.c.bf16 %v1924, %v1924
    %v2075 = vpack.c.bf16 %v1927, %v1927
    %v2076 = vpack.c.bf16 %v1930, %v1930
    %v2077 = vpack.c.bf16 %v1933, %v1933
    %v2078 = vpack.c.bf16 %v1936, %v1936
    %v2079 = vpack.c.bf16 %v1939, %v1939
    %v2080 = vpack.c.bf16 %v1942, %v1942
    %v2081 = vpack.c.bf16 %v1945, %v1945
    %v2082 = vpack.c.bf16 %v1948, %v1948
    %v2083 = vpack.c.bf16 %v1951, %v1951
    %v2084 = vpack.c.bf16 %v1954, %v1954
    %v2085 = vpack.c.bf16 %v1957, %v1957
    %v2086 = vunpack.c.l.bf16 %v1958
    %v2087 = vunpack.c.l.bf16 %v1959
    %v2088 = vunpack.c.l.bf16 %v1960
    %v2089 = vunpack.c.l.bf16 %v1961
    %v2090 = vunpack.c.l.bf16 %v1962
    %v2091 = vunpack.c.l.bf16 %v1963
    %v2092 = vunpack.c.l.bf16 %v1964
    %v2093 = vunpack.c.l.bf16 %v1965
    %v2094 = vunpack.c.l.bf16 %v1966
    %v2095 = vunpack.c.l.bf16 %v1967
    %v2096 = vunpack.c.l.bf16 %v1968
    %v2097 = vunpack.c.l.bf16 %v1969
    %v2098 = vunpack.c.l.bf16 %v1970
    %v2099 = vunpack.c.l.bf16 %v1971
    %v2100 = vunpack.c.l.bf16 %v1972
    %v2101 = vunpack.c.l.bf16 %v1973
    %v2102 = vunpack.c.l.bf16 %v1974
    %v2103 = vunpack.c.l.bf16 %v1975
    %v2104 = vunpack.c.l.bf16 %v1976
    %v2105 = vunpack.c.l.bf16 %v1977
    %v2106 = vunpack.c.l.bf16 %v1978
    %v2107 = vunpack.c.l.bf16 %v1979
    %v2108 = vunpack.c.l.bf16 %v1980
    %v2109 = vunpack.c.l.bf16 %v1981
    %v2110 = vunpack.c.l.bf16 %v1982
    %v2111 = vunpack.c.l.bf16 %v1983
    %v2112 = vunpack.c.l.bf16 %v1984
    %v2113 = vunpack.c.l.bf16 %v1985
    %v2114 = vunpack.c.l.bf16 %v1986
    %v2115 = vunpack.c.l.bf16 %v1987
    %v2116 = vunpack.c.l.bf16 %v1988
    %v2117 = vunpack.c.l.bf16 %v1989
    %v2118 = vunpack.c.l.bf16 %v1990
    %v2119 = vunpack.c.l.bf16 %v1991
    %v2120 = vunpack.c.l.bf16 %v1992
    %v2121 = vunpack.c.l.bf16 %v1993
    %v2122 = vunpack.c.l.bf16 %v1994
    %v2123 = vunpack.c.l.bf16 %v1995
    %v2124 = vunpack.c.l.bf16 %v1996
    %v2125 = vunpack.c.l.bf16 %v1997
    %v2126 = vunpack.c.l.bf16 %v1998
    %v2127 = vunpack.c.l.bf16 %v1999
    %v2128 = vunpack.c.l.bf16 %v2000
    %v2129 = vunpack.c.l.bf16 %v2001
    %v2130 = vunpack.c.l.bf16 %v2002
    %v2131 = vunpack.c.l.bf16 %v2003
    %v2132 = vunpack.c.l.bf16 %v2004
    %v2133 = vunpack.c.l.bf16 %v2005
    %v2134 = vunpack.c.l.bf16 %v2006
    %v2135 = vunpack.c.l.bf16 %v2007
    %v2136 = vunpack.c.l.bf16 %v2008
    %v2137 = vunpack.c.l.bf16 %v2009
    %v2138 = vunpack.c.l.bf16 %v2010
    %v2139 = vunpack.c.l.bf16 %v2011
    %v2140 = vunpack.c.l.bf16 %v2012
    %v2141 = vunpack.c.l.bf16 %v2013
    %v2142 = vunpack.c.l.bf16 %v2014
    %v2143 = vunpack.c.l.bf16 %v2015
    %v2144 = vunpack.c.l.bf16 %v2016
    %v2145 = vunpack.c.l.bf16 %v2017
    %v2146 = vunpack.c.l.bf16 %v2018
    %v2147 = vunpack.c.l.bf16 %v2019
    %v2148 = vunpack.c.l.bf16 %v2020
    %v2149 = vunpack.c.l.bf16 %v2021
    %v2150 = vunpack.c.l.bf16 %v2022
    %v2151 = vunpack.c.l.bf16 %v2023
    %v2152 = vunpack.c.l.bf16 %v2024
    %v2153 = vunpack.c.l.bf16 %v2025
    %v2154 = vunpack.c.l.bf16 %v2026
    %v2155 = vunpack.c.l.bf16 %v2027
    %v2156 = vunpack.c.l.bf16 %v2028
    %v2157 = vunpack.c.l.bf16 %v2029
    %v2158 = vunpack.c.l.bf16 %v2030
    %v2159 = vunpack.c.l.bf16 %v2031
    %v2160 = vunpack.c.l.bf16 %v2032
    %v2161 = vunpack.c.l.bf16 %v2033
    %v2162 = vunpack.c.l.bf16 %v2034
    %v2163 = vunpack.c.l.bf16 %v2035
    %v2164 = vunpack.c.l.bf16 %v2036
    %v2165 = vunpack.c.l.bf16 %v2037
    %v2166 = vunpack.c.l.bf16 %v2038
    %v2167 = vunpack.c.l.bf16 %v2039
    %v2168 = vunpack.c.l.bf16 %v2040
    %v2169 = vunpack.c.l.bf16 %v2041
    %v2170 = vunpack.c.l.bf16 %v2042
    %v2171 = vunpack.c.l.bf16 %v2043
    %v2172 = vunpack.c.l.bf16 %v2044
    %v2173 = vunpack.c.l.bf16 %v2045
    %v2174 = vunpack.c.l.bf16 %v2046
    %v2175 = vunpack.c.l.bf16 %v2047
    %v2176 = vunpack.c.l.bf16 %v2048
    %v2177 = vunpack.c.l.bf16 %v2049
    %v2178 = vunpack.c.l.bf16 %v2050
    %v2179 = vunpack.c.l.bf16 %v2051
    %v2180 = vunpack.c.l.bf16 %v2052
    %v2181 = vunpack.c.l.bf16 %v2053
    %v2182 = vunpack.c.l.bf16 %v2054
    %v2183 = vunpack.c.l.bf16 %v2055
    %v2184 = vunpack.c.l.bf16 %v2056
    %v2185 = vunpack.c.l.bf16 %v2057
    %v2186 = vunpack.c.l.bf16 %v2058
    %v2187 = vunpack.c.l.bf16 %v2059
    %v2188 = vunpack.c.l.bf16 %v2060
    %v2189 = vunpack.c.l.bf16 %v2061
    %v2190 = vunpack.c.l.bf16 %v2062
    %v2191 = vunpack.c.l.bf16 %v2063
    %v2192 = vunpack.c.l.bf16 %v2064
    %v2193 = vunpack.c.l.bf16 %v2065
    %v2194 = vunpack.c.l.bf16 %v2066
    %v2195 = vunpack.c.l.bf16 %v2067
    %v2196 = vunpack.c.l.bf16 %v2068
    %v2197 = vunpack.c.l.bf16 %v2069
    %v2198 = vunpack.c.l.bf16 %v2070
    %v2199 = vunpack.c.l.bf16 %v2071
    %v2200 = vunpack.c.l.bf16 %v2072
    %v2201 = vunpack.c.l.bf16 %v2073
    %v2202 = vunpack.c.l.bf16 %v2074
    %v2203 = vunpack.c.l.bf16 %v2075
    %v2204 = vunpack.c.l.bf16 %v2076
    %v2205 = vunpack.c.l.bf16 %v2077
    %v2206 = vunpack.c.l.bf16 %v2078
    %v2207 = vunpack.c.l.bf16 %v2079
    %v2208 = vunpack.c.l.bf16 %v2080
    %v2209 = vunpack.c.l.bf16 %v2081
    %v2210 = vunpack.c.l.bf16 %v2082
    %v2211 = vunpack.c.l.bf16 %v2083
    %v2212 = vunpack.c.l.bf16 %v2084
    %v2213 = vunpack.c.l.bf16 %v2085
    %v2342 = vperm.slane %v2086, %v1058
    %v2343 = vperm.slane %v2087, %v1060
    %v2344 = vsel %vm1062, %v2343, %v2342
    %v2345 = vperm.slane %v2088, %v1064
    %v2346 = vsel %vm1066, %v2345, %v2344
    %v2347 = vperm.slane %v2089, %v1068
    %v2348 = vsel %vm1070, %v2347, %v2346
    %v2349 = vadd.s32 %v1058, 4294967264
    %v2350 = vperm.slane %v2090, %v2349
    %vm2351 = vcmask 326912
    %v2352 = vsel %vm2351, %v2350, %v2348
    %v2353 = vadd.s32 %v1058, 4294967256
    %v2354 = vperm.slane %v2091, %v2353
    %vm2355 = vcmask 392512
    %v2356 = vsel %vm2355, %v2354, %v2352
    %v2357 = vadd.s32 %v1058, 4294967248
    %v2358 = vperm.slane %v2092, %v2357
    %vm2359 = vcmask 458112
    %v2360 = vsel %vm2359, %v2358, %v2356
    %v2361 = vadd.s32 %v1058, 4294967240
    %v2362 = vperm.slane %v2093, %v2361
    %vm2363 = vcmask 523712
    %v2364 = vsel %vm2363, %v2362, %v2360
    %v2365 = vperm.slane %v2094, %v1058
    %v2366 = vperm.slane %v2095, %v1060
    %v2367 = vsel %vm1062, %v2366, %v2365
    %v2368 = vperm.slane %v2096, %v1064
    %v2369 = vsel %vm1066, %v2368, %v2367
    %v2370 = vperm.slane %v2097, %v1068
    %v2371 = vsel %vm1070, %v2370, %v2369
    %v2372 = vperm.slane %v2098, %v2349
    %v2373 = vsel %vm2351, %v2372, %v2371
    %v2374 = vperm.slane %v2099, %v2353
    %v2375 = vsel %vm2355, %v2374, %v2373
    %v2376 = vperm.slane %v2100, %v2357
    %v2377 = vsel %vm2359, %v2376, %v2375
    %v2378 = vperm.slane %v2101, %v2361
    %v2379 = vsel %vm2363, %v2378, %v2377
    %v2380 = vperm.slane %v2102, %v1058
    %v2381 = vperm.slane %v2103, %v1060
    %v2382 = vsel %vm1062, %v2381, %v2380
    %v2383 = vperm.slane %v2104, %v1064
    %v2384 = vsel %vm1066, %v2383, %v2382
    %v2385 = vperm.slane %v2105, %v1068
    %v2386 = vsel %vm1070, %v2385, %v2384
    %v2387 = vperm.slane %v2106, %v2349
    %v2388 = vsel %vm2351, %v2387, %v2386
    %v2389 = vperm.slane %v2107, %v2353
    %v2390 = vsel %vm2355, %v2389, %v2388
    %v2391 = vperm.slane %v2108, %v2357
    %v2392 = vsel %vm2359, %v2391, %v2390
    %v2393 = vperm.slane %v2109, %v2361
    %v2394 = vsel %vm2363, %v2393, %v2392
    %v2395 = vperm.slane %v2110, %v1058
    %v2396 = vperm.slane %v2111, %v1060
    %v2397 = vsel %vm1062, %v2396, %v2395
    %v2398 = vperm.slane %v2112, %v1064
    %v2399 = vsel %vm1066, %v2398, %v2397
    %v2400 = vperm.slane %v2113, %v1068
    %v2401 = vsel %vm1070, %v2400, %v2399
    %v2402 = vperm.slane %v2114, %v2349
    %v2403 = vsel %vm2351, %v2402, %v2401
    %v2404 = vperm.slane %v2115, %v2353
    %v2405 = vsel %vm2355, %v2404, %v2403
    %v2406 = vperm.slane %v2116, %v2357
    %v2407 = vsel %vm2359, %v2406, %v2405
    %v2408 = vperm.slane %v2117, %v2361
    %v2409 = vsel %vm2363, %v2408, %v2407
    %v2410 = vperm.slane %v2118, %v1058
    %v2411 = vperm.slane %v2119, %v1060
    %v2412 = vsel %vm1062, %v2411, %v2410
    %v2413 = vperm.slane %v2120, %v1064
    %v2414 = vsel %vm1066, %v2413, %v2412
    %v2415 = vperm.slane %v2121, %v1068
    %v2416 = vsel %vm1070, %v2415, %v2414
    %v2417 = vperm.slane %v2122, %v2349
    %v2418 = vsel %vm2351, %v2417, %v2416
    %v2419 = vperm.slane %v2123, %v2353
    %v2420 = vsel %vm2355, %v2419, %v2418
    %v2421 = vperm.slane %v2124, %v2357
    %v2422 = vsel %vm2359, %v2421, %v2420
    %v2423 = vperm.slane %v2125, %v2361
    %v2424 = vsel %vm2363, %v2423, %v2422
    %v2425 = vperm.slane %v2126, %v1058
    %v2426 = vperm.slane %v2127, %v1060
    %v2427 = vsel %vm1062, %v2426, %v2425
    %v2428 = vperm.slane %v2128, %v1064
    %v2429 = vsel %vm1066, %v2428, %v2427
    %v2430 = vperm.slane %v2129, %v1068
    %v2431 = vsel %vm1070, %v2430, %v2429
    %v2432 = vperm.slane %v2130, %v2349
    %v2433 = vsel %vm2351, %v2432, %v2431
    %v2434 = vperm.slane %v2131, %v2353
    %v2435 = vsel %vm2355, %v2434, %v2433
    %v2436 = vperm.slane %v2132, %v2357
    %v2437 = vsel %vm2359, %v2436, %v2435
    %v2438 = vperm.slane %v2133, %v2361
    %v2439 = vsel %vm2363, %v2438, %v2437
    %v2440 = vperm.slane %v2134, %v1058
    %v2441 = vperm.slane %v2135, %v1060
    %v2442 = vsel %vm1062, %v2441, %v2440
    %v2443 = vperm.slane %v2136, %v1064
    %v2444 = vsel %vm1066, %v2443, %v2442
    %v2445 = vperm.slane %v2137, %v1068
    %v2446 = vsel %vm1070, %v2445, %v2444
    %v2447 = vperm.slane %v2138, %v2349
    %v2448 = vsel %vm2351, %v2447, %v2446
    %v2449 = vperm.slane %v2139, %v2353
    %v2450 = vsel %vm2355, %v2449, %v2448
    %v2451 = vperm.slane %v2140, %v2357
    %v2452 = vsel %vm2359, %v2451, %v2450
    %v2453 = vperm.slane %v2141, %v2361
    %v2454 = vsel %vm2363, %v2453, %v2452
    %v2455 = vperm.slane %v2142, %v1058
    %v2456 = vperm.slane %v2143, %v1060
    %v2457 = vsel %vm1062, %v2456, %v2455
    %v2458 = vperm.slane %v2144, %v1064
    %v2459 = vsel %vm1066, %v2458, %v2457
    %v2460 = vperm.slane %v2145, %v1068
    %v2461 = vsel %vm1070, %v2460, %v2459
    %v2462 = vperm.slane %v2146, %v2349
    %v2463 = vsel %vm2351, %v2462, %v2461
    %v2464 = vperm.slane %v2147, %v2353
    %v2465 = vsel %vm2355, %v2464, %v2463
    %v2466 = vperm.slane %v2148, %v2357
    %v2467 = vsel %vm2359, %v2466, %v2465
    %v2468 = vperm.slane %v2149, %v2361
    %v2469 = vsel %vm2363, %v2468, %v2467
    %v2470 = vperm.slane %v2150, %v1058
    %v2471 = vperm.slane %v2151, %v1060
    %v2472 = vsel %vm1062, %v2471, %v2470
    %v2473 = vperm.slane %v2152, %v1064
    %v2474 = vsel %vm1066, %v2473, %v2472
    %v2475 = vperm.slane %v2153, %v1068
    %v2476 = vsel %vm1070, %v2475, %v2474
    %v2477 = vperm.slane %v2154, %v2349
    %v2478 = vsel %vm2351, %v2477, %v2476
    %v2479 = vperm.slane %v2155, %v2353
    %v2480 = vsel %vm2355, %v2479, %v2478
    %v2481 = vperm.slane %v2156, %v2357
    %v2482 = vsel %vm2359, %v2481, %v2480
    %v2483 = vperm.slane %v2157, %v2361
    %v2484 = vsel %vm2363, %v2483, %v2482
    %v2485 = vperm.slane %v2158, %v1058
    %v2486 = vperm.slane %v2159, %v1060
    %v2487 = vsel %vm1062, %v2486, %v2485
    %v2488 = vperm.slane %v2160, %v1064
    %v2489 = vsel %vm1066, %v2488, %v2487
    %v2490 = vperm.slane %v2161, %v1068
    %v2491 = vsel %vm1070, %v2490, %v2489
    %v2492 = vperm.slane %v2162, %v2349
    %v2493 = vsel %vm2351, %v2492, %v2491
    %v2494 = vperm.slane %v2163, %v2353
    %v2495 = vsel %vm2355, %v2494, %v2493
    %v2496 = vperm.slane %v2164, %v2357
    %v2497 = vsel %vm2359, %v2496, %v2495
    %v2498 = vperm.slane %v2165, %v2361
    %v2499 = vsel %vm2363, %v2498, %v2497
    %v2500 = vperm.slane %v2166, %v1058
    %v2501 = vperm.slane %v2167, %v1060
    %v2502 = vsel %vm1062, %v2501, %v2500
    %v2503 = vperm.slane %v2168, %v1064
    %v2504 = vsel %vm1066, %v2503, %v2502
    %v2505 = vperm.slane %v2169, %v1068
    %v2506 = vsel %vm1070, %v2505, %v2504
    %v2507 = vperm.slane %v2170, %v2349
    %v2508 = vsel %vm2351, %v2507, %v2506
    %v2509 = vperm.slane %v2171, %v2353
    %v2510 = vsel %vm2355, %v2509, %v2508
    %v2511 = vperm.slane %v2172, %v2357
    %v2512 = vsel %vm2359, %v2511, %v2510
    %v2513 = vperm.slane %v2173, %v2361
    %v2514 = vsel %vm2363, %v2513, %v2512
    %v2515 = vperm.slane %v2174, %v1058
    %v2516 = vperm.slane %v2175, %v1060
    %v2517 = vsel %vm1062, %v2516, %v2515
    %v2518 = vperm.slane %v2176, %v1064
    %v2519 = vsel %vm1066, %v2518, %v2517
    %v2520 = vperm.slane %v2177, %v1068
    %v2521 = vsel %vm1070, %v2520, %v2519
    %v2522 = vperm.slane %v2178, %v2349
    %v2523 = vsel %vm2351, %v2522, %v2521
    %v2524 = vperm.slane %v2179, %v2353
    %v2525 = vsel %vm2355, %v2524, %v2523
    %v2526 = vperm.slane %v2180, %v2357
    %v2527 = vsel %vm2359, %v2526, %v2525
    %v2528 = vperm.slane %v2181, %v2361
    %v2529 = vsel %vm2363, %v2528, %v2527
    %v2530 = vperm.slane %v2182, %v1058
    %v2531 = vperm.slane %v2183, %v1060
    %v2532 = vsel %vm1062, %v2531, %v2530
    %v2533 = vperm.slane %v2184, %v1064
    %v2534 = vsel %vm1066, %v2533, %v2532
    %v2535 = vperm.slane %v2185, %v1068
    %v2536 = vsel %vm1070, %v2535, %v2534
    %v2537 = vperm.slane %v2186, %v2349
    %v2538 = vsel %vm2351, %v2537, %v2536
    %v2539 = vperm.slane %v2187, %v2353
    %v2540 = vsel %vm2355, %v2539, %v2538
    %v2541 = vperm.slane %v2188, %v2357
    %v2542 = vsel %vm2359, %v2541, %v2540
    %v2543 = vperm.slane %v2189, %v2361
    %v2544 = vsel %vm2363, %v2543, %v2542
    %v2545 = vperm.slane %v2190, %v1058
    %v2546 = vperm.slane %v2191, %v1060
    %v2547 = vsel %vm1062, %v2546, %v2545
    %v2548 = vperm.slane %v2192, %v1064
    %v2549 = vsel %vm1066, %v2548, %v2547
    %v2550 = vperm.slane %v2193, %v1068
    %v2551 = vsel %vm1070, %v2550, %v2549
    %v2552 = vperm.slane %v2194, %v2349
    %v2553 = vsel %vm2351, %v2552, %v2551
    %v2554 = vperm.slane %v2195, %v2353
    %v2555 = vsel %vm2355, %v2554, %v2553
    %v2556 = vperm.slane %v2196, %v2357
    %v2557 = vsel %vm2359, %v2556, %v2555
    %v2558 = vperm.slane %v2197, %v2361
    %v2559 = vsel %vm2363, %v2558, %v2557
    %v2560 = vperm.slane %v2198, %v1058
    %v2561 = vperm.slane %v2199, %v1060
    %v2562 = vsel %vm1062, %v2561, %v2560
    %v2563 = vperm.slane %v2200, %v1064
    %v2564 = vsel %vm1066, %v2563, %v2562
    %v2565 = vperm.slane %v2201, %v1068
    %v2566 = vsel %vm1070, %v2565, %v2564
    %v2567 = vperm.slane %v2202, %v2349
    %v2568 = vsel %vm2351, %v2567, %v2566
    %v2569 = vperm.slane %v2203, %v2353
    %v2570 = vsel %vm2355, %v2569, %v2568
    %v2571 = vperm.slane %v2204, %v2357
    %v2572 = vsel %vm2359, %v2571, %v2570
    %v2573 = vperm.slane %v2205, %v2361
    %v2574 = vsel %vm2363, %v2573, %v2572
    %v2575 = vperm.slane %v2206, %v1058
    %v2576 = vperm.slane %v2207, %v1060
    %v2577 = vsel %vm1062, %v2576, %v2575
    %v2578 = vperm.slane %v2208, %v1064
    %v2579 = vsel %vm1066, %v2578, %v2577
    %v2580 = vperm.slane %v2209, %v1068
    %v2581 = vsel %vm1070, %v2580, %v2579
    %v2582 = vperm.slane %v2210, %v2349
    %v2583 = vsel %vm2351, %v2582, %v2581
    %v2584 = vperm.slane %v2211, %v2353
    %v2585 = vsel %vm2355, %v2584, %v2583
    %v2586 = vperm.slane %v2212, %v2357
    %v2587 = vsel %vm2359, %v2586, %v2585
    %v2588 = vperm.slane %v2213, %v2361
    %v2589 = vsel %vm2363, %v2588, %v2587
    %v2590 = vsel %vm247, %v2379, %v2364
    %v2591 = vsel %vm240, %v2394, %v2590
    %v2592 = vsel %vm249, %v2409, %v2591
    %v2593 = vsel %vm1180, %v2424, %v2592
    %v2594 = vsel %vm1182, %v2439, %v2593
    %v2595 = vsel %vm1184, %v2454, %v2594
    %v2596 = vsel %vm1186, %v2469, %v2595
    %v2597 = vsel %vm247, %v2499, %v2484
    %v2598 = vsel %vm240, %v2514, %v2597
    %v2599 = vsel %vm249, %v2529, %v2598
    %v2600 = vsel %vm1180, %v2544, %v2599
    %v2601 = vsel %vm1182, %v2559, %v2600
    %v2602 = vsel %vm1184, %v2574, %v2601
    %v2603 = vsel %vm1186, %v2589, %v2602
    %v2606 = vadd.f32 %v1247, %v2596
    %v2607 = vadd.f32 %v1250, %v2603
    %vm2608 = vcmp.gt.f32.partialorder %v2606, 0.0
    %vm2609 = vcmp.gt.f32.partialorder %v2607, 0.0
    %v2610 = vmul.f32 %v2606, 1.442695
    %v2611 = vpow.pop %v2610
    %v2612 = vmul.f32 %v2607, 1.442695
    %v2613 = vpow.pop %v2612
    %v2614 = vsub.f32 %v2611, 1.0
    %v2615 = vsub.f32 %v2613, 1.0
    %v2616 = vsel %vm2608, %v2606, %v2614
    %v2617 = vsel %vm2609, %v2607, %v2615
    %v2618 = vld [vmem:[%s10] sm:$0xff]
    %v2619 = vld [vmem:[%s10 + $0x8] sm:$0xff]
    %v2620 = vld [vmem:[%s10 + $0x10] sm:$0xff]
    %v2621 = vld [vmem:[%s10 + $0x18] sm:$0xff]
    %v2622 = vld [vmem:[%s10 + $0x20] sm:$0xff]
    %v2623 = vld [vmem:[%s10 + $0x28] sm:$0xff]
    %v2624 = vld [vmem:[%s10 + $0x30] sm:$0xff]
    %v2625 = vld [vmem:[%s10 + $0x38] sm:$0xff]
    %v2626 = vld [vmem:[%s11] sm:$0x1]
    %v2627 = vld [vmem:[#allocation5] sm:$0xff]
    %v2628 = vld [vmem:[#allocation5 + $0x8] sm:$0xff]
    %v2629 = vld [vmem:[#allocation5 + $0x10] sm:$0xff]
    %v2630 = vld [vmem:[#allocation5 + $0x18] sm:$0xff]
    %v2631 = vld [vmem:[#allocation5 + $0x20] sm:$0xff]
    %v2632 = vld [vmem:[#allocation5 + $0x28] sm:$0xff]
    %v2633 = vld [vmem:[#allocation5 + $0x30] sm:$0xff]
    %v2634 = vld [vmem:[#allocation5 + $0x38] sm:$0xff]
    %v2635 = vld [vmem:[%s13] sm:$0x1]
    %v2637 = vperm.slane %v2626, 0
    %vm2639 = vcmask 523264
    %v2641 = vsel %vm2639, %v2616, 0
    %v2644 = vsel %vm2639, %v2617, 0
    %2646 = vmatpush.msra.mxu0 0.0
    %2647 = vmatpush.msra.mxu0 0.0
    %2648 = vmatpush.msra.mxu0 0.0
    %2649 = vmatpush.msra.mxu0 0.0
    %2650 = vmatpush.msra.mxu0 0.0
    %2651 = vmatpush.msra.mxu0 0.0
    %2652 = vmatpush.msra.mxu0 0.0
    %2653 = vmatpush.msra.mxu0 0.0
    %2654 = vmatpush.msra.mxu0 %v2625
    %2655 = vmatpush.msra.mxu0 %v2624
    %2656 = vmatpush.msra.mxu0 %v2623
    %2657 = vmatpush.msra.mxu0 %v2622
    %2658 = vmatpush.msra.mxu0 %v2621
    %2659 = vmatpush.msra.mxu0 %v2620
    %2660 = vmatpush.msra.mxu0 %v2619
    %2661 = vmatpush.msra.mxu0 %v2618
    %2662 = vmatmul.f32.gmra.mxu0 %v2641
    %v2663 = vpop.f32.mrf.mxu0
    %v2664 = vadd.f32 %v2637, %v2663
    %2665 = vmatmul.f32.gmra.mxu0 %v2644
    %v2666 = vpop.f32.mrf.mxu0
    %v2667 = vadd.f32 %v2637, %v2666
    %2668 = vdwg.mxu0
    %v2670 = vperm.slane %v2635, 0
    %2672 = vmatpush.msra.mxu0 0.0
    %2673 = vmatpush.msra.mxu0 0.0
    %2674 = vmatpush.msra.mxu0 0.0
    %2675 = vmatpush.msra.mxu0 0.0
    %2676 = vmatpush.msra.mxu0 0.0
    %2677 = vmatpush.msra.mxu0 0.0
    %2678 = vmatpush.msra.mxu0 0.0
    %2679 = vmatpush.msra.mxu0 0.0
    %2680 = vmatpush.msra.mxu0 %v2634
    %2681 = vmatpush.msra.mxu0 %v2633
    %2682 = vmatpush.msra.mxu0 %v2632
    %2683 = vmatpush.msra.mxu0 %v2631
    %2684 = vmatpush.msra.mxu0 %v2630
    %2685 = vmatpush.msra.mxu0 %v2629
    %2686 = vmatpush.msra.mxu0 %v2628
    %2687 = vmatpush.msra.mxu0 %v2627
    %2688 = vmatmul.f32.gmra.mxu0 %v2641
    %v2689 = vpop.f32.mrf.mxu0
    %v2690 = vadd.f32 %v2670, %v2689
    %2691 = vmatmul.f32.gmra.mxu0 %v2644
    %v2692 = vpop.f32.mrf.mxu0
    %v2693 = vadd.f32 %v2670, %v2692
    %2694 = vdwg.mxu0
    %2695 = vxpose.xlu0.b32.start [1/16] %v2690, 128
    %2696 = vxpose.xlu0.b32.cont [2/16] %v2693, 128
    %2697 = vxpose.xlu0.b32.cont [3/16] 0.0, 128
    %2698 = vxpose.xlu0.b32.cont [4/16] 0.0, 128
    %2699 = vxpose.xlu0.b32.cont [5/16] 0.0, 128
    %2700 = vxpose.xlu0.b32.cont [6/16] 0.0, 128
    %2701 = vxpose.xlu0.b32.cont [7/16] 0.0, 128
    %2702 = vxpose.xlu0.b32.cont [8/16] 0.0, 128
    %2703 = vxpose.xlu0.b32.cont [9/16] 0.0, 128
    %2704 = vxpose.xlu0.b32.cont [10/16] 0.0, 128
    %2705 = vxpose.xlu0.b32.cont [11/16] 0.0, 128
    %2706 = vxpose.xlu0.b32.cont [12/16] 0.0, 128
    %2707 = vxpose.xlu0.b32.cont [13/16] 0.0, 128
    %2708 = vxpose.xlu0.b32.cont [14/16] 0.0, 128
    %2709 = vxpose.xlu0.b32.cont [15/16] 0.0, 128
    %2710 = vxpose.xlu0.b32.end [16/16] 0.0, 128
    %v2711 = vpop.trf.xlu0
    %v2712 = vpop.trf.xlu0
    %v2713 = vpop.trf.xlu0
    %v2714 = vpop.trf.xlu0
    %v2715 = vpop.trf.xlu0
    %v2716 = vpop.trf.xlu0
    %v2717 = vpop.trf.xlu0
    %v2718 = vpop.trf.xlu0
    %v2719 = vpop.trf.xlu0
    %v2720 = vpop.trf.xlu0
    %v2721 = vpop.trf.xlu0
    %v2722 = vpop.trf.xlu0
    %v2723 = vpop.trf.xlu0
    %v2724 = vpop.trf.xlu0
    %v2725 = vpop.trf.xlu0
    %v2726 = vpop.trf.xlu0
    %v2727 = vpack.c.bf16 %v2711, %v2711
    %v2728 = vpack.c.bf16 %v2712, %v2712
    %v2729 = vpack.c.bf16 %v2713, %v2713
    %v2730 = vpack.c.bf16 %v2714, %v2714
    %v2731 = vpack.c.bf16 %v2715, %v2715
    %v2732 = vpack.c.bf16 %v2716, %v2716
    %v2733 = vpack.c.bf16 %v2717, %v2717
    %v2734 = vpack.c.bf16 %v2718, %v2718
    %v2735 = vsel %vm528, %v2727, 4048220490
    %v2736 = vsel %vm528, %v2728, 4048220490
    %v2737 = vsel %vm528, %v2729, 4048220490
    %v2738 = vsel %vm528, %v2730, 4048220490
    %v2739 = vsel %vm528, %v2731, 4048220490
    %v2740 = vsel %vm528, %v2732, 4048220490
    %v2741 = vsel %vm528, %v2733, 4048220490
    %v2742 = vsel %vm528, %v2734, 4048220490
    %v2743 = vsel %vm529, %v2727, 4048220490
    %v2744 = vsel %vm529, %v2728, 4048220490
    %v2745 = vsel %vm529, %v2729, 4048220490
    %v2746 = vsel %vm529, %v2730, 4048220490
    %v2747 = vsel %vm529, %v2731, 4048220490
    %v2748 = vsel %vm529, %v2732, 4048220490
    %v2749 = vsel %vm529, %v2733, 4048220490
    %v2750 = vsel %vm529, %v2734, 4048220490
    %v2751 = vsel %vm530, %v2727, 4048220490
    %v2752 = vsel %vm530, %v2728, 4048220490
    %v2753 = vsel %vm530, %v2729, 4048220490
    %v2754 = vsel %vm530, %v2730, 4048220490
    %v2755 = vsel %vm530, %v2731, 4048220490
    %v2756 = vsel %vm530, %v2732, 4048220490
    %v2757 = vsel %vm530, %v2733, 4048220490
    %v2758 = vsel %vm530, %v2734, 4048220490
    %v2759 = vsel %vm531, %v2727, 4048220490
    %v2760 = vsel %vm531, %v2728, 4048220490
    %v2761 = vsel %vm531, %v2729, 4048220490
    %v2762 = vsel %vm531, %v2730, 4048220490
    %v2763 = vsel %vm531, %v2731, 4048220490
    %v2764 = vsel %vm531, %v2732, 4048220490
    %v2765 = vsel %vm531, %v2733, 4048220490
    %v2766 = vsel %vm531, %v2734, 4048220490
    %v2767 = vsel %vm532, %v2727, 4048220490
    %v2768 = vsel %vm532, %v2728, 4048220490
    %v2769 = vsel %vm532, %v2729, 4048220490
    %v2770 = vsel %vm532, %v2730, 4048220490
    %v2771 = vsel %vm532, %v2731, 4048220490
    %v2772 = vsel %vm532, %v2732, 4048220490
    %v2773 = vsel %vm532, %v2733, 4048220490
    %v2774 = vsel %vm532, %v2734, 4048220490
    %v2775 = vsel %vm533, %v2727, 4048220490
    %v2776 = vsel %vm533, %v2728, 4048220490
    %v2777 = vsel %vm533, %v2729, 4048220490
    %v2778 = vsel %vm533, %v2730, 4048220490
    %v2779 = vsel %vm533, %v2731, 4048220490
    %v2780 = vsel %vm533, %v2732, 4048220490
    %v2781 = vsel %vm533, %v2733, 4048220490
    %v2782 = vsel %vm533, %v2734, 4048220490
    %v2783 = vsel %vm534, %v2727, 4048220490
    %v2784 = vsel %vm534, %v2728, 4048220490
    %v2785 = vsel %vm534, %v2729, 4048220490
    %v2786 = vsel %vm534, %v2730, 4048220490
    %v2787 = vsel %vm534, %v2731, 4048220490
    %v2788 = vsel %vm534, %v2732, 4048220490
    %v2789 = vsel %vm534, %v2733, 4048220490
    %v2790 = vsel %vm534, %v2734, 4048220490
    %v2791 = vsel %vm535, %v2727, 4048220490
    %v2792 = vsel %vm535, %v2728, 4048220490
    %v2793 = vsel %vm535, %v2729, 4048220490
    %v2794 = vsel %vm535, %v2730, 4048220490
    %v2795 = vsel %vm535, %v2731, 4048220490
    %v2796 = vsel %vm535, %v2732, 4048220490
    %v2797 = vsel %vm535, %v2733, 4048220490
    %v2798 = vsel %vm535, %v2734, 4048220490
    %v2799 = vsel %vm536, %v2727, 4048220490
    %v2800 = vsel %vm536, %v2728, 4048220490
    %v2801 = vsel %vm536, %v2729, 4048220490
    %v2802 = vsel %vm536, %v2730, 4048220490
    %v2803 = vsel %vm536, %v2731, 4048220490
    %v2804 = vsel %vm536, %v2732, 4048220490
    %v2805 = vsel %vm536, %v2733, 4048220490
    %v2806 = vsel %vm536, %v2734, 4048220490
    %v2807 = vsel %vm537, %v2727, 4048220490
    %v2808 = vsel %vm537, %v2728, 4048220490
    %v2809 = vsel %vm537, %v2729, 4048220490
    %v2810 = vsel %vm537, %v2730, 4048220490
    %v2811 = vsel %vm537, %v2731, 4048220490
    %v2812 = vsel %vm537, %v2732, 4048220490
    %v2813 = vsel %vm537, %v2733, 4048220490
    %v2814 = vsel %vm537, %v2734, 4048220490
    %v2815 = vsel %vm538, %v2727, 4048220490
    %v2816 = vsel %vm538, %v2728, 4048220490
    %v2817 = vsel %vm538, %v2729, 4048220490
    %v2818 = vsel %vm538, %v2730, 4048220490
    %v2819 = vsel %vm538, %v2731, 4048220490
    %v2820 = vsel %vm538, %v2732, 4048220490
    %v2821 = vsel %vm538, %v2733, 4048220490
    %v2822 = vsel %vm538, %v2734, 4048220490
    %v2823 = vsel %vm539, %v2727, 4048220490
    %v2824 = vsel %vm539, %v2728, 4048220490
    %v2825 = vsel %vm539, %v2729, 4048220490
    %v2826 = vsel %vm539, %v2730, 4048220490
    %v2827 = vsel %vm539, %v2731, 4048220490
    %v2828 = vsel %vm539, %v2732, 4048220490
    %v2829 = vsel %vm539, %v2733, 4048220490
    %v2830 = vsel %vm539, %v2734, 4048220490
    %v2831 = vsel %vm540, %v2727, 4048220490
    %v2832 = vsel %vm540, %v2728, 4048220490
    %v2833 = vsel %vm540, %v2729, 4048220490
    %v2834 = vsel %vm540, %v2730, 4048220490
    %v2835 = vsel %vm540, %v2731, 4048220490
    %v2836 = vsel %vm540, %v2732, 4048220490
    %v2837 = vsel %vm540, %v2733, 4048220490
    %v2838 = vsel %vm540, %v2734, 4048220490
    %v2839 = vsel %vm541, %v2727, 4048220490
    %v2840 = vsel %vm541, %v2728, 4048220490
    %v2841 = vsel %vm541, %v2729, 4048220490
    %v2842 = vsel %vm541, %v2730, 4048220490
    %v2843 = vsel %vm541, %v2731, 4048220490
    %v2844 = vsel %vm541, %v2732, 4048220490
    %v2845 = vsel %vm541, %v2733, 4048220490
    %v2846 = vsel %vm541, %v2734, 4048220490
    %v2847 = vsel %vm542, %v2727, 4048220490
    %v2848 = vsel %vm542, %v2728, 4048220490
    %v2849 = vsel %vm542, %v2729, 4048220490
    %v2850 = vsel %vm542, %v2730, 4048220490
    %v2851 = vsel %vm542, %v2731, 4048220490
    %v2852 = vsel %vm542, %v2732, 4048220490
    %v2853 = vsel %vm542, %v2733, 4048220490
    %v2854 = vsel %vm542, %v2734, 4048220490
    %v2855 = vsel %vm543, %v2727, 4048220490
    %v2856 = vsel %vm543, %v2728, 4048220490
    %v2857 = vsel %vm543, %v2729, 4048220490
    %v2858 = vsel %vm543, %v2730, 4048220490
    %v2859 = vsel %vm543, %v2731, 4048220490
    %v2860 = vsel %vm543, %v2732, 4048220490
    %v2861 = vsel %vm543, %v2733, 4048220490
    %v2862 = vsel %vm543, %v2734, 4048220490
    %v2863 = vunpack.c.l.bf16 %v2735
    %v2864 = vunpack.c.l.bf16 %v2736
    %v2865 = vunpack.c.l.bf16 %v2737
    %v2866 = vunpack.c.l.bf16 %v2738
    %v2867 = vunpack.c.l.bf16 %v2739
    %v2868 = vunpack.c.l.bf16 %v2740
    %v2869 = vunpack.c.l.bf16 %v2741
    %v2870 = vunpack.c.l.bf16 %v2742
    %v2871 = vunpack.c.l.bf16 %v2743
    %v2872 = vunpack.c.l.bf16 %v2744
    %v2873 = vunpack.c.l.bf16 %v2745
    %v2874 = vunpack.c.l.bf16 %v2746
    %v2875 = vunpack.c.l.bf16 %v2747
    %v2876 = vunpack.c.l.bf16 %v2748
    %v2877 = vunpack.c.l.bf16 %v2749
    %v2878 = vunpack.c.l.bf16 %v2750
    %v2879 = vunpack.c.l.bf16 %v2751
    %v2880 = vunpack.c.l.bf16 %v2752
    %v2881 = vunpack.c.l.bf16 %v2753
    %v2882 = vunpack.c.l.bf16 %v2754
    %v2883 = vunpack.c.l.bf16 %v2755
    %v2884 = vunpack.c.l.bf16 %v2756
    %v2885 = vunpack.c.l.bf16 %v2757
    %v2886 = vunpack.c.l.bf16 %v2758
    %v2887 = vunpack.c.l.bf16 %v2759
    %v2888 = vunpack.c.l.bf16 %v2760
    %v2889 = vunpack.c.l.bf16 %v2761
    %v2890 = vunpack.c.l.bf16 %v2762
    %v2891 = vunpack.c.l.bf16 %v2763
    %v2892 = vunpack.c.l.bf16 %v2764
    %v2893 = vunpack.c.l.bf16 %v2765
    %v2894 = vunpack.c.l.bf16 %v2766
    %v2895 = vunpack.c.l.bf16 %v2767
    %v2896 = vunpack.c.l.bf16 %v2768
    %v2897 = vunpack.c.l.bf16 %v2769
    %v2898 = vunpack.c.l.bf16 %v2770
    %v2899 = vunpack.c.l.bf16 %v2771
    %v2900 = vunpack.c.l.bf16 %v2772
    %v2901 = vunpack.c.l.bf16 %v2773
    %v2902 = vunpack.c.l.bf16 %v2774
    %v2903 = vunpack.c.l.bf16 %v2775
    %v2904 = vunpack.c.l.bf16 %v2776
    %v2905 = vunpack.c.l.bf16 %v2777
    %v2906 = vunpack.c.l.bf16 %v2778
    %v2907 = vunpack.c.l.bf16 %v2779
    %v2908 = vunpack.c.l.bf16 %v2780
    %v2909 = vunpack.c.l.bf16 %v2781
    %v2910 = vunpack.c.l.bf16 %v2782
    %v2911 = vunpack.c.l.bf16 %v2783
    %v2912 = vunpack.c.l.bf16 %v2784
    %v2913 = vunpack.c.l.bf16 %v2785
    %v2914 = vunpack.c.l.bf16 %v2786
    %v2915 = vunpack.c.l.bf16 %v2787
    %v2916 = vunpack.c.l.bf16 %v2788
    %v2917 = vunpack.c.l.bf16 %v2789
    %v2918 = vunpack.c.l.bf16 %v2790
    %v2919 = vunpack.c.l.bf16 %v2791
    %v2920 = vunpack.c.l.bf16 %v2792
    %v2921 = vunpack.c.l.bf16 %v2793
    %v2922 = vunpack.c.l.bf16 %v2794
    %v2923 = vunpack.c.l.bf16 %v2795
    %v2924 = vunpack.c.l.bf16 %v2796
    %v2925 = vunpack.c.l.bf16 %v2797
    %v2926 = vunpack.c.l.bf16 %v2798
    %v2927 = vunpack.c.l.bf16 %v2799
    %v2928 = vunpack.c.l.bf16 %v2800
    %v2929 = vunpack.c.l.bf16 %v2801
    %v2930 = vunpack.c.l.bf16 %v2802
    %v2931 = vunpack.c.l.bf16 %v2803
    %v2932 = vunpack.c.l.bf16 %v2804
    %v2933 = vunpack.c.l.bf16 %v2805
    %v2934 = vunpack.c.l.bf16 %v2806
    %v2935 = vunpack.c.l.bf16 %v2807
    %v2936 = vunpack.c.l.bf16 %v2808
    %v2937 = vunpack.c.l.bf16 %v2809
    %v2938 = vunpack.c.l.bf16 %v2810
    %v2939 = vunpack.c.l.bf16 %v2811
    %v2940 = vunpack.c.l.bf16 %v2812
    %v2941 = vunpack.c.l.bf16 %v2813
    %v2942 = vunpack.c.l.bf16 %v2814
    %v2943 = vunpack.c.l.bf16 %v2815
    %v2944 = vunpack.c.l.bf16 %v2816
    %v2945 = vunpack.c.l.bf16 %v2817
    %v2946 = vunpack.c.l.bf16 %v2818
    %v2947 = vunpack.c.l.bf16 %v2819
    %v2948 = vunpack.c.l.bf16 %v2820
    %v2949 = vunpack.c.l.bf16 %v2821
    %v2950 = vunpack.c.l.bf16 %v2822
    %v2951 = vunpack.c.l.bf16 %v2823
    %v2952 = vunpack.c.l.bf16 %v2824
    %v2953 = vunpack.c.l.bf16 %v2825
    %v2954 = vunpack.c.l.bf16 %v2826
    %v2955 = vunpack.c.l.bf16 %v2827
    %v2956 = vunpack.c.l.bf16 %v2828
    %v2957 = vunpack.c.l.bf16 %v2829
    %v2958 = vunpack.c.l.bf16 %v2830
    %v2959 = vunpack.c.l.bf16 %v2831
    %v2960 = vunpack.c.l.bf16 %v2832
    %v2961 = vunpack.c.l.bf16 %v2833
    %v2962 = vunpack.c.l.bf16 %v2834
    %v2963 = vunpack.c.l.bf16 %v2835
    %v2964 = vunpack.c.l.bf16 %v2836
    %v2965 = vunpack.c.l.bf16 %v2837
    %v2966 = vunpack.c.l.bf16 %v2838
    %v2967 = vunpack.c.l.bf16 %v2839
    %v2968 = vunpack.c.l.bf16 %v2840
    %v2969 = vunpack.c.l.bf16 %v2841
    %v2970 = vunpack.c.l.bf16 %v2842
    %v2971 = vunpack.c.l.bf16 %v2843
    %v2972 = vunpack.c.l.bf16 %v2844
    %v2973 = vunpack.c.l.bf16 %v2845
    %v2974 = vunpack.c.l.bf16 %v2846
    %v2975 = vunpack.c.l.bf16 %v2847
    %v2976 = vunpack.c.l.bf16 %v2848
    %v2977 = vunpack.c.l.bf16 %v2849
    %v2978 = vunpack.c.l.bf16 %v2850
    %v2979 = vunpack.c.l.bf16 %v2851
    %v2980 = vunpack.c.l.bf16 %v2852
    %v2981 = vunpack.c.l.bf16 %v2853
    %v2982 = vunpack.c.l.bf16 %v2854
    %v2983 = vunpack.c.l.bf16 %v2855
    %v2984 = vunpack.c.l.bf16 %v2856
    %v2985 = vunpack.c.l.bf16 %v2857
    %v2986 = vunpack.c.l.bf16 %v2858
    %v2987 = vunpack.c.l.bf16 %v2859
    %v2988 = vunpack.c.l.bf16 %v2860
    %v2989 = vunpack.c.l.bf16 %v2861
    %v2990 = vunpack.c.l.bf16 %v2862
    %v2991 = vsel %vm672, %v2863, -inf
    %2992 = vmax.xlane.f32.xlu0 %v2991
    %v2993 = vpop.xlane.xlu0 %2992
    %v2994 = vsel %vm672, %v2864, -inf
    %2995 = vmax.xlane.f32.xlu0 %v2994
    %v2996 = vpop.xlane.xlu0 %2995
    %v2997 = vsel %vm672, %v2865, -inf
    %2998 = vmax.xlane.f32.xlu0 %v2997
    %v2999 = vpop.xlane.xlu0 %2998
    %v3000 = vsel %vm672, %v2866, -inf
    %3001 = vmax.xlane.f32.xlu0 %v3000
    %v3002 = vpop.xlane.xlu0 %3001
    %v3003 = vsel %vm672, %v2867, -inf
    %3004 = vmax.xlane.f32.xlu0 %v3003
    %v3005 = vpop.xlane.xlu0 %3004
    %v3006 = vsel %vm672, %v2868, -inf
    %3007 = vmax.xlane.f32.xlu0 %v3006
    %v3008 = vpop.xlane.xlu0 %3007
    %v3009 = vsel %vm672, %v2869, -inf
    %3010 = vmax.xlane.f32.xlu0 %v3009
    %v3011 = vpop.xlane.xlu0 %3010
    %v3012 = vsel %vm672, %v2870, -inf
    %3013 = vmax.xlane.f32.xlu0 %v3012
    %v3014 = vpop.xlane.xlu0 %3013
    %v3015 = vsel %vm672, %v2871, -inf
    %3016 = vmax.xlane.f32.xlu0 %v3015
    %v3017 = vpop.xlane.xlu0 %3016
    %v3018 = vsel %vm672, %v2872, -inf
    %3019 = vmax.xlane.f32.xlu0 %v3018
    %v3020 = vpop.xlane.xlu0 %3019
    %v3021 = vsel %vm672, %v2873, -inf
    %3022 = vmax.xlane.f32.xlu0 %v3021
    %v3023 = vpop.xlane.xlu0 %3022
    %v3024 = vsel %vm672, %v2874, -inf
    %3025 = vmax.xlane.f32.xlu0 %v3024
    %v3026 = vpop.xlane.xlu0 %3025
    %v3027 = vsel %vm672, %v2875, -inf
    %3028 = vmax.xlane.f32.xlu0 %v3027
    %v3029 = vpop.xlane.xlu0 %3028
    %v3030 = vsel %vm672, %v2876, -inf
    %3031 = vmax.xlane.f32.xlu0 %v3030
    %v3032 = vpop.xlane.xlu0 %3031
    %v3033 = vsel %vm672, %v2877, -inf
    %3034 = vmax.xlane.f32.xlu0 %v3033
    %v3035 = vpop.xlane.xlu0 %3034
    %v3036 = vsel %vm672, %v2878, -inf
    %3037 = vmax.xlane.f32.xlu0 %v3036
    %v3038 = vpop.xlane.xlu0 %3037
    %v3039 = vsel %vm672, %v2879, -inf
    %3040 = vmax.xlane.f32.xlu0 %v3039
    %v3041 = vpop.xlane.xlu0 %3040
    %v3042 = vsel %vm672, %v2880, -inf
    %3043 = vmax.xlane.f32.xlu0 %v3042
    %v3044 = vpop.xlane.xlu0 %3043
    %v3045 = vsel %vm672, %v2881, -inf
    %3046 = vmax.xlane.f32.xlu0 %v3045
    %v3047 = vpop.xlane.xlu0 %3046
    %v3048 = vsel %vm672, %v2882, -inf
    %3049 = vmax.xlane.f32.xlu0 %v3048
    %v3050 = vpop.xlane.xlu0 %3049
    %v3051 = vsel %vm672, %v2883, -inf
    %3052 = vmax.xlane.f32.xlu0 %v3051
    %v3053 = vpop.xlane.xlu0 %3052
    %v3054 = vsel %vm672, %v2884, -inf
    %3055 = vmax.xlane.f32.xlu0 %v3054
    %v3056 = vpop.xlane.xlu0 %3055
    %v3057 = vsel %vm672, %v2885, -inf
    %3058 = vmax.xlane.f32.xlu0 %v3057
    %v3059 = vpop.xlane.xlu0 %3058
    %v3060 = vsel %vm672, %v2886, -inf
    %3061 = vmax.xlane.f32.xlu0 %v3060
    %v3062 = vpop.xlane.xlu0 %3061
    %v3063 = vsel %vm672, %v2887, -inf
    %3064 = vmax.xlane.f32.xlu0 %v3063
    %v3065 = vpop.xlane.xlu0 %3064
    %v3066 = vsel %vm672, %v2888, -inf
    %3067 = vmax.xlane.f32.xlu0 %v3066
    %v3068 = vpop.xlane.xlu0 %3067
    %v3069 = vsel %vm672, %v2889, -inf
    %3070 = vmax.xlane.f32.xlu0 %v3069
    %v3071 = vpop.xlane.xlu0 %3070
    %v3072 = vsel %vm672, %v2890, -inf
    %3073 = vmax.xlane.f32.xlu0 %v3072
    %v3074 = vpop.xlane.xlu0 %3073
    %v3075 = vsel %vm672, %v2891, -inf
    %3076 = vmax.xlane.f32.xlu0 %v3075
    %v3077 = vpop.xlane.xlu0 %3076
    %v3078 = vsel %vm672, %v2892, -inf
    %3079 = vmax.xlane.f32.xlu0 %v3078
    %v3080 = vpop.xlane.xlu0 %3079
    %v3081 = vsel %vm672, %v2893, -inf
    %3082 = vmax.xlane.f32.xlu0 %v3081
    %v3083 = vpop.xlane.xlu0 %3082
    %v3084 = vsel %vm672, %v2894, -inf
    %3085 = vmax.xlane.f32.xlu0 %v3084
    %v3086 = vpop.xlane.xlu0 %3085
    %v3087 = vsel %vm672, %v2895, -inf
    %3088 = vmax.xlane.f32.xlu0 %v3087
    %v3089 = vpop.xlane.xlu0 %3088
    %v3090 = vsel %vm672, %v2896, -inf
    %3091 = vmax.xlane.f32.xlu0 %v3090
    %v3092 = vpop.xlane.xlu0 %3091
    %v3093 = vsel %vm672, %v2897, -inf
    %3094 = vmax.xlane.f32.xlu0 %v3093
    %v3095 = vpop.xlane.xlu0 %3094
    %v3096 = vsel %vm672, %v2898, -inf
    %3097 = vmax.xlane.f32.xlu0 %v3096
    %v3098 = vpop.xlane.xlu0 %3097
    %v3099 = vsel %vm672, %v2899, -inf
    %3100 = vmax.xlane.f32.xlu0 %v3099
    %v3101 = vpop.xlane.xlu0 %3100
    %v3102 = vsel %vm672, %v2900, -inf
    %3103 = vmax.xlane.f32.xlu0 %v3102
    %v3104 = vpop.xlane.xlu0 %3103
    %v3105 = vsel %vm672, %v2901, -inf
    %3106 = vmax.xlane.f32.xlu0 %v3105
    %v3107 = vpop.xlane.xlu0 %3106
    %v3108 = vsel %vm672, %v2902, -inf
    %3109 = vmax.xlane.f32.xlu0 %v3108
    %v3110 = vpop.xlane.xlu0 %3109
    %v3111 = vsel %vm672, %v2903, -inf
    %3112 = vmax.xlane.f32.xlu0 %v3111
    %v3113 = vpop.xlane.xlu0 %3112
    %v3114 = vsel %vm672, %v2904, -inf
    %3115 = vmax.xlane.f32.xlu0 %v3114
    %v3116 = vpop.xlane.xlu0 %3115
    %v3117 = vsel %vm672, %v2905, -inf
    %3118 = vmax.xlane.f32.xlu0 %v3117
    %v3119 = vpop.xlane.xlu0 %3118
    %v3120 = vsel %vm672, %v2906, -inf
    %3121 = vmax.xlane.f32.xlu0 %v3120
    %v3122 = vpop.xlane.xlu0 %3121
    %v3123 = vsel %vm672, %v2907, -inf
    %3124 = vmax.xlane.f32.xlu0 %v3123
    %v3125 = vpop.xlane.xlu0 %3124
    %v3126 = vsel %vm672, %v2908, -inf
    %3127 = vmax.xlane.f32.xlu0 %v3126
    %v3128 = vpop.xlane.xlu0 %3127
    %v3129 = vsel %vm672, %v2909, -inf
    %3130 = vmax.xlane.f32.xlu0 %v3129
    %v3131 = vpop.xlane.xlu0 %3130
    %v3132 = vsel %vm672, %v2910, -inf
    %3133 = vmax.xlane.f32.xlu0 %v3132
    %v3134 = vpop.xlane.xlu0 %3133
    %v3135 = vsel %vm672, %v2911, -inf
    %3136 = vmax.xlane.f32.xlu0 %v3135
    %v3137 = vpop.xlane.xlu0 %3136
    %v3138 = vsel %vm672, %v2912, -inf
    %3139 = vmax.xlane.f32.xlu0 %v3138
    %v3140 = vpop.xlane.xlu0 %3139
    %v3141 = vsel %vm672, %v2913, -inf
    %3142 = vmax.xlane.f32.xlu0 %v3141
    %v3143 = vpop.xlane.xlu0 %3142
    %v3144 = vsel %vm672, %v2914, -inf
    %3145 = vmax.xlane.f32.xlu0 %v3144
    %v3146 = vpop.xlane.xlu0 %3145
    %v3147 = vsel %vm672, %v2915, -inf
    %3148 = vmax.xlane.f32.xlu0 %v3147
    %v3149 = vpop.xlane.xlu0 %3148
    %v3150 = vsel %vm672, %v2916, -inf
    %3151 = vmax.xlane.f32.xlu0 %v3150
    %v3152 = vpop.xlane.xlu0 %3151
    %v3153 = vsel %vm672, %v2917, -inf
    %3154 = vmax.xlane.f32.xlu0 %v3153
    %v3155 = vpop.xlane.xlu0 %3154
    %v3156 = vsel %vm672, %v2918, -inf
    %3157 = vmax.xlane.f32.xlu0 %v3156
    %v3158 = vpop.xlane.xlu0 %3157
    %v3159 = vsel %vm672, %v2919, -inf
    %3160 = vmax.xlane.f32.xlu0 %v3159
    %v3161 = vpop.xlane.xlu0 %3160
    %v3162 = vsel %vm672, %v2920, -inf
    %3163 = vmax.xlane.f32.xlu0 %v3162
    %v3164 = vpop.xlane.xlu0 %3163
    %v3165 = vsel %vm672, %v2921, -inf
    %3166 = vmax.xlane.f32.xlu0 %v3165
    %v3167 = vpop.xlane.xlu0 %3166
    %v3168 = vsel %vm672, %v2922, -inf
    %3169 = vmax.xlane.f32.xlu0 %v3168
    %v3170 = vpop.xlane.xlu0 %3169
    %v3171 = vsel %vm672, %v2923, -inf
    %3172 = vmax.xlane.f32.xlu0 %v3171
    %v3173 = vpop.xlane.xlu0 %3172
    %v3174 = vsel %vm672, %v2924, -inf
    %3175 = vmax.xlane.f32.xlu0 %v3174
    %v3176 = vpop.xlane.xlu0 %3175
    %v3177 = vsel %vm672, %v2925, -inf
    %3178 = vmax.xlane.f32.xlu0 %v3177
    %v3179 = vpop.xlane.xlu0 %3178
    %v3180 = vsel %vm672, %v2926, -inf
    %3181 = vmax.xlane.f32.xlu0 %v3180
    %v3182 = vpop.xlane.xlu0 %3181
    %v3183 = vsel %vm672, %v2927, -inf
    %3184 = vmax.xlane.f32.xlu0 %v3183
    %v3185 = vpop.xlane.xlu0 %3184
    %v3186 = vsel %vm672, %v2928, -inf
    %3187 = vmax.xlane.f32.xlu0 %v3186
    %v3188 = vpop.xlane.xlu0 %3187
    %v3189 = vsel %vm672, %v2929, -inf
    %3190 = vmax.xlane.f32.xlu0 %v3189
    %v3191 = vpop.xlane.xlu0 %3190
    %v3192 = vsel %vm672, %v2930, -inf
    %3193 = vmax.xlane.f32.xlu0 %v3192
    %v3194 = vpop.xlane.xlu0 %3193
    %v3195 = vsel %vm672, %v2931, -inf
    %3196 = vmax.xlane.f32.xlu0 %v3195
    %v3197 = vpop.xlane.xlu0 %3196
    %v3198 = vsel %vm672, %v2932, -inf
    %3199 = vmax.xlane.f32.xlu0 %v3198
    %v3200 = vpop.xlane.xlu0 %3199
    %v3201 = vsel %vm672, %v2933, -inf
    %3202 = vmax.xlane.f32.xlu0 %v3201
    %v3203 = vpop.xlane.xlu0 %3202
    %v3204 = vsel %vm672, %v2934, -inf
    %3205 = vmax.xlane.f32.xlu0 %v3204
    %v3206 = vpop.xlane.xlu0 %3205
    %v3207 = vsel %vm672, %v2935, -inf
    %3208 = vmax.xlane.f32.xlu0 %v3207
    %v3209 = vpop.xlane.xlu0 %3208
    %v3210 = vsel %vm672, %v2936, -inf
    %3211 = vmax.xlane.f32.xlu0 %v3210
    %v3212 = vpop.xlane.xlu0 %3211
    %v3213 = vsel %vm672, %v2937, -inf
    %3214 = vmax.xlane.f32.xlu0 %v3213
    %v3215 = vpop.xlane.xlu0 %3214
    %v3216 = vsel %vm672, %v2938, -inf
    %3217 = vmax.xlane.f32.xlu0 %v3216
    %v3218 = vpop.xlane.xlu0 %3217
    %v3219 = vsel %vm672, %v2939, -inf
    %3220 = vmax.xlane.f32.xlu0 %v3219
    %v3221 = vpop.xlane.xlu0 %3220
    %v3222 = vsel %vm672, %v2940, -inf
    %3223 = vmax.xlane.f32.xlu0 %v3222
    %v3224 = vpop.xlane.xlu0 %3223
    %v3225 = vsel %vm672, %v2941, -inf
    %3226 = vmax.xlane.f32.xlu0 %v3225
    %v3227 = vpop.xlane.xlu0 %3226
    %v3228 = vsel %vm672, %v2942, -inf
    %3229 = vmax.xlane.f32.xlu0 %v3228
    %v3230 = vpop.xlane.xlu0 %3229
    %v3231 = vsel %vm672, %v2943, -inf
    %3232 = vmax.xlane.f32.xlu0 %v3231
    %v3233 = vpop.xlane.xlu0 %3232
    %v3234 = vsel %vm672, %v2944, -inf
    %3235 = vmax.xlane.f32.xlu0 %v3234
    %v3236 = vpop.xlane.xlu0 %3235
    %v3237 = vsel %vm672, %v2945, -inf
    %3238 = vmax.xlane.f32.xlu0 %v3237
    %v3239 = vpop.xlane.xlu0 %3238
    %v3240 = vsel %vm672, %v2946, -inf
    %3241 = vmax.xlane.f32.xlu0 %v3240
    %v3242 = vpop.xlane.xlu0 %3241
    %v3243 = vsel %vm672, %v2947, -inf
    %3244 = vmax.xlane.f32.xlu0 %v3243
    %v3245 = vpop.xlane.xlu0 %3244
    %v3246 = vsel %vm672, %v2948, -inf
    %3247 = vmax.xlane.f32.xlu0 %v3246
    %v3248 = vpop.xlane.xlu0 %3247
    %v3249 = vsel %vm672, %v2949, -inf
    %3250 = vmax.xlane.f32.xlu0 %v3249
    %v3251 = vpop.xlane.xlu0 %3250
    %v3252 = vsel %vm672, %v2950, -inf
    %3253 = vmax.xlane.f32.xlu0 %v3252
    %v3254 = vpop.xlane.xlu0 %3253
    %v3255 = vsel %vm672, %v2951, -inf
    %3256 = vmax.xlane.f32.xlu0 %v3255
    %v3257 = vpop.xlane.xlu0 %3256
    %v3258 = vsel %vm672, %v2952, -inf
    %3259 = vmax.xlane.f32.xlu0 %v3258
    %v3260 = vpop.xlane.xlu0 %3259
    %v3261 = vsel %vm672, %v2953, -inf
    %3262 = vmax.xlane.f32.xlu0 %v3261
    %v3263 = vpop.xlane.xlu0 %3262
    %v3264 = vsel %vm672, %v2954, -inf
    %3265 = vmax.xlane.f32.xlu0 %v3264
    %v3266 = vpop.xlane.xlu0 %3265
    %v3267 = vsel %vm672, %v2955, -inf
    %3268 = vmax.xlane.f32.xlu0 %v3267
    %v3269 = vpop.xlane.xlu0 %3268
    %v3270 = vsel %vm672, %v2956, -inf
    %3271 = vmax.xlane.f32.xlu0 %v3270
    %v3272 = vpop.xlane.xlu0 %3271
    %v3273 = vsel %vm672, %v2957, -inf
    %3274 = vmax.xlane.f32.xlu0 %v3273
    %v3275 = vpop.xlane.xlu0 %3274
    %v3276 = vsel %vm672, %v2958, -inf
    %3277 = vmax.xlane.f32.xlu0 %v3276
    %v3278 = vpop.xlane.xlu0 %3277
    %v3279 = vsel %vm672, %v2959, -inf
    %3280 = vmax.xlane.f32.xlu0 %v3279
    %v3281 = vpop.xlane.xlu0 %3280
    %v3282 = vsel %vm672, %v2960, -inf
    %3283 = vmax.xlane.f32.xlu0 %v3282
    %v3284 = vpop.xlane.xlu0 %3283
    %v3285 = vsel %vm672, %v2961, -inf
    %3286 = vmax.xlane.f32.xlu0 %v3285
    %v3287 = vpop.xlane.xlu0 %3286
    %v3288 = vsel %vm672, %v2962, -inf
    %3289 = vmax.xlane.f32.xlu0 %v3288
    %v3290 = vpop.xlane.xlu0 %3289
    %v3291 = vsel %vm672, %v2963, -inf
    %3292 = vmax.xlane.f32.xlu0 %v3291
    %v3293 = vpop.xlane.xlu0 %3292
    %v3294 = vsel %vm672, %v2964, -inf
    %3295 = vmax.xlane.f32.xlu0 %v3294
    %v3296 = vpop.xlane.xlu0 %3295
    %v3297 = vsel %vm672, %v2965, -inf
    %3298 = vmax.xlane.f32.xlu0 %v3297
    %v3299 = vpop.xlane.xlu0 %3298
    %v3300 = vsel %vm672, %v2966, -inf
    %3301 = vmax.xlane.f32.xlu0 %v3300
    %v3302 = vpop.xlane.xlu0 %3301
    %v3303 = vsel %vm672, %v2967, -inf
    %3304 = vmax.xlane.f32.xlu0 %v3303
    %v3305 = vpop.xlane.xlu0 %3304
    %v3306 = vsel %vm672, %v2968, -inf
    %3307 = vmax.xlane.f32.xlu0 %v3306
    %v3308 = vpop.xlane.xlu0 %3307
    %v3309 = vsel %vm672, %v2969, -inf
    %3310 = vmax.xlane.f32.xlu0 %v3309
    %v3311 = vpop.xlane.xlu0 %3310
    %v3312 = vsel %vm672, %v2970, -inf
    %3313 = vmax.xlane.f32.xlu0 %v3312
    %v3314 = vpop.xlane.xlu0 %3313
    %v3315 = vsel %vm672, %v2971, -inf
    %3316 = vmax.xlane.f32.xlu0 %v3315
    %v3317 = vpop.xlane.xlu0 %3316
    %v3318 = vsel %vm672, %v2972, -inf
    %3319 = vmax.xlane.f32.xlu0 %v3318
    %v3320 = vpop.xlane.xlu0 %3319
    %v3321 = vsel %vm672, %v2973, -inf
    %3322 = vmax.xlane.f32.xlu0 %v3321
    %v3323 = vpop.xlane.xlu0 %3322
    %v3324 = vsel %vm672, %v2974, -inf
    %3325 = vmax.xlane.f32.xlu0 %v3324
    %v3326 = vpop.xlane.xlu0 %3325
    %v3327 = vsel %vm672, %v2975, -inf
    %3328 = vmax.xlane.f32.xlu0 %v3327
    %v3329 = vpop.xlane.xlu0 %3328
    %v3330 = vsel %vm672, %v2976, -inf
    %3331 = vmax.xlane.f32.xlu0 %v3330
    %v3332 = vpop.xlane.xlu0 %3331
    %v3333 = vsel %vm672, %v2977, -inf
    %3334 = vmax.xlane.f32.xlu0 %v3333
    %v3335 = vpop.xlane.xlu0 %3334
    %v3336 = vsel %vm672, %v2978, -inf
    %3337 = vmax.xlane.f32.xlu0 %v3336
    %v3338 = vpop.xlane.xlu0 %3337
    %v3339 = vsel %vm672, %v2979, -inf
    %3340 = vmax.xlane.f32.xlu0 %v3339
    %v3341 = vpop.xlane.xlu0 %3340
    %v3342 = vsel %vm672, %v2980, -inf
    %3343 = vmax.xlane.f32.xlu0 %v3342
    %v3344 = vpop.xlane.xlu0 %3343
    %v3345 = vsel %vm672, %v2981, -inf
    %3346 = vmax.xlane.f32.xlu0 %v3345
    %v3347 = vpop.xlane.xlu0 %3346
    %v3348 = vsel %vm672, %v2982, -inf
    %3349 = vmax.xlane.f32.xlu0 %v3348
    %v3350 = vpop.xlane.xlu0 %3349
    %v3351 = vsel %vm672, %v2983, -inf
    %3352 = vmax.xlane.f32.xlu0 %v3351
    %v3353 = vpop.xlane.xlu0 %3352
    %v3354 = vsel %vm672, %v2984, -inf
    %3355 = vmax.xlane.f32.xlu0 %v3354
    %v3356 = vpop.xlane.xlu0 %3355
    %v3357 = vsel %vm672, %v2985, -inf
    %3358 = vmax.xlane.f32.xlu0 %v3357
    %v3359 = vpop.xlane.xlu0 %3358
    %v3360 = vsel %vm672, %v2986, -inf
    %3361 = vmax.xlane.f32.xlu0 %v3360
    %v3362 = vpop.xlane.xlu0 %3361
    %v3363 = vsel %vm672, %v2987, -inf
    %3364 = vmax.xlane.f32.xlu0 %v3363
    %v3365 = vpop.xlane.xlu0 %3364
    %v3366 = vsel %vm672, %v2988, -inf
    %3367 = vmax.xlane.f32.xlu0 %v3366
    %v3368 = vpop.xlane.xlu0 %3367
    %v3369 = vsel %vm672, %v2989, -inf
    %3370 = vmax.xlane.f32.xlu0 %v3369
    %v3371 = vpop.xlane.xlu0 %3370
    %v3372 = vsel %vm672, %v2990, -inf
    %3373 = vmax.xlane.f32.xlu0 %v3372
    %v3374 = vpop.xlane.xlu0 %3373
    %v3375 = vpack.c.bf16 %v2993, %v2993
    %v3376 = vpack.c.bf16 %v2996, %v2996
    %v3377 = vpack.c.bf16 %v2999, %v2999
    %v3378 = vpack.c.bf16 %v3002, %v3002
    %v3379 = vpack.c.bf16 %v3005, %v3005
    %v3380 = vpack.c.bf16 %v3008, %v3008
    %v3381 = vpack.c.bf16 %v3011, %v3011
    %v3382 = vpack.c.bf16 %v3014, %v3014
    %v3383 = vpack.c.bf16 %v3017, %v3017
    %v3384 = vpack.c.bf16 %v3020, %v3020
    %v3385 = vpack.c.bf16 %v3023, %v3023
    %v3386 = vpack.c.bf16 %v3026, %v3026
    %v3387 = vpack.c.bf16 %v3029, %v3029
    %v3388 = vpack.c.bf16 %v3032, %v3032
    %v3389 = vpack.c.bf16 %v3035, %v3035
    %v3390 = vpack.c.bf16 %v3038, %v3038
    %v3391 = vpack.c.bf16 %v3041, %v3041
    %v3392 = vpack.c.bf16 %v3044, %v3044
    %v3393 = vpack.c.bf16 %v3047, %v3047
    %v3394 = vpack.c.bf16 %v3050, %v3050
    %v3395 = vpack.c.bf16 %v3053, %v3053
    %v3396 = vpack.c.bf16 %v3056, %v3056
    %v3397 = vpack.c.bf16 %v3059, %v3059
    %v3398 = vpack.c.bf16 %v3062, %v3062
    %v3399 = vpack.c.bf16 %v3065, %v3065
    %v3400 = vpack.c.bf16 %v3068, %v3068
    %v3401 = vpack.c.bf16 %v3071, %v3071
    %v3402 = vpack.c.bf16 %v3074, %v3074
    %v3403 = vpack.c.bf16 %v3077, %v3077
    %v3404 = vpack.c.bf16 %v3080, %v3080
    %v3405 = vpack.c.bf16 %v3083, %v3083
    %v3406 = vpack.c.bf16 %v3086, %v3086
    %v3407 = vpack.c.bf16 %v3089, %v3089
    %v3408 = vpack.c.bf16 %v3092, %v3092
    %v3409 = vpack.c.bf16 %v3095, %v3095
    %v3410 = vpack.c.bf16 %v3098, %v3098
    %v3411 = vpack.c.bf16 %v3101, %v3101
    %v3412 = vpack.c.bf16 %v3104, %v3104
    %v3413 = vpack.c.bf16 %v3107, %v3107
    %v3414 = vpack.c.bf16 %v3110, %v3110
    %v3415 = vpack.c.bf16 %v3113, %v3113
    %v3416 = vpack.c.bf16 %v3116, %v3116
    %v3417 = vpack.c.bf16 %v3119, %v3119
    %v3418 = vpack.c.bf16 %v3122, %v3122
    %v3419 = vpack.c.bf16 %v3125, %v3125
    %v3420 = vpack.c.bf16 %v3128, %v3128
    %v3421 = vpack.c.bf16 %v3131, %v3131
    %v3422 = vpack.c.bf16 %v3134, %v3134
    %v3423 = vpack.c.bf16 %v3137, %v3137
    %v3424 = vpack.c.bf16 %v3140, %v3140
    %v3425 = vpack.c.bf16 %v3143, %v3143
    %v3426 = vpack.c.bf16 %v3146, %v3146
    %v3427 = vpack.c.bf16 %v3149, %v3149
    %v3428 = vpack.c.bf16 %v3152, %v3152
    %v3429 = vpack.c.bf16 %v3155, %v3155
    %v3430 = vpack.c.bf16 %v3158, %v3158
    %v3431 = vpack.c.bf16 %v3161, %v3161
    %v3432 = vpack.c.bf16 %v3164, %v3164
    %v3433 = vpack.c.bf16 %v3167, %v3167
    %v3434 = vpack.c.bf16 %v3170, %v3170
    %v3435 = vpack.c.bf16 %v3173, %v3173
    %v3436 = vpack.c.bf16 %v3176, %v3176
    %v3437 = vpack.c.bf16 %v3179, %v3179
    %v3438 = vpack.c.bf16 %v3182, %v3182
    %v3439 = vpack.c.bf16 %v3185, %v3185
    %v3440 = vpack.c.bf16 %v3188, %v3188
    %v3441 = vpack.c.bf16 %v3191, %v3191
    %v3442 = vpack.c.bf16 %v3194, %v3194
    %v3443 = vpack.c.bf16 %v3197, %v3197
    %v3444 = vpack.c.bf16 %v3200, %v3200
    %v3445 = vpack.c.bf16 %v3203, %v3203
    %v3446 = vpack.c.bf16 %v3206, %v3206
    %v3447 = vpack.c.bf16 %v3209, %v3209
    %v3448 = vpack.c.bf16 %v3212, %v3212
    %v3449 = vpack.c.bf16 %v3215, %v3215
    %v3450 = vpack.c.bf16 %v3218, %v3218
    %v3451 = vpack.c.bf16 %v3221, %v3221
    %v3452 = vpack.c.bf16 %v3224, %v3224
    %v3453 = vpack.c.bf16 %v3227, %v3227
    %v3454 = vpack.c.bf16 %v3230, %v3230
    %v3455 = vpack.c.bf16 %v3233, %v3233
    %v3456 = vpack.c.bf16 %v3236, %v3236
    %v3457 = vpack.c.bf16 %v3239, %v3239
    %v3458 = vpack.c.bf16 %v3242, %v3242
    %v3459 = vpack.c.bf16 %v3245, %v3245
    %v3460 = vpack.c.bf16 %v3248, %v3248
    %v3461 = vpack.c.bf16 %v3251, %v3251
    %v3462 = vpack.c.bf16 %v3254, %v3254
    %v3463 = vpack.c.bf16 %v3257, %v3257
    %v3464 = vpack.c.bf16 %v3260, %v3260
    %v3465 = vpack.c.bf16 %v3263, %v3263
    %v3466 = vpack.c.bf16 %v3266, %v3266
    %v3467 = vpack.c.bf16 %v3269, %v3269
    %v3468 = vpack.c.bf16 %v3272, %v3272
    %v3469 = vpack.c.bf16 %v3275, %v3275
    %v3470 = vpack.c.bf16 %v3278, %v3278
    %v3471 = vpack.c.bf16 %v3281, %v3281
    %v3472 = vpack.c.bf16 %v3284, %v3284
    %v3473 = vpack.c.bf16 %v3287, %v3287
    %v3474 = vpack.c.bf16 %v3290, %v3290
    %v3475 = vpack.c.bf16 %v3293, %v3293
    %v3476 = vpack.c.bf16 %v3296, %v3296
    %v3477 = vpack.c.bf16 %v3299, %v3299
    %v3478 = vpack.c.bf16 %v3302, %v3302
    %v3479 = vpack.c.bf16 %v3305, %v3305
    %v3480 = vpack.c.bf16 %v3308, %v3308
    %v3481 = vpack.c.bf16 %v3311, %v3311
    %v3482 = vpack.c.bf16 %v3314, %v3314
    %v3483 = vpack.c.bf16 %v3317, %v3317
    %v3484 = vpack.c.bf16 %v3320, %v3320
    %v3485 = vpack.c.bf16 %v3323, %v3323
    %v3486 = vpack.c.bf16 %v3326, %v3326
    %v3487 = vpack.c.bf16 %v3329, %v3329
    %v3488 = vpack.c.bf16 %v3332, %v3332
    %v3489 = vpack.c.bf16 %v3335, %v3335
    %v3490 = vpack.c.bf16 %v3338, %v3338
    %v3491 = vpack.c.bf16 %v3341, %v3341
    %v3492 = vpack.c.bf16 %v3344, %v3344
    %v3493 = vpack.c.bf16 %v3347, %v3347
    %v3494 = vpack.c.bf16 %v3350, %v3350
    %v3495 = vpack.c.bf16 %v3353, %v3353
    %v3496 = vpack.c.bf16 %v3356, %v3356
    %v3497 = vpack.c.bf16 %v3359, %v3359
    %v3498 = vpack.c.bf16 %v3362, %v3362
    %v3499 = vpack.c.bf16 %v3365, %v3365
    %v3500 = vpack.c.bf16 %v3368, %v3368
    %v3501 = vpack.c.bf16 %v3371, %v3371
    %v3502 = vpack.c.bf16 %v3374, %v3374
    %v3503 = vunpack.c.l.bf16 %v3375
    %v3504 = vunpack.c.l.bf16 %v3376
    %v3505 = vunpack.c.l.bf16 %v3377
    %v3506 = vunpack.c.l.bf16 %v3378
    %v3507 = vunpack.c.l.bf16 %v3379
    %v3508 = vunpack.c.l.bf16 %v3380
    %v3509 = vunpack.c.l.bf16 %v3381
    %v3510 = vunpack.c.l.bf16 %v3382
    %v3511 = vunpack.c.l.bf16 %v3383
    %v3512 = vunpack.c.l.bf16 %v3384
    %v3513 = vunpack.c.l.bf16 %v3385
    %v3514 = vunpack.c.l.bf16 %v3386
    %v3515 = vunpack.c.l.bf16 %v3387
    %v3516 = vunpack.c.l.bf16 %v3388
    %v3517 = vunpack.c.l.bf16 %v3389
    %v3518 = vunpack.c.l.bf16 %v3390
    %v3519 = vunpack.c.l.bf16 %v3391
    %v3520 = vunpack.c.l.bf16 %v3392
    %v3521 = vunpack.c.l.bf16 %v3393
    %v3522 = vunpack.c.l.bf16 %v3394
    %v3523 = vunpack.c.l.bf16 %v3395
    %v3524 = vunpack.c.l.bf16 %v3396
    %v3525 = vunpack.c.l.bf16 %v3397
    %v3526 = vunpack.c.l.bf16 %v3398
    %v3527 = vunpack.c.l.bf16 %v3399
    %v3528 = vunpack.c.l.bf16 %v3400
    %v3529 = vunpack.c.l.bf16 %v3401
    %v3530 = vunpack.c.l.bf16 %v3402
    %v3531 = vunpack.c.l.bf16 %v3403
    %v3532 = vunpack.c.l.bf16 %v3404
    %v3533 = vunpack.c.l.bf16 %v3405
    %v3534 = vunpack.c.l.bf16 %v3406
    %v3535 = vunpack.c.l.bf16 %v3407
    %v3536 = vunpack.c.l.bf16 %v3408
    %v3537 = vunpack.c.l.bf16 %v3409
    %v3538 = vunpack.c.l.bf16 %v3410
    %v3539 = vunpack.c.l.bf16 %v3411
    %v3540 = vunpack.c.l.bf16 %v3412
    %v3541 = vunpack.c.l.bf16 %v3413
    %v3542 = vunpack.c.l.bf16 %v3414
    %v3543 = vunpack.c.l.bf16 %v3415
    %v3544 = vunpack.c.l.bf16 %v3416
    %v3545 = vunpack.c.l.bf16 %v3417
    %v3546 = vunpack.c.l.bf16 %v3418
    %v3547 = vunpack.c.l.bf16 %v3419
    %v3548 = vunpack.c.l.bf16 %v3420
    %v3549 = vunpack.c.l.bf16 %v3421
    %v3550 = vunpack.c.l.bf16 %v3422
    %v3551 = vunpack.c.l.bf16 %v3423
    %v3552 = vunpack.c.l.bf16 %v3424
    %v3553 = vunpack.c.l.bf16 %v3425
    %v3554 = vunpack.c.l.bf16 %v3426
    %v3555 = vunpack.c.l.bf16 %v3427
    %v3556 = vunpack.c.l.bf16 %v3428
    %v3557 = vunpack.c.l.bf16 %v3429
    %v3558 = vunpack.c.l.bf16 %v3430
    %v3559 = vunpack.c.l.bf16 %v3431
    %v3560 = vunpack.c.l.bf16 %v3432
    %v3561 = vunpack.c.l.bf16 %v3433
    %v3562 = vunpack.c.l.bf16 %v3434
    %v3563 = vunpack.c.l.bf16 %v3435
    %v3564 = vunpack.c.l.bf16 %v3436
    %v3565 = vunpack.c.l.bf16 %v3437
    %v3566 = vunpack.c.l.bf16 %v3438
    %v3567 = vunpack.c.l.bf16 %v3439
    %v3568 = vunpack.c.l.bf16 %v3440
    %v3569 = vunpack.c.l.bf16 %v3441
    %v3570 = vunpack.c.l.bf16 %v3442
    %v3571 = vunpack.c.l.bf16 %v3443
    %v3572 = vunpack.c.l.bf16 %v3444
    %v3573 = vunpack.c.l.bf16 %v3445
    %v3574 = vunpack.c.l.bf16 %v3446
    %v3575 = vunpack.c.l.bf16 %v3447
    %v3576 = vunpack.c.l.bf16 %v3448
    %v3577 = vunpack.c.l.bf16 %v3449
    %v3578 = vunpack.c.l.bf16 %v3450
    %v3579 = vunpack.c.l.bf16 %v3451
    %v3580 = vunpack.c.l.bf16 %v3452
    %v3581 = vunpack.c.l.bf16 %v3453
    %v3582 = vunpack.c.l.bf16 %v3454
    %v3583 = vunpack.c.l.bf16 %v3455
    %v3584 = vunpack.c.l.bf16 %v3456
    %v3585 = vunpack.c.l.bf16 %v3457
    %v3586 = vunpack.c.l.bf16 %v3458
    %v3587 = vunpack.c.l.bf16 %v3459
    %v3588 = vunpack.c.l.bf16 %v3460
    %v3589 = vunpack.c.l.bf16 %v3461
    %v3590 = vunpack.c.l.bf16 %v3462
    %v3591 = vunpack.c.l.bf16 %v3463
    %v3592 = vunpack.c.l.bf16 %v3464
    %v3593 = vunpack.c.l.bf16 %v3465
    %v3594 = vunpack.c.l.bf16 %v3466
    %v3595 = vunpack.c.l.bf16 %v3467
    %v3596 = vunpack.c.l.bf16 %v3468
    %v3597 = vunpack.c.l.bf16 %v3469
    %v3598 = vunpack.c.l.bf16 %v3470
    %v3599 = vunpack.c.l.bf16 %v3471
    %v3600 = vunpack.c.l.bf16 %v3472
    %v3601 = vunpack.c.l.bf16 %v3473
    %v3602 = vunpack.c.l.bf16 %v3474
    %v3603 = vunpack.c.l.bf16 %v3475
    %v3604 = vunpack.c.l.bf16 %v3476
    %v3605 = vunpack.c.l.bf16 %v3477
    %v3606 = vunpack.c.l.bf16 %v3478
    %v3607 = vunpack.c.l.bf16 %v3479
    %v3608 = vunpack.c.l.bf16 %v3480
    %v3609 = vunpack.c.l.bf16 %v3481
    %v3610 = vunpack.c.l.bf16 %v3482
    %v3611 = vunpack.c.l.bf16 %v3483
    %v3612 = vunpack.c.l.bf16 %v3484
    %v3613 = vunpack.c.l.bf16 %v3485
    %v3614 = vunpack.c.l.bf16 %v3486
    %v3615 = vunpack.c.l.bf16 %v3487
    %v3616 = vunpack.c.l.bf16 %v3488
    %v3617 = vunpack.c.l.bf16 %v3489
    %v3618 = vunpack.c.l.bf16 %v3490
    %v3619 = vunpack.c.l.bf16 %v3491
    %v3620 = vunpack.c.l.bf16 %v3492
    %v3621 = vunpack.c.l.bf16 %v3493
    %v3622 = vunpack.c.l.bf16 %v3494
    %v3623 = vunpack.c.l.bf16 %v3495
    %v3624 = vunpack.c.l.bf16 %v3496
    %v3625 = vunpack.c.l.bf16 %v3497
    %v3626 = vunpack.c.l.bf16 %v3498
    %v3627 = vunpack.c.l.bf16 %v3499
    %v3628 = vunpack.c.l.bf16 %v3500
    %v3629 = vunpack.c.l.bf16 %v3501
    %v3630 = vunpack.c.l.bf16 %v3502
    %v3759 = vperm.slane %v3503, %v1058
    %v3760 = vperm.slane %v3504, %v1060
    %v3761 = vsel %vm1062, %v3760, %v3759
    %v3762 = vperm.slane %v3505, %v1064
    %v3763 = vsel %vm1066, %v3762, %v3761
    %v3764 = vperm.slane %v3506, %v1068
    %v3765 = vsel %vm1070, %v3764, %v3763
    %v3766 = vperm.slane %v3507, %v2349
    %v3767 = vsel %vm2351, %v3766, %v3765
    %v3768 = vperm.slane %v3508, %v2353
    %v3769 = vsel %vm2355, %v3768, %v3767
    %v3770 = vperm.slane %v3509, %v2357
    %v3771 = vsel %vm2359, %v3770, %v3769
    %v3772 = vperm.slane %v3510, %v2361
    %v3773 = vsel %vm2363, %v3772, %v3771
    %v3774 = vperm.slane %v3511, %v1058
    %v3775 = vperm.slane %v3512, %v1060
    %v3776 = vsel %vm1062, %v3775, %v3774
    %v3777 = vperm.slane %v3513, %v1064
    %v3778 = vsel %vm1066, %v3777, %v3776
    %v3779 = vperm.slane %v3514, %v1068
    %v3780 = vsel %vm1070, %v3779, %v3778
    %v3781 = vperm.slane %v3515, %v2349
    %v3782 = vsel %vm2351, %v3781, %v3780
    %v3783 = vperm.slane %v3516, %v2353
    %v3784 = vsel %vm2355, %v3783, %v3782
    %v3785 = vperm.slane %v3517, %v2357
    %v3786 = vsel %vm2359, %v3785, %v3784
    %v3787 = vperm.slane %v3518, %v2361
    %v3788 = vsel %vm2363, %v3787, %v3786
    %v3789 = vperm.slane %v3519, %v1058
    %v3790 = vperm.slane %v3520, %v1060
    %v3791 = vsel %vm1062, %v3790, %v3789
    %v3792 = vperm.slane %v3521, %v1064
    %v3793 = vsel %vm1066, %v3792, %v3791
    %v3794 = vperm.slane %v3522, %v1068
    %v3795 = vsel %vm1070, %v3794, %v3793
    %v3796 = vperm.slane %v3523, %v2349
    %v3797 = vsel %vm2351, %v3796, %v3795
    %v3798 = vperm.slane %v3524, %v2353
    %v3799 = vsel %vm2355, %v3798, %v3797
    %v3800 = vperm.slane %v3525, %v2357
    %v3801 = vsel %vm2359, %v3800, %v3799
    %v3802 = vperm.slane %v3526, %v2361
    %v3803 = vsel %vm2363, %v3802, %v3801
    %v3804 = vperm.slane %v3527, %v1058
    %v3805 = vperm.slane %v3528, %v1060
    %v3806 = vsel %vm1062, %v3805, %v3804
    %v3807 = vperm.slane %v3529, %v1064
    %v3808 = vsel %vm1066, %v3807, %v3806
    %v3809 = vperm.slane %v3530, %v1068
    %v3810 = vsel %vm1070, %v3809, %v3808
    %v3811 = vperm.slane %v3531, %v2349
    %v3812 = vsel %vm2351, %v3811, %v3810
    %v3813 = vperm.slane %v3532, %v2353
    %v3814 = vsel %vm2355, %v3813, %v3812
    %v3815 = vperm.slane %v3533, %v2357
    %v3816 = vsel %vm2359, %v3815, %v3814
    %v3817 = vperm.slane %v3534, %v2361
    %v3818 = vsel %vm2363, %v3817, %v3816
    %v3819 = vperm.slane %v3535, %v1058
    %v3820 = vperm.slane %v3536, %v1060
    %v3821 = vsel %vm1062, %v3820, %v3819
    %v3822 = vperm.slane %v3537, %v1064
    %v3823 = vsel %vm1066, %v3822, %v3821
    %v3824 = vperm.slane %v3538, %v1068
    %v3825 = vsel %vm1070, %v3824, %v3823
    %v3826 = vperm.slane %v3539, %v2349
    %v3827 = vsel %vm2351, %v3826, %v3825
    %v3828 = vperm.slane %v3540, %v2353
    %v3829 = vsel %vm2355, %v3828, %v3827
    %v3830 = vperm.slane %v3541, %v2357
    %v3831 = vsel %vm2359, %v3830, %v3829
    %v3832 = vperm.slane %v3542, %v2361
    %v3833 = vsel %vm2363, %v3832, %v3831
    %v3834 = vperm.slane %v3543, %v1058
    %v3835 = vperm.slane %v3544, %v1060
    %v3836 = vsel %vm1062, %v3835, %v3834
    %v3837 = vperm.slane %v3545, %v1064
    %v3838 = vsel %vm1066, %v3837, %v3836
    %v3839 = vperm.slane %v3546, %v1068
    %v3840 = vsel %vm1070, %v3839, %v3838
    %v3841 = vperm.slane %v3547, %v2349
    %v3842 = vsel %vm2351, %v3841, %v3840
    %v3843 = vperm.slane %v3548, %v2353
    %v3844 = vsel %vm2355, %v3843, %v3842
    %v3845 = vperm.slane %v3549, %v2357
    %v3846 = vsel %vm2359, %v3845, %v3844
    %v3847 = vperm.slane %v3550, %v2361
    %v3848 = vsel %vm2363, %v3847, %v3846
    %v3849 = vperm.slane %v3551, %v1058
    %v3850 = vperm.slane %v3552, %v1060
    %v3851 = vsel %vm1062, %v3850, %v3849
    %v3852 = vperm.slane %v3553, %v1064
    %v3853 = vsel %vm1066, %v3852, %v3851
    %v3854 = vperm.slane %v3554, %v1068
    %v3855 = vsel %vm1070, %v3854, %v3853
    %v3856 = vperm.slane %v3555, %v2349
    %v3857 = vsel %vm2351, %v3856, %v3855
    %v3858 = vperm.slane %v3556, %v2353
    %v3859 = vsel %vm2355, %v3858, %v3857
    %v3860 = vperm.slane %v3557, %v2357
    %v3861 = vsel %vm2359, %v3860, %v3859
    %v3862 = vperm.slane %v3558, %v2361
    %v3863 = vsel %vm2363, %v3862, %v3861
    %v3864 = vperm.slane %v3559, %v1058
    %v3865 = vperm.slane %v3560, %v1060
    %v3866 = vsel %vm1062, %v3865, %v3864
    %v3867 = vperm.slane %v3561, %v1064
    %v3868 = vsel %vm1066, %v3867, %v3866
    %v3869 = vperm.slane %v3562, %v1068
    %v3870 = vsel %vm1070, %v3869, %v3868
    %v3871 = vperm.slane %v3563, %v2349
    %v3872 = vsel %vm2351, %v3871, %v3870
    %v3873 = vperm.slane %v3564, %v2353
    %v3874 = vsel %vm2355, %v3873, %v3872
    %v3875 = vperm.slane %v3565, %v2357
    %v3876 = vsel %vm2359, %v3875, %v3874
    %v3877 = vperm.slane %v3566, %v2361
    %v3878 = vsel %vm2363, %v3877, %v3876
    %v3879 = vperm.slane %v3567, %v1058
    %v3880 = vperm.slane %v3568, %v1060
    %v3881 = vsel %vm1062, %v3880, %v3879
    %v3882 = vperm.slane %v3569, %v1064
    %v3883 = vsel %vm1066, %v3882, %v3881
    %v3884 = vperm.slane %v3570, %v1068
    %v3885 = vsel %vm1070, %v3884, %v3883
    %v3886 = vperm.slane %v3571, %v2349
    %v3887 = vsel %vm2351, %v3886, %v3885
    %v3888 = vperm.slane %v3572, %v2353
    %v3889 = vsel %vm2355, %v3888, %v3887
    %v3890 = vperm.slane %v3573, %v2357
    %v3891 = vsel %vm2359, %v3890, %v3889
    %v3892 = vperm.slane %v3574, %v2361
    %v3893 = vsel %vm2363, %v3892, %v3891
    %v3894 = vperm.slane %v3575, %v1058
    %v3895 = vperm.slane %v3576, %v1060
    %v3896 = vsel %vm1062, %v3895, %v3894
    %v3897 = vperm.slane %v3577, %v1064
    %v3898 = vsel %vm1066, %v3897, %v3896
    %v3899 = vperm.slane %v3578, %v1068
    %v3900 = vsel %vm1070, %v3899, %v3898
    %v3901 = vperm.slane %v3579, %v2349
    %v3902 = vsel %vm2351, %v3901, %v3900
    %v3903 = vperm.slane %v3580, %v2353
    %v3904 = vsel %vm2355, %v3903, %v3902
    %v3905 = vperm.slane %v3581, %v2357
    %v3906 = vsel %vm2359, %v3905, %v3904
    %v3907 = vperm.slane %v3582, %v2361
    %v3908 = vsel %vm2363, %v3907, %v3906
    %v3909 = vperm.slane %v3583, %v1058
    %v3910 = vperm.slane %v3584, %v1060
    %v3911 = vsel %vm1062, %v3910, %v3909
    %v3912 = vperm.slane %v3585, %v1064
    %v3913 = vsel %vm1066, %v3912, %v3911
    %v3914 = vperm.slane %v3586, %v1068
    %v3915 = vsel %vm1070, %v3914, %v3913
    %v3916 = vperm.slane %v3587, %v2349
    %v3917 = vsel %vm2351, %v3916, %v3915
    %v3918 = vperm.slane %v3588, %v2353
    %v3919 = vsel %vm2355, %v3918, %v3917
    %v3920 = vperm.slane %v3589, %v2357
    %v3921 = vsel %vm2359, %v3920, %v3919
    %v3922 = vperm.slane %v3590, %v2361
    %v3923 = vsel %vm2363, %v3922, %v3921
    %v3924 = vperm.slane %v3591, %v1058
    %v3925 = vperm.slane %v3592, %v1060
    %v3926 = vsel %vm1062, %v3925, %v3924
    %v3927 = vperm.slane %v3593, %v1064
    %v3928 = vsel %vm1066, %v3927, %v3926
    %v3929 = vperm.slane %v3594, %v1068
    %v3930 = vsel %vm1070, %v3929, %v3928
    %v3931 = vperm.slane %v3595, %v2349
    %v3932 = vsel %vm2351, %v3931, %v3930
    %v3933 = vperm.slane %v3596, %v2353
    %v3934 = vsel %vm2355, %v3933, %v3932
    %v3935 = vperm.slane %v3597, %v2357
    %v3936 = vsel %vm2359, %v3935, %v3934
    %v3937 = vperm.slane %v3598, %v2361
    %v3938 = vsel %vm2363, %v3937, %v3936
    %v3939 = vperm.slane %v3599, %v1058
    %v3940 = vperm.slane %v3600, %v1060
    %v3941 = vsel %vm1062, %v3940, %v3939
    %v3942 = vperm.slane %v3601, %v1064
    %v3943 = vsel %vm1066, %v3942, %v3941
    %v3944 = vperm.slane %v3602, %v1068
    %v3945 = vsel %vm1070, %v3944, %v3943
    %v3946 = vperm.slane %v3603, %v2349
    %v3947 = vsel %vm2351, %v3946, %v3945
    %v3948 = vperm.slane %v3604, %v2353
    %v3949 = vsel %vm2355, %v3948, %v3947
    %v3950 = vperm.slane %v3605, %v2357
    %v3951 = vsel %vm2359, %v3950, %v3949
    %v3952 = vperm.slane %v3606, %v2361
    %v3953 = vsel %vm2363, %v3952, %v3951
    %v3954 = vperm.slane %v3607, %v1058
    %v3955 = vperm.slane %v3608, %v1060
    %v3956 = vsel %vm1062, %v3955, %v3954
    %v3957 = vperm.slane %v3609, %v1064
    %v3958 = vsel %vm1066, %v3957, %v3956
    %v3959 = vperm.slane %v3610, %v1068
    %v3960 = vsel %vm1070, %v3959, %v3958
    %v3961 = vperm.slane %v3611, %v2349
    %v3962 = vsel %vm2351, %v3961, %v3960
    %v3963 = vperm.slane %v3612, %v2353
    %v3964 = vsel %vm2355, %v3963, %v3962
    %v3965 = vperm.slane %v3613, %v2357
    %v3966 = vsel %vm2359, %v3965, %v3964
    %v3967 = vperm.slane %v3614, %v2361
    %v3968 = vsel %vm2363, %v3967, %v3966
    %v3969 = vperm.slane %v3615, %v1058
    %v3970 = vperm.slane %v3616, %v1060
    %v3971 = vsel %vm1062, %v3970, %v3969
    %v3972 = vperm.slane %v3617, %v1064
    %v3973 = vsel %vm1066, %v3972, %v3971
    %v3974 = vperm.slane %v3618, %v1068
    %v3975 = vsel %vm1070, %v3974, %v3973
    %v3976 = vperm.slane %v3619, %v2349
    %v3977 = vsel %vm2351, %v3976, %v3975
    %v3978 = vperm.slane %v3620, %v2353
    %v3979 = vsel %vm2355, %v3978, %v3977
    %v3980 = vperm.slane %v3621, %v2357
    %v3981 = vsel %vm2359, %v3980, %v3979
    %v3982 = vperm.slane %v3622, %v2361
    %v3983 = vsel %vm2363, %v3982, %v3981
    %v3984 = vperm.slane %v3623, %v1058
    %v3985 = vperm.slane %v3624, %v1060
    %v3986 = vsel %vm1062, %v3985, %v3984
    %v3987 = vperm.slane %v3625, %v1064
    %v3988 = vsel %vm1066, %v3987, %v3986
    %v3989 = vperm.slane %v3626, %v1068
    %v3990 = vsel %vm1070, %v3989, %v3988
    %v3991 = vperm.slane %v3627, %v2349
    %v3992 = vsel %vm2351, %v3991, %v3990
    %v3993 = vperm.slane %v3628, %v2353
    %v3994 = vsel %vm2355, %v3993, %v3992
    %v3995 = vperm.slane %v3629, %v2357
    %v3996 = vsel %vm2359, %v3995, %v3994
    %v3997 = vperm.slane %v3630, %v2361
    %v3998 = vsel %vm2363, %v3997, %v3996
    %v3999 = vsel %vm247, %v3788, %v3773
    %v4000 = vsel %vm240, %v3803, %v3999
    %v4001 = vsel %vm249, %v3818, %v4000
    %v4002 = vsel %vm1180, %v3833, %v4001
    %v4003 = vsel %vm1182, %v3848, %v4002
    %v4004 = vsel %vm1184, %v3863, %v4003
    %v4005 = vsel %vm1186, %v3878, %v4004
    %v4006 = vsel %vm247, %v3908, %v3893
    %v4007 = vsel %vm240, %v3923, %v4006
    %v4008 = vsel %vm249, %v3938, %v4007
    %v4009 = vsel %vm1180, %v3953, %v4008
    %v4010 = vsel %vm1182, %v3968, %v4009
    %v4011 = vsel %vm1184, %v3983, %v4010
    %v4012 = vsel %vm1186, %v3998, %v4011
    %v4015 = vadd.f32 %v2664, %v4005
    %v4016 = vadd.f32 %v2667, %v4012
    %vm4017 = vcmp.gt.f32.partialorder %v4015, 0.0
    %vm4018 = vcmp.gt.f32.partialorder %v4016, 0.0
    %v4019 = vmul.f32 %v4015, 1.442695
    %v4020 = vpow.pop %v4019
    %v4021 = vmul.f32 %v4016, 1.442695
    %v4022 = vpow.pop %v4021
    %v4023 = vsub.f32 %v4020, 1.0
    %v4024 = vsub.f32 %v4022, 1.0
    %v4025 = vsel %vm4017, %v4015, %v4023
    %v4026 = vsel %vm4018, %v4016, %v4024
    %v4027 = vsel %vm2639, %v4025, -inf
    %v4028 = vsel %vm2639, %v4026, -inf
    %v4029 = vmax.f32 %v4027, %v4028
    %v4030 = vrot.slane %v4029, 4
    %v4031 = vmax.f32 %v4029, %v4030
    %v4032 = vrot.slane %v4031, 2
    %v4033 = vmax.f32 %v4031, %v4032
    %v4034 = vrot.slane %v4033, 1
    %v4035 = vmax.f32 %v4033, %v4034
    %v4036 = vld [vmem:[#allocation7] sm:$0xff]
    %v4037 = vld [vmem:[#allocation7 + $0x8] sm:$0xff]
    %v4038 = vld [vmem:[#allocation7 + $0x10] sm:$0xff]
    %v4039 = vld [vmem:[#allocation7 + $0x18] sm:$0xff]
    %v4040 = vld [vmem:[#allocation7 + $0x20] sm:$0xff]
    %v4041 = vld [vmem:[#allocation7 + $0x28] sm:$0xff]
    %v4042 = vld [vmem:[#allocation7 + $0x30] sm:$0xff]
    %v4043 = vld [vmem:[#allocation7 + $0x38] sm:$0xff]
    %v4044 = vld [vmem:[%s15] sm:$0x1]
    %v4046 = vsel %vm2639, %v4035, 0
    %4048 = vmatpush.msra.mxu0 0.0
    %4049 = vmatpush.msra.mxu0 0.0
    %4050 = vmatpush.msra.mxu0 0.0
    %4051 = vmatpush.msra.mxu0 0.0
    %4052 = vmatpush.msra.mxu0 0.0
    %4053 = vmatpush.msra.mxu0 0.0
    %4054 = vmatpush.msra.mxu0 0.0
    %4055 = vmatpush.msra.mxu0 0.0
    %4056 = vmatpush.msra.mxu0 %v4043
    %4057 = vmatpush.msra.mxu0 %v4042
    %4058 = vmatpush.msra.mxu0 %v4041
    %4059 = vmatpush.msra.mxu0 %v4040
    %4060 = vmatpush.msra.mxu0 %v4039
    %4061 = vmatpush.msra.mxu0 %v4038
    %4062 = vmatpush.msra.mxu0 %v4037
    %4063 = vmatpush.msra.mxu0 %v4036
    %4064 = vmatmul.f32.gmra.mxu0 %v4046
    %v4065 = vpop.f32.mrf.mxu0
    %v4066 = vadd.f32 %v4044, %v4065
    %4067 = vdwg.mxu0
    %vm4068 = vcmp.gt.f32.partialorder %v4066, 0.0
    %v4069 = vmul.f32 %v4066, 1.442695
    %v4070 = vpow.pop %v4069
    %v4071 = vsub.f32 %v4070, 1.0
    %v4072 = vsel %vm4068, %v4066, %v4071
    %v4073 = vld [vmem:[%s16] sm:$0xff]
    %v4074 = vld [vmem:[%s16 + $0x8] sm:$0xff]
    %v4075 = vld [vmem:[%s16 + $0x10] sm:$0xff]
    %v4076 = vld [vmem:[%s16 + $0x18] sm:$0xff]
    %v4077 = vld [vmem:[%s16 + $0x20] sm:$0xff]
    %v4078 = vld [vmem:[%s16 + $0x28] sm:$0xff]
    %v4079 = vld [vmem:[%s16 + $0x30] sm:$0xff]
    %v4080 = vld [vmem:[%s16 + $0x38] sm:$0xff]
    %v4081 = vld [vmem:[%s17] sm:$0x1]
    %v4083 = vsel %vm2639, %v4072, 0
    %4085 = vmatpush.msra.mxu0 0.0
    %4086 = vmatpush.msra.mxu0 0.0
    %4087 = vmatpush.msra.mxu0 0.0
    %4088 = vmatpush.msra.mxu0 0.0
    %4089 = vmatpush.msra.mxu0 0.0
    %4090 = vmatpush.msra.mxu0 0.0
    %4091 = vmatpush.msra.mxu0 0.0
    %4092 = vmatpush.msra.mxu0 0.0
    %4093 = vmatpush.msra.mxu0 %v4080
    %4094 = vmatpush.msra.mxu0 %v4079
    %4095 = vmatpush.msra.mxu0 %v4078
    %4096 = vmatpush.msra.mxu0 %v4077
    %4097 = vmatpush.msra.mxu0 %v4076
    %4098 = vmatpush.msra.mxu0 %v4075
    %4099 = vmatpush.msra.mxu0 %v4074
    %4100 = vmatpush.msra.mxu0 %v4073
    %4101 = vmatmul.f32.gmra.mxu0 %v4083
    %v4102 = vpop.f32.mrf.mxu0
    %v4103 = vadd.f32 %v4081, %v4102
    %4104 = vdwg.mxu0
    %vm4105 = vcmp.gt.f32.partialorder %v4103, 0.0
    %v4106 = vmul.f32 %v4103, 1.442695
    %v4107 = vpow.pop %v4106
    %v4108 = vsub.f32 %v4107, 1.0
    %v4109 = vsel %vm4105, %v4103, %v4108
    %v4110 = vld [vmem:[%s18] sm:$0xff]
    %v4111 = vld [vmem:[%s18 + $0x8] sm:$0xff]
    %v4112 = vld [vmem:[%s18 + $0x10] sm:$0xff]
    %v4113 = vld [vmem:[%s18 + $0x18] sm:$0xff]
    %v4114 = vld [vmem:[%s19] sm:$0x1]
    %v4116 = vsel %vm1222, %v4109, 0
    %4118 = vmatpush.msra.mxu0 0.0
    %4119 = vmatpush.msra.mxu0 0.0
    %4120 = vmatpush.msra.mxu0 0.0
    %4121 = vmatpush.msra.mxu0 0.0
    %4122 = vmatpush.msra.mxu0 0.0
    %4123 = vmatpush.msra.mxu0 0.0
    %4124 = vmatpush.msra.mxu0 0.0
    %4125 = vmatpush.msra.mxu0 0.0
    %4126 = vmatpush.msra.mxu0 0.0
    %4127 = vmatpush.msra.mxu0 0.0
    %4128 = vmatpush.msra.mxu0 0.0
    %4129 = vmatpush.msra.mxu0 0.0
    %4130 = vmatpush.msra.mxu0 %v4113
    %4131 = vmatpush.msra.mxu0 %v4112
    %4132 = vmatpush.msra.mxu0 %v4111
    %4133 = vmatpush.msra.mxu0 %v4110
    %4134 = vmatmul.f32.gmra.mxu0 %v4116
    %v4135 = vpop.f32.mrf.mxu0
    %v4136 = vadd.f32 %v4114, %v4135
    %4137 = vdwg.mxu0
    %vm4138 = vcmask 16384
    %v4139 = vsel %vm4138, %v4136, -inf
    %4140 = vmax.xlane.f32.xlu0 %v4139
    %v4141 = vpop.xlane.xlu0 %4140
    %v4142 = vsub.f32 %v4136, %v4141
    %v4143 = vmul.f32 %v4142, 1.442695
    %v4144 = vpow.pop %v4143
    %v4145 = vsel %vm4138, %v4144, 0.0
    %4146 = vadd.xlane.f32.xlu0 %v4145
    %v4147 = vpop.xlane.xlu0 %4146
    %v4148 = vlog2.pop %v4147
    %v4149 = vmul.f32 %v4148, 0.6931472
    %v4150 = vsub.f32 %v4142, %v4149
    %4151 = vst.msk [vmem:[#allocation8] sm:$0x1] %vm4138, %v4150
    // Predicated region
    $region94: #{tpu_custom_call.1} parent=1 // pred_check
      _
    $region95: #{tpu_custom_call.1} parent=1 // pred_check_branch
      %4153 = sbr.rel (0) target = $region97
    $region96: #{tpu_custom_call.1} parent=1 // pred_region
      %4155 = vsyncadd [#allocation4], 0
      %s4157 = sshll.u32 [#allocation8], 4
      %s4158 = int_to_ptr.vmem [resolvable:$true] %s4157
      %s4159 = sshll.u32 %s20, 4
      %s4160 = int_to_ptr.hbm [resolvable:$true] %s4159
      %4162 = dma.vmem_to_hbm [thread:$0]  %s4158, 16, %s4160, [#allocation4]
    $region97: #{tpu_custom_call.1} parent=1 // pred_fallthru
      _
    // Predicated region
    $region98: #{tpu_custom_call.1} parent=1 // pred_check
      _
    $region99: #{tpu_custom_call.1} parent=1 // pred_check_branch
      %4164 = sbr.rel (0) target = $region101
    $region100: #{tpu_custom_call.1} parent=1 // pred_region
      %4166 = dma.done [#allocation4], 16
    $region101: #{tpu_custom_call.1} parent=1 // pred_fallthru
      _
    %4167 = vsyncpa [#allocation3], 1
    %4168 = vsyncpa [#allocation6], 1
    %4169 = vsyncpa [#allocation4], 1

</llo_original>
